<compile_context>
chip_gen: v7x
topology: tpu7x:2x2x1
jax: 0.10.0
libtpu: 0.0.40
codegen_flags: <defaults>
</compile_context>

<pallas_src>
import functools

import jax
import jax.numpy as jnp
from jax.experimental import pallas as pl
from jax.experimental.pallas import tpu as pltpu


# ----------------------------------------------------------------------------
# helpers
# ----------------------------------------------------------------------------
def _round_up(n, m):
    return -(-n // m) * m


def _largest_divisor_leq(n, cap):
    cap = max(1, min(n, cap))
    for c in range(cap, 0, -1):
        if n % c == 0:
            return c
    return 1


def _pick_t_chunk(S, B, in_dim, H, *, vmem_budget=12 * 1024 * 1024,
                  max_unroll=64):
    """Largest divisor of S whose chunk fits a conservative VMEM budget.

    Per chunk-row bytes: x blocks (bf16, double-buffered, up to 2 streams,
    each read for both directions) + two (rows, 8H) f32 projection scratches
    + the two bf16 h_seq output blocks.
    """
    G = 8 * H
    per_row = B * (4 * in_dim * 2 * 2      # x blocks: 2 streams x fwd/bwd, bf16, dbuf
                   + 2 * G * 4             # xp scratch, f32, single-buffered
                   + 2 * H * 2 * 2)        # h_seq fwd/bwd out blocks, bf16, dbuf
    cap = max(1, min(max_unroll, vmem_budget // max(per_row, 1)))
    # TODO(synk): handle a ragged last chunk with pl.when-guarded steps so a
    # prime S does not degrade t_chunk to 1.
    return _largest_divisor_leq(S, cap)


def _pick_crf_row_chunk(N, T3p, H, *, vmem_budget=12 * 1024 * 1024):
    """Largest multiple-of-8 divisor of N whose output tile fits the budget."""
    per_row = T3p * 4 * 2 + 2 * H * 2 * 2   # f32 out (dbuf) + two bf16 feat blocks (dbuf)
    cap = max(8, vmem_budget // max(per_row, 1))
    best = 8
    for c in range(8, min(N, cap) + 1, 8):
        if N % c == 0:
            best = c
    return best if N % best == 0 else N


# ----------------------------------------------------------------------------
# Pallas kernel: one bidirectional LSTM layer, both directions fused.
#   grid = (time_chunk,)  ["arbitrary": sequential recurrence]
#   Per grid step:
#     - hoisted per-direction input projections (bf16 MXU, f32 accumulate)
#       emitted in the padded gate-major 8H layout (+ bias),
#     - unrolled loop over t_chunk steps: ONE (B,2H)x(2H,8H) f32 dot against
#       the block-diagonal fused W_hh + full-width sigmoid/tanh + state math.
#   h/c persist across chunks in VMEM scratch; final (h, c) written only on
#   the last chunk.  The backward direction is realised purely through
#   reversed BlockSpec index_maps + reversed in-chunk row order (no flips).
# ----------------------------------------------------------------------------
def _bilstm_layer_kernel(*refs, t_chunk, batch, hidden, num_streams):
    H = hidden
    B = batch
    HH = 2 * H           # fused state width (fwd | bwd)
    G = 8 * H            # fused gate width: 4 gates x 2 directions x H

    nx = 2 * num_streams
    x_refs = refs[:nx]
    wih_ref, whh_ref, b_ref = refs[nx:nx + 3]
    (h_seq_f_ref, h_seq_b_ref, h_fin_ref, c_fin_ref,
     xp_f_sc, xp_b_sc, h_sc, c_sc) = refs[nx + 3:]

    tc = pl.program_id(0)
    nc = pl.num_programs(0)

    @pl.when(tc == 0)
    def _():
        h_sc[...] = jnp.zeros_like(h_sc)
        c_sc[...] = jnp.zeros_like(c_sc)

    # Hoisted per-chunk input projections.  Each direction's projection lives
    # in the padded gate-major 8H layout (zeros on the other direction's
    # lanes), so the recurrent loop needs no lane shuffles at all.
    acc_f = jnp.dot(x_refs[0][...], wih_ref[0],
                    preferred_element_type=jnp.float32)
    acc_b = jnp.dot(x_refs[1][...], wih_ref[1],
                    preferred_element_type=jnp.float32)
    for s in range(1, num_streams):
        acc_f = acc_f + jnp.dot(x_refs[2 * s][...], wih_ref[2 * s],
                                preferred_element_type=jnp.float32)
        acc_b = acc_b + jnp.dot(x_refs[2 * s + 1][...], wih_ref[2 * s + 1],
                                preferred_element_type=jnp.float32)
    xp_f_sc[...] = acc_f + b_ref[0:1, :]
    xp_b_sc[...] = acc_b + b_ref[1:2, :]

    # TODO(synk): stage whh in the MXU across the unrolled loop with
    # pltpu.matmul_push_rhs / matmul_acc_lhs once that path is validated.
    whh = whh_ref[...]          # (2H, 8H) f32, block-diagonal per direction

    def step(lt, carry):
        h2, c2 = carry                     # (B, 2H) f32 each
        row_f = lt                         # fwd walks local rows 0..T-1
        row_b = t_chunk - 1 - lt           # bwd walks local rows T-1..0
        off_f = pl.multiple_of(row_f * B, B)
        off_b = pl.multiple_of(row_b * B, B)
        # Both direction chains in one dot (block-diagonal fused W_hh).
        gates = (xp_f_sc[pl.ds(off_f, B), :]
                 + xp_b_sc[pl.ds(off_b, B), :]
                 + jnp.dot(h2, whh, preferred_element_type=jnp.float32))
        sg = jax.nn.sigmoid(gates)         # one full-width EUP pass
        tg = jnp.tanh(gates)               # one full-width EUP pass
        i_g = sg[:, 0 * HH:1 * HH]
        f_g = sg[:, 1 * HH:2 * HH]
        g_g = tg[:, 2 * HH:3 * HH]
        o_g = sg[:, 3 * HH:4 * HH]
        c_new = f_g * c2 + i_g * g_g       # full-width (B, 2H) VPU math
        h_new = o_g * jnp.tanh(c_new)
        h_seq_f_ref[pl.ds(off_f, B), :] = h_new[:, :H].astype(h_seq_f_ref.dtype)
        h_seq_b_ref[pl.ds(off_b, B), :] = h_new[:, H:].astype(h_seq_b_ref.dtype)
        return h_new, c_new

    h_last, c_last = jax.lax.fori_loop(
        0, t_chunk, step, (h_sc[...], c_sc[...]), unroll=True)

    # Carry across chunks.
    h_sc[...] = h_last
    c_sc[...] = c_last

    # Both directions finish on the last grid step (fwd at row S-1, bwd at
    # row 0); emit the final states only once.
    @pl.when(tc == nc - 1)
    def _():
        h_fin_ref[0] = h_last[:, :H]
        h_fin_ref[1] = h_last[:, H:]
        c_fin_ref[0] = c_last[:, :H]
        c_fin_ref[1] = c_last[:, H:]


def bilstm_layer(x_streams, wih_pad, whh_fused, b_pad, *, seq_len, batch,
                 t_chunk, vmem_limit=32 * 1024 * 1024):
    """One fused bidirectional LSTM layer.

    x_streams: list of (S*B, in_dim) bf16 arrays (1 stream for layer 0, the
      [fwd, bwd] h slabs of the previous layer afterwards).
    wih_pad:  (2*num_streams, in_dim, 8H) bf16, padded gate-major layout,
              index 2*s + d for stream s / direction d.
    whh_fused:(2H, 8H) f32 block-diagonal fused recurrent weight.
    b_pad:    (2, 8H) f32 padded biases (b_ih + b_hh) per direction.

    Returns (h_seq_fwd, h_seq_bwd, h_fin, c_fin):
      h_seq_*: (S*B, H) bf16 in natural row order; h_fin/c_fin: (2, B, H) f32.
    """
    ns = len(x_streams)
    SB, in_dim = x_streams[0].shape
    HH, G = whh_fused.shape
    H = HH // 2
    assert SB == seq_len * batch and seq_len % t_chunk == 0
    nc = seq_len // t_chunk
    rows = t_chunk * batch

    x_args, x_specs = [], []
    for s in range(ns):
        x_args += [x_streams[s], x_streams[s]]
        x_specs.append(pl.BlockSpec((rows, in_dim), lambda tc: (tc, 0)))
        x_specs.append(pl.BlockSpec((rows, in_dim),
                                    lambda tc, _nc=nc: (_nc - 1 - tc, 0)))

    kernel = functools.partial(_bilstm_layer_kernel, t_chunk=t_chunk,
                               batch=batch, hidden=H, num_streams=ns)

    macs = ns * 2 * SB * in_dim * G + SB * HH * G
    cost = pl.CostEstimate(
        flops=2 * macs,
        transcendentals=SB * (2 * G + HH),
        bytes_accessed=(2 * ns * SB * in_dim * 2 + 2 * SB * H * 2
                        + wih_pad.size * 2 + whh_fused.size * 4
                        + b_pad.size * 4 + 4 * batch * H * 4))

    return pl.pallas_call(
        kernel,
        out_shape=(
            jax.ShapeDtypeStruct((SB, H), jnp.bfloat16),     # fwd h sequence
            jax.ShapeDtypeStruct((SB, H), jnp.bfloat16),     # bwd h sequence
            jax.ShapeDtypeStruct((2, batch, H), jnp.float32),  # h_n [fwd,bwd]
            jax.ShapeDtypeStruct((2, batch, H), jnp.float32),  # c_n [fwd,bwd]
        ),
        grid_spec=pltpu.PrefetchScalarGridSpec(
            num_scalar_prefetch=0,
            grid=(nc,),
            in_specs=x_specs + [
                pl.BlockSpec((2 * ns, in_dim, G), lambda tc: (0, 0, 0)),
                pl.BlockSpec((HH, G), lambda tc: (0, 0)),
                pl.BlockSpec((2, G), lambda tc: (0, 0)),
            ],
            out_specs=[
                pl.BlockSpec((rows, H), lambda tc: (tc, 0)),
                pl.BlockSpec((rows, H), lambda tc, _nc=nc: (_nc - 1 - tc, 0)),
                pl.BlockSpec((2, batch, H), lambda tc: (0, 0, 0)),
                pl.BlockSpec((2, batch, H), lambda tc: (0, 0, 0)),
            ],
            scratch_shapes=[
                pltpu.VMEM((rows, G), jnp.float32),   # fwd chunk projection
                pltpu.VMEM((rows, G), jnp.float32),   # bwd chunk projection
                pltpu.VMEM((batch, HH), jnp.float32),  # h carry
                pltpu.VMEM((batch, HH), jnp.float32),  # c carry
            ],
        ),
        compiler_params=pltpu.CompilerParams(
            dimension_semantics=("arbitrary",),
            vmem_limit_bytes=vmem_limit),
        cost_estimate=cost,
    )(*x_args, wih_pad, whh_fused, b_pad)


# ----------------------------------------------------------------------------
# Pallas kernel: CRF_S_SEC scoring (row-tiled, parallel).
#   em    = feats_fwd @ W_fwd + feats_bwd @ W_bwd            (rows, Tp)
#   out   = em @ R + (bias_tiled + trans)                    (rows, T3_pad)
# R is a tiny 0/1 selection matrix replicating the T emission columns with
# period T across the (lane-dense, padded) T^3 output — no (hidden, T^3)
# tiled weight, no T^2x redundant emission matmul.
# ----------------------------------------------------------------------------
def _crf_kernel(ff_ref, fb_ref, w_ref, rep_ref, bt_ref, out_ref):
    em = (jnp.dot(ff_ref[...], w_ref[0], preferred_element_type=jnp.float32)
          + jnp.dot(fb_ref[...], w_ref[1], preferred_element_type=jnp.float32))
    tiled = jnp.dot(em, rep_ref[...], preferred_element_type=jnp.float32)
    out_ref[...] = tiled + bt_ref[...]


def crf_scores(feats_f, feats_b, w_pad, rep, bias_trans, *, row_chunk,
               vmem_limit=32 * 1024 * 1024):
    """feats_*: (N, H) bf16; w_pad: (2, H, Tp) bf16; rep: (Tp, T3p) f32;
    bias_trans: (1, T3p) f32.  Returns (N, T3p) f32."""
    N, H = feats_f.shape
    Tp, T3p = rep.shape
    assert N % row_chunk == 0
    return pl.pallas_call(
        _crf_kernel,
        out_shape=jax.ShapeDtypeStruct((N, T3p), jnp.float32),
        grid_spec=pltpu.PrefetchScalarGridSpec(
            num_scalar_prefetch=0,
            grid=(N // row_chunk,),
            in_specs=[
                pl.BlockSpec((row_chunk, H), lambda i: (i, 0)),
                pl.BlockSpec((row_chunk, H), lambda i: (i, 0)),
                pl.BlockSpec((2, H, Tp), lambda i: (0, 0, 0)),
                pl.BlockSpec((Tp, T3p), lambda i: (0, 0)),
                pl.BlockSpec((1, T3p), lambda i: (0, 0)),
            ],
            out_specs=pl.BlockSpec((row_chunk, T3p), lambda i: (i, 0)),
        ),
        compiler_params=pltpu.CompilerParams(
            dimension_semantics=("parallel",),
            vmem_limit_bytes=vmem_limit),
    )(feats_f, feats_b, w_pad, rep, bias_trans)


# ----------------------------------------------------------------------------
# Canonical parameters (PyTorch-style, f32) + one-time host-side preparation
# of the fused / padded kernel layouts (kept OUTSIDE the jitted forward).
# Gate order within each direction is i, f, g, o (nn.LSTM convention); fused
# gate layout is gate-major, direction-minor: [i|i'|f|f'|g|g'|o|o'], H each.
# ----------------------------------------------------------------------------
def init_params(key, vocab_size, tagset_size, embedding_dim, hidden_dim,
                rnn_layers):
    H = hidden_dim // 2
    T = tagset_size
    keys = iter(jax.random.split(key, 4 + 6 * rnn_layers))

    def uni(k, shape, scale):
        return jax.random.uniform(k, shape, jnp.float32, -scale, scale)

    params = {"embedding": jax.random.normal(
        next(keys), (vocab_size, embedding_dim), jnp.float32)}

    scale = 1.0 / (H ** 0.5)
    lstm = []
    for layer in range(rnn_layers):
        in_dim = embedding_dim if layer == 0 else hidden_dim
        wih = jnp.stack([uni(next(keys), (in_dim, 4 * H), scale)
                         for _ in range(2)])                  # (2, IN, 4H)
        whh = jnp.stack([uni(next(keys), (H, 4 * H), scale)
                         for _ in range(2)])                  # (2, H, 4H)
        b = jnp.stack([uni(next(keys), (4 * H,), scale)
                       for _ in range(2)])                    # (2, 4H) = b_ih+b_hh
        lstm.append({"wih": wih, "whh": whh, "b": b})
    params["lstm"] = lstm

    lin_scale = 1.0 / (hidden_dim ** 0.5)
    params["crf_w"] = uni(next(keys), (hidden_dim, T), lin_scale)
    params["crf_b"] = uni(next(keys), (T,), lin_scale)
    params["trans_flat"] = 0.1 * jax.random.normal(
        next(keys), (T ** 3,), jnp.float32)
    return params


def _pad_wih_direction(w_slice, d, H):
    """(in_s, 4H) canonical [i|f|g|o] -> (in_s, 8H) gate-major padded layout."""
    out = jnp.zeros((w_slice.shape[0], 8 * H), jnp.float32)
    for g in range(4):
        out = out.at[:, g * 2 * H + d * H: g * 2 * H + (d + 1) * H].set(
            w_slice[:, g * H:(g + 1) * H])
    return out


def _fuse_whh(whh, H):
    """whh (2, H, 4H) -> block-diagonal (2H, 8H), gate-major columns."""
    out = jnp.zeros((2 * H, 8 * H), jnp.float32)
    for g in range(4):
        out = out.at[:H, g * 2 * H: g * 2 * H + H].set(
            whh[0, :, g * H:(g + 1) * H])
        out = out.at[H:, g * 2 * H + H: (g + 1) * 2 * H].set(
            whh[1, :, g * H:(g + 1) * H])
    return out


def _pad_bias(b, H):
    """b (2, 4H) -> (2, 8H) gate-major padded layout."""
    out = jnp.zeros((2, 8 * H), jnp.float32)
    for d in range(2):
        for g in range(4):
            out = out.at[d, g * 2 * H + d * H: g * 2 * H + (d + 1) * H].set(
                b[d, g * H:(g + 1) * H])
    return out


def prepare_params(params, *, hidden_dim, tagset_size):
    H = hidden_dim // 2
    T = tagset_size
    T3 = T ** 3
    T3p = _round_up(T3, 128)       # lane-dense CRF output stores
    Tp = _round_up(T, 8)

    prep = {"embedding": params["embedding"].astype(jnp.bfloat16), "lstm": []}
    for layer, lp in enumerate(params["lstm"]):
        wih, whh, b = lp["wih"], lp["whh"], lp["b"]
        in_dim = wih.shape[1]
        ns = 1 if layer == 0 else 2
        in_s = in_dim // ns
        mats = []
        for s in range(ns):
            for d in range(2):
                mats.append(_pad_wih_direction(
                    wih[d, s * in_s:(s + 1) * in_s, :], d, H))
        prep["lstm"].append({
            "wih_pad": jnp.stack(mats).astype(jnp.bfloat16),  # (2*ns, in_s, 8H)
            "whh_fused": _fuse_whh(whh, H),                    # f32 for parity
            "b_pad": _pad_bias(b, H),
        })

    w = params["crf_w"]                                        # (2H, T)
    w_pad = jnp.zeros((2, H, Tp), jnp.float32)
    w_pad = w_pad.at[0, :, :T].set(w[:H])
    w_pad = w_pad.at[1, :, :T].set(w[H:])
    prep["crf_w_pad"] = w_pad.astype(jnp.bfloat16)

    # Selection matrix replicating the T emission columns with period T over
    # the padded T^3 lane dimension: rep[k, c] = 1 iff c % T == k.
    col = jnp.arange(T3p)
    prep["crf_rep"] = (col[None, :] % T ==
                       jnp.arange(Tp)[:, None]).astype(jnp.float32)

    bt = jnp.zeros((1, T3p), jnp.float32)
    bt = bt.at[0, :T3].set(jnp.tile(params["crf_b"], T * T)
                           + params["trans_flat"])
    prep["crf_bt"] = bt
    return prep


# ----------------------------------------------------------------------------
# Forward pass (Pallas for the LSTM recurrence + CRF scoring; gather / pad
# glue in plain XLA).  dropout1 / dropout2 = eval-mode identity.
# ----------------------------------------------------------------------------
def lstm_sec_crf_forward(prep, sentence, *, hidden_dim, tagset_size,
                         rnn_layers):
    S, B = sentence.shape
    H = hidden_dim // 2
    T = tagset_size
    T3 = T ** 3
    B_pad = _round_up(B, 8)          # fill the 8 sublanes of every vreg

    emb = jnp.take(prep["embedding"], sentence, axis=0)        # (S, B, E) bf16
    if B_pad != B:
        emb = jnp.pad(emb, ((0, 0), (0, B_pad - B), (0, 0)))
    x_streams = [emb.reshape(S * B_pad, emb.shape[-1])]

    t_chunk = _pick_t_chunk(S, B_pad, max(emb.shape[-1], 2 * H), H)

    h_fins, c_fins = [], []
    for layer in range(rnn_layers):
        lp = prep["lstm"][layer]
        h_f, h_b, h_fin, c_fin = bilstm_layer(
            x_streams, lp["wih_pad"], lp["whh_fused"], lp["b_pad"],
            seq_len=S, batch=B_pad, t_chunk=t_chunk)
        x_streams = [h_f, h_b]       # consumed directly by next layer / CRF,
        h_fins.append(h_fin)         # no XLA concat between layers
        c_fins.append(c_fin)

    # PyTorch h_n/c_n ordering: layer0_fwd, layer0_bwd, layer1_fwd, ...
    h_n = jnp.concatenate(h_fins, axis=0)[:, :B]               # (2L, B, H)
    c_n = jnp.concatenate(c_fins, axis=0)[:, :B]

    T3p = prep["crf_bt"].shape[-1]
    N = S * B_pad
    row_chunk = _pick_crf_row_chunk(N, T3p, H)
    crf_flat = crf_scores(x_streams[0], x_streams[1], prep["crf_w_pad"],
                          prep["crf_rep"], prep["crf_bt"],
                          row_chunk=row_chunk)                  # (N, T3p)
    crf_out = crf_flat[:, :T3].reshape(S, B_pad, T, T, T)[:, :B]
    return crf_out, (h_n, c_n)


# ----------------------------------------------------------------------------
# Pure-JAX reference (f32, canonical weights) for a correctness check.
# ----------------------------------------------------------------------------
def _forward_reference(params, sentence, *, hidden_dim, tagset_size,
                       rnn_layers):
    S, B = sentence.shape
    H = hidden_dim // 2
    T = tagset_size
    x = jnp.take(params["embedding"], sentence, axis=0)
    h_fins, c_fins = [], []
    for layer in range(rnn_layers):
        lp = params["lstm"][layer]
        wih, whh, b = lp["wih"], lp["whh"], lp["b"]
        outs = []
        for d in range(2):
            seq = x if d == 0 else x[::-1]

            def step(carry, xt, d=d):
                h, c = carry
                gates = xt @ wih[d] + h @ whh[d] + b[d]
                i = jax.nn.sigmoid(gates[:, :H])
                f = jax.nn.sigmoid(gates[:, H:2 * H])
                g = jnp.tanh(gates[:, 2 * H:3 * H])
                o = jax.nn.sigmoid(gates[:, 3 * H:])
                c = f * c + i * g
                h = o * jnp.tanh(c)
                return (h, c), h

            init = (jnp.zeros((B, H), jnp.float32),
                    jnp.zeros((B, H), jnp.float32))
            (h_l, c_l), hs = jax.lax.scan(step, init, seq)
            outs.append(hs if d == 0 else hs[::-1])
            h_fins.append(h_l)
            c_fins.append(c_l)
        x = jnp.concatenate(outs, axis=-1)
    feats = x.reshape(S * B, hidden_dim)
    em = feats @ params["crf_w"] + params["crf_b"][None, :]
    crf = jnp.tile(em, (1, T * T)) + params["trans_flat"][None, :]
    return (crf.reshape(S, B, T, T, T),
            (jnp.stack(h_fins), jnp.stack(c_fins)))


if __name__ == "__main__":
    vocab_size = 50
    tagset_size = 4
    embedding_dim = 32
    hidden_dim = 64          # -> 32 per direction
    rnn_layers = 2
    dropout_ratio = 0.5      # inactive in eval mode
    seq_len, batch = 8, 2

    key = jax.random.PRNGKey(0)
    k_param, k_sent = jax.random.split(key)
    params = init_params(k_param, vocab_size, tagset_size, embedding_dim,
                         hidden_dim, rnn_layers)
    prep = prepare_params(params, hidden_dim=hidden_dim,
                          tagset_size=tagset_size)
    sentence = jax.random.randint(k_sent, (seq_len, batch), 0, vocab_size,
                                  dtype=jnp.int32)

    fwd = jax.jit(functools.partial(lstm_sec_crf_forward,
                                    hidden_dim=hidden_dim,
                                    tagset_size=tagset_size,
                                    rnn_layers=rnn_layers))
    crf_out, (h_n, c_n) = fwd(prep, sentence)
    jax.block_until_ready(crf_out)

    assert crf_out.shape == (seq_len, batch, tagset_size, tagset_size,
                             tagset_size)
    assert h_n.shape == (2 * rnn_layers, batch, hidden_dim // 2)
    assert c_n.shape == (2 * rnn_layers, batch, hidden_dim // 2)
    assert bool(jnp.all(jnp.isfinite(crf_out)))

    # Check vs. pure-JAX f32 reference (kernel uses bf16 input projections /
    # activations with f32 accumulation and an f32 recurrence).
    crf_ref, (h_ref, c_ref) = jax.jit(functools.partial(
        _forward_reference, hidden_dim=hidden_dim, tagset_size=tagset_size,
        rnn_layers=rnn_layers))(params, sentence)
    assert bool(jnp.allclose(crf_out, crf_ref, rtol=1e-1, atol=1e-1))
    assert bool(jnp.allclose(h_n, h_ref, rtol=1e-1, atol=1e-1))
    assert bool(jnp.allclose(c_n, c_ref, rtol=1e-1, atol=1e-1))

    print("KERNEL_OK")
</pallas_src>

<mosaic_0001>
module attributes {stable_mosaic.version = 11 : i64} {
  func.func @_bilstm_layer_kernel(%arg0: i32, %arg1: memref<64x32xbf16, #tpu.memory_space<vmem>>, %arg2: memref<64x32xbf16, #tpu.memory_space<vmem>>, %arg3: memref<2x32x256xbf16, #tpu.memory_space<vmem>>, %arg4: memref<64x256xf32, #tpu.memory_space<vmem>>, %arg5: memref<2x256xf32, #tpu.memory_space<vmem>>, %arg6: memref<64x32xbf16, #tpu.memory_space<vmem>>, %arg7: memref<64x32xbf16, #tpu.memory_space<vmem>>, %arg8: memref<2x8x32xf32, #tpu.memory_space<vmem>>, %arg9: memref<2x8x32xf32, #tpu.memory_space<vmem>>, %arg10: memref<64x256xf32, #tpu.memory_space<vmem>>, %arg11: memref<64x256xf32, #tpu.memory_space<vmem>>, %arg12: memref<8x64xf32, #tpu.memory_space<vmem>>, %arg13: memref<8x64xf32, #tpu.memory_space<vmem>>) attributes {dimension_semantics = [#tpu.dimension_semantics<arbitrary>], iteration_bounds = array<i64: 1>, scalar_prefetch = 0 : i64, scratch_operands = 4 : i64, tpu.core_type = #tpu.core_type<tc>, window_params = [{transform_indices = @transform_0, window_bounds = array<i64: 64, 32>}, {transform_indices = @transform_1, window_bounds = array<i64: 64, 32>}, {pipeline_mode = #tpu.pipeline_mode<synchronous>, transform_indices = @transform_2, window_bounds = array<i64: 2, 32, 256>}, {pipeline_mode = #tpu.pipeline_mode<synchronous>, transform_indices = @transform_3, window_bounds = array<i64: 64, 256>}, {pipeline_mode = #tpu.pipeline_mode<synchronous>, transform_indices = @transform_4, window_bounds = array<i64: 2, 256>}, {transform_indices = @transform_5, window_bounds = array<i64: 64, 32>}, {transform_indices = @transform_6, window_bounds = array<i64: 64, 32>}, {pipeline_mode = #tpu.pipeline_mode<synchronous>, transform_indices = @transform_7, window_bounds = array<i64: 2, 8, 32>}, {pipeline_mode = #tpu.pipeline_mode<synchronous>, transform_indices = @transform_8, window_bounds = array<i64: 2, 8, 32>}]} {
    %c0_i32 = arith.constant 0 : i32
    %0 = arith.cmpi eq, %arg0, %c0_i32 : i32
    %1 = arith.extui %0 : i1 to i32
    %c0_i32_0 = arith.constant 0 : i32
    %2 = arith.cmpi ne, %1, %c0_i32_0 : i32
    scf.if %2 {
      %cst_103 = arith.constant 0.000000e+00 : f32
      %307 = vector.broadcast %cst_103 : f32 to vector<8x64xf32>
      %c0_104 = arith.constant 0 : index
      %c0_105 = arith.constant 0 : index
      %308 = vector.load %arg12[%c0_104, %c0_105] : memref<8x64xf32, #tpu.memory_space<vmem>>, vector<8x64xf32>
      tpu.vector_store %arg12[%c0_104, %c0_105], %307 {strides = array<i32>} : memref<8x64xf32, #tpu.memory_space<vmem>>, vector<8x64xf32>,
      %cst_106 = arith.constant 0.000000e+00 : f32
      %309 = vector.broadcast %cst_106 : f32 to vector<8x64xf32>
      %c0_107 = arith.constant 0 : index
      %c0_108 = arith.constant 0 : index
      %310 = vector.load %arg13[%c0_107, %c0_108] : memref<8x64xf32, #tpu.memory_space<vmem>>, vector<8x64xf32>
      tpu.vector_store %arg13[%c0_107, %c0_108], %309 {strides = array<i32>} : memref<8x64xf32, #tpu.memory_space<vmem>>, vector<8x64xf32>,
    } else {
    }
    %c0 = arith.constant 0 : index
    %c0_1 = arith.constant 0 : index
    %3 = vector.load %arg1[%c0, %c0_1] : memref<64x32xbf16, #tpu.memory_space<vmem>>, vector<64x32xbf16>
    %c0_2 = arith.constant 0 : index
    %c0_3 = arith.constant 0 : index
    %c0_4 = arith.constant 0 : index
    %4 = vector.load %arg3[%c0_2, %c0_3, %c0_4] : memref<2x32x256xbf16, #tpu.memory_space<vmem>>, vector<1x32x256xbf16>
    %5 = vector.shape_cast %4 : vector<1x32x256xbf16> to vector<32x256xbf16>
    %cst = arith.constant dense<0.000000e+00> : vector<64x256xf32>
    %6 = tpu.matmul %3, %5, %cst {dimension_numbers = #tpu.dot_dimension_numbers<[1], [0], [0], [1], [0, 0, 1, 1], [], []>} : vector<64x32xbf16>, vector<32x256xbf16>, vector<64x256xf32> -> vector<64x256xf32>
    %c0_5 = arith.constant 0 : index
    %c0_6 = arith.constant 0 : index
    %7 = vector.load %arg2[%c0_5, %c0_6] : memref<64x32xbf16, #tpu.memory_space<vmem>>, vector<64x32xbf16>
    %c1 = arith.constant 1 : index
    %c0_7 = arith.constant 0 : index
    %c0_8 = arith.constant 0 : index
    %8 = vector.load %arg3[%c1, %c0_7, %c0_8] : memref<2x32x256xbf16, #tpu.memory_space<vmem>>, vector<1x32x256xbf16>
    %9 = vector.shape_cast %8 : vector<1x32x256xbf16> to vector<32x256xbf16>
    %cst_9 = arith.constant dense<0.000000e+00> : vector<64x256xf32>
    %10 = tpu.matmul %7, %9, %cst_9 {dimension_numbers = #tpu.dot_dimension_numbers<[1], [0], [0], [1], [0, 0, 1, 1], [], []>} : vector<64x32xbf16>, vector<32x256xbf16>, vector<64x256xf32> -> vector<64x256xf32>
    %c0_10 = arith.constant 0 : index
    %c0_11 = arith.constant 0 : index
    %11 = vector.load %arg5[%c0_10, %c0_11] : memref<2x256xf32, #tpu.memory_space<vmem>>, vector<1x256xf32>
    %12 = vector.broadcast %11 : vector<1x256xf32> to vector<64x256xf32>
    %13 = arith.addf %6, %12 : vector<64x256xf32>
    %c0_12 = arith.constant 0 : index
    %c0_13 = arith.constant 0 : index
    %14 = vector.load %arg10[%c0_12, %c0_13] : memref<64x256xf32, #tpu.memory_space<vmem>>, vector<64x256xf32>
    tpu.vector_store %arg10[%c0_12, %c0_13], %13 {strides = array<i32>} : memref<64x256xf32, #tpu.memory_space<vmem>>, vector<64x256xf32>,
    %c1_14 = arith.constant 1 : index
    %c0_15 = arith.constant 0 : index
    %15 = vector.load %arg5[%c1_14, %c0_15] : memref<2x256xf32, #tpu.memory_space<vmem>>, vector<1x256xf32>
    %16 = vector.broadcast %15 : vector<1x256xf32> to vector<64x256xf32>
    %17 = arith.addf %10, %16 : vector<64x256xf32>
    %c0_16 = arith.constant 0 : index
    %c0_17 = arith.constant 0 : index
    %18 = vector.load %arg11[%c0_16, %c0_17] : memref<64x256xf32, #tpu.memory_space<vmem>>, vector<64x256xf32>
    tpu.vector_store %arg11[%c0_16, %c0_17], %17 {strides = array<i32>} : memref<64x256xf32, #tpu.memory_space<vmem>>, vector<64x256xf32>,
    %c0_18 = arith.constant 0 : index
    %c0_19 = arith.constant 0 : index
    %19 = vector.load %arg4[%c0_18, %c0_19] : memref<64x256xf32, #tpu.memory_space<vmem>>, vector<64x256xf32>
    %c0_20 = arith.constant 0 : index
    %c0_21 = arith.constant 0 : index
    %20 = vector.load %arg12[%c0_20, %c0_21] : memref<8x64xf32, #tpu.memory_space<vmem>>, vector<8x64xf32>
    %c0_22 = arith.constant 0 : index
    %c0_23 = arith.constant 0 : index
    %21 = vector.load %arg13[%c0_22, %c0_23] : memref<8x64xf32, #tpu.memory_space<vmem>>, vector<8x64xf32>
    %c0_i32_24 = arith.constant 0 : i32
    %c7_i32 = arith.constant 7 : i32
    %22 = arith.subi %c7_i32, %c0_i32_24 : i32
    %c8_i32 = arith.constant 8 : i32
    %23 = arith.muli %c0_i32_24, %c8_i32 : i32
    %24 = tpu.assume_multiple %23, 8 : i32
    %c8_i32_25 = arith.constant 8 : i32
    %25 = arith.muli %22, %c8_i32_25 : i32
    %26 = tpu.assume_multiple %25, 8 : i32
    %27 = arith.index_cast %24 : i32 to index
    %c0_26 = arith.constant 0 : index
    %28 = vector.load %arg10[%27, %c0_26] : memref<64x256xf32, #tpu.memory_space<vmem>>, vector<8x256xf32>
    %29 = arith.index_cast %26 : i32 to index
    %c0_27 = arith.constant 0 : index
    %30 = vector.load %arg11[%29, %c0_27] : memref<64x256xf32, #tpu.memory_space<vmem>>, vector<8x256xf32>
    %31 = arith.addf %28, %30 : vector<8x256xf32>
    %cst_28 = arith.constant dense<0.000000e+00> : vector<8x256xf32>
    %32 = tpu.matmul %20, %19, %cst_28 {dimension_numbers = #tpu.dot_dimension_numbers<[1], [0], [0], [1], [0, 0, 1, 1], [], []>} : vector<8x64xf32>, vector<64x256xf32>, vector<8x256xf32> -> vector<8x256xf32>
    %33 = arith.addf %31, %32 : vector<8x256xf32>
    %34 = arith.negf %33 : vector<8x256xf32>
    %35 = math.exp %34 : vector<8x256xf32>
    %cst_29 = arith.constant 1.000000e+00 : f32
    %36 = vector.broadcast %cst_29 : f32 to vector<8x256xf32>
    %37 = arith.addf %36, %35 : vector<8x256xf32>
    %38 = arith.divf %36, %37 : vector<8x256xf32>
    %39 = math.tanh %33 : vector<8x256xf32>
    %40 = vector.extract_strided_slice %38 {offsets = [0, 0], sizes = [8, 64], strides = [1, 1]} : vector<8x256xf32> to vector<8x64xf32>
    %41 = vector.extract_strided_slice %38 {offsets = [0, 64], sizes = [8, 64], strides = [1, 1]} : vector<8x256xf32> to vector<8x64xf32>
    %42 = vector.extract_strided_slice %39 {offsets = [0, 128], sizes = [8, 64], strides = [1, 1]} : vector<8x256xf32> to vector<8x64xf32>
    %43 = vector.extract_strided_slice %38 {offsets = [0, 192], sizes = [8, 64], strides = [1, 1]} : vector<8x256xf32> to vector<8x64xf32>
    %44 = arith.mulf %41, %21 : vector<8x64xf32>
    %45 = arith.mulf %40, %42 : vector<8x64xf32>
    %46 = arith.addf %44, %45 : vector<8x64xf32>
    %47 = math.tanh %46 : vector<8x64xf32>
    %48 = arith.mulf %43, %47 : vector<8x64xf32>
    %49 = vector.extract_strided_slice %48 {offsets = [0, 0], sizes = [8, 32], strides = [1, 1]} : vector<8x64xf32> to vector<8x32xf32>
    %50 = arith.truncf %49 : vector<8x32xf32> to vector<8x32xbf16>
    %51 = arith.index_cast %24 : i32 to index
    %c0_30 = arith.constant 0 : index
    %52 = vector.load %arg6[%51, %c0_30] : memref<64x32xbf16, #tpu.memory_space<vmem>>, vector<8x32xbf16>
    tpu.vector_store %arg6[%51, %c0_30], %50 {strides = array<i32>} : memref<64x32xbf16, #tpu.memory_space<vmem>>, vector<8x32xbf16>,
    %53 = vector.extract_strided_slice %48 {offsets = [0, 32], sizes = [8, 32], strides = [1, 1]} : vector<8x64xf32> to vector<8x32xf32>
    %54 = arith.truncf %53 : vector<8x32xf32> to vector<8x32xbf16>
    %55 = arith.index_cast %26 : i32 to index
    %c0_31 = arith.constant 0 : index
    %56 = vector.load %arg7[%55, %c0_31] : memref<64x32xbf16, #tpu.memory_space<vmem>>, vector<8x32xbf16>
    tpu.vector_store %arg7[%55, %c0_31], %54 {strides = array<i32>} : memref<64x32xbf16, #tpu.memory_space<vmem>>, vector<8x32xbf16>,
    %c1_i32 = arith.constant 1 : i32
    %c7_i32_32 = arith.constant 7 : i32
    %57 = arith.subi %c7_i32_32, %c1_i32 : i32
    %c8_i32_33 = arith.constant 8 : i32
    %58 = arith.muli %c1_i32, %c8_i32_33 : i32
    %59 = tpu.assume_multiple %58, 8 : i32
    %c8_i32_34 = arith.constant 8 : i32
    %60 = arith.muli %57, %c8_i32_34 : i32
    %61 = tpu.assume_multiple %60, 8 : i32
    %62 = arith.index_cast %59 : i32 to index
    %c0_35 = arith.constant 0 : index
    %63 = vector.load %arg10[%62, %c0_35] : memref<64x256xf32, #tpu.memory_space<vmem>>, vector<8x256xf32>
    %64 = arith.index_cast %61 : i32 to index
    %c0_36 = arith.constant 0 : index
    %65 = vector.load %arg11[%64, %c0_36] : memref<64x256xf32, #tpu.memory_space<vmem>>, vector<8x256xf32>
    %66 = arith.addf %63, %65 : vector<8x256xf32>
    %cst_37 = arith.constant dense<0.000000e+00> : vector<8x256xf32>
    %67 = tpu.matmul %48, %19, %cst_37 {dimension_numbers = #tpu.dot_dimension_numbers<[1], [0], [0], [1], [0, 0, 1, 1], [], []>} : vector<8x64xf32>, vector<64x256xf32>, vector<8x256xf32> -> vector<8x256xf32>
    %68 = arith.addf %66, %67 : vector<8x256xf32>
    %69 = arith.negf %68 : vector<8x256xf32>
    %70 = math.exp %69 : vector<8x256xf32>
    %cst_38 = arith.constant 1.000000e+00 : f32
    %71 = vector.broadcast %cst_38 : f32 to vector<8x256xf32>
    %72 = arith.addf %71, %70 : vector<8x256xf32>
    %73 = arith.divf %71, %72 : vector<8x256xf32>
    %74 = math.tanh %68 : vector<8x256xf32>
    %75 = vector.extract_strided_slice %73 {offsets = [0, 0], sizes = [8, 64], strides = [1, 1]} : vector<8x256xf32> to vector<8x64xf32>
    %76 = vector.extract_strided_slice %73 {offsets = [0, 64], sizes = [8, 64], strides = [1, 1]} : vector<8x256xf32> to vector<8x64xf32>
    %77 = vector.extract_strided_slice %74 {offsets = [0, 128], sizes = [8, 64], strides = [1, 1]} : vector<8x256xf32> to vector<8x64xf32>
    %78 = vector.extract_strided_slice %73 {offsets = [0, 192], sizes = [8, 64], strides = [1, 1]} : vector<8x256xf32> to vector<8x64xf32>
    %79 = arith.mulf %76, %46 : vector<8x64xf32>
    %80 = arith.mulf %75, %77 : vector<8x64xf32>
    %81 = arith.addf %79, %80 : vector<8x64xf32>
    %82 = math.tanh %81 : vector<8x64xf32>
    %83 = arith.mulf %78, %82 : vector<8x64xf32>
    %84 = vector.extract_strided_slice %83 {offsets = [0, 0], sizes = [8, 32], strides = [1, 1]} : vector<8x64xf32> to vector<8x32xf32>
    %85 = arith.truncf %84 : vector<8x32xf32> to vector<8x32xbf16>
    %86 = arith.index_cast %59 : i32 to index
    %c0_39 = arith.constant 0 : index
    %87 = vector.load %arg6[%86, %c0_39] : memref<64x32xbf16, #tpu.memory_space<vmem>>, vector<8x32xbf16>
    tpu.vector_store %arg6[%86, %c0_39], %85 {strides = array<i32>} : memref<64x32xbf16, #tpu.memory_space<vmem>>, vector<8x32xbf16>,
    %88 = vector.extract_strided_slice %83 {offsets = [0, 32], sizes = [8, 32], strides = [1, 1]} : vector<8x64xf32> to vector<8x32xf32>
    %89 = arith.truncf %88 : vector<8x32xf32> to vector<8x32xbf16>
    %90 = arith.index_cast %61 : i32 to index
    %c0_40 = arith.constant 0 : index
    %91 = vector.load %arg7[%90, %c0_40] : memref<64x32xbf16, #tpu.memory_space<vmem>>, vector<8x32xbf16>
    tpu.vector_store %arg7[%90, %c0_40], %89 {strides = array<i32>} : memref<64x32xbf16, #tpu.memory_space<vmem>>, vector<8x32xbf16>,
    %c2_i32 = arith.constant 2 : i32
    %c7_i32_41 = arith.constant 7 : i32
    %92 = arith.subi %c7_i32_41, %c2_i32 : i32
    %c8_i32_42 = arith.constant 8 : i32
    %93 = arith.muli %c2_i32, %c8_i32_42 : i32
    %94 = tpu.assume_multiple %93, 8 : i32
    %c8_i32_43 = arith.constant 8 : i32
    %95 = arith.muli %92, %c8_i32_43 : i32
    %96 = tpu.assume_multiple %95, 8 : i32
    %97 = arith.index_cast %94 : i32 to index
    %c0_44 = arith.constant 0 : index
    %98 = vector.load %arg10[%97, %c0_44] : memref<64x256xf32, #tpu.memory_space<vmem>>, vector<8x256xf32>
    %99 = arith.index_cast %96 : i32 to index
    %c0_45 = arith.constant 0 : index
    %100 = vector.load %arg11[%99, %c0_45] : memref<64x256xf32, #tpu.memory_space<vmem>>, vector<8x256xf32>
    %101 = arith.addf %98, %100 : vector<8x256xf32>
    %cst_46 = arith.constant dense<0.000000e+00> : vector<8x256xf32>
    %102 = tpu.matmul %83, %19, %cst_46 {dimension_numbers = #tpu.dot_dimension_numbers<[1], [0], [0], [1], [0, 0, 1, 1], [], []>} : vector<8x64xf32>, vector<64x256xf32>, vector<8x256xf32> -> vector<8x256xf32>
    %103 = arith.addf %101, %102 : vector<8x256xf32>
    %104 = arith.negf %103 : vector<8x256xf32>
    %105 = math.exp %104 : vector<8x256xf32>
    %cst_47 = arith.constant 1.000000e+00 : f32
    %106 = vector.broadcast %cst_47 : f32 to vector<8x256xf32>
    %107 = arith.addf %106, %105 : vector<8x256xf32>
    %108 = arith.divf %106, %107 : vector<8x256xf32>
    %109 = math.tanh %103 : vector<8x256xf32>
    %110 = vector.extract_strided_slice %108 {offsets = [0, 0], sizes = [8, 64], strides = [1, 1]} : vector<8x256xf32> to vector<8x64xf32>
    %111 = vector.extract_strided_slice %108 {offsets = [0, 64], sizes = [8, 64], strides = [1, 1]} : vector<8x256xf32> to vector<8x64xf32>
    %112 = vector.extract_strided_slice %109 {offsets = [0, 128], sizes = [8, 64], strides = [1, 1]} : vector<8x256xf32> to vector<8x64xf32>
    %113 = vector.extract_strided_slice %108 {offsets = [0, 192], sizes = [8, 64], strides = [1, 1]} : vector<8x256xf32> to vector<8x64xf32>
    %114 = arith.mulf %111, %81 : vector<8x64xf32>
    %115 = arith.mulf %110, %112 : vector<8x64xf32>
    %116 = arith.addf %114, %115 : vector<8x64xf32>
    %117 = math.tanh %116 : vector<8x64xf32>
    %118 = arith.mulf %113, %117 : vector<8x64xf32>
    %119 = vector.extract_strided_slice %118 {offsets = [0, 0], sizes = [8, 32], strides = [1, 1]} : vector<8x64xf32> to vector<8x32xf32>
    %120 = arith.truncf %119 : vector<8x32xf32> to vector<8x32xbf16>
    %121 = arith.index_cast %94 : i32 to index
    %c0_48 = arith.constant 0 : index
    %122 = vector.load %arg6[%121, %c0_48] : memref<64x32xbf16, #tpu.memory_space<vmem>>, vector<8x32xbf16>
    tpu.vector_store %arg6[%121, %c0_48], %120 {strides = array<i32>} : memref<64x32xbf16, #tpu.memory_space<vmem>>, vector<8x32xbf16>,
    %123 = vector.extract_strided_slice %118 {offsets = [0, 32], sizes = [8, 32], strides = [1, 1]} : vector<8x64xf32> to vector<8x32xf32>
    %124 = arith.truncf %123 : vector<8x32xf32> to vector<8x32xbf16>
    %125 = arith.index_cast %96 : i32 to index
    %c0_49 = arith.constant 0 : index
    %126 = vector.load %arg7[%125, %c0_49] : memref<64x32xbf16, #tpu.memory_space<vmem>>, vector<8x32xbf16>
    tpu.vector_store %arg7[%125, %c0_49], %124 {strides = array<i32>} : memref<64x32xbf16, #tpu.memory_space<vmem>>, vector<8x32xbf16>,
    %c3_i32 = arith.constant 3 : i32
    %c7_i32_50 = arith.constant 7 : i32
    %127 = arith.subi %c7_i32_50, %c3_i32 : i32
    %c8_i32_51 = arith.constant 8 : i32
    %128 = arith.muli %c3_i32, %c8_i32_51 : i32
    %129 = tpu.assume_multiple %128, 8 : i32
    %c8_i32_52 = arith.constant 8 : i32
    %130 = arith.muli %127, %c8_i32_52 : i32
    %131 = tpu.assume_multiple %130, 8 : i32
    %132 = arith.index_cast %129 : i32 to index
    %c0_53 = arith.constant 0 : index
    %133 = vector.load %arg10[%132, %c0_53] : memref<64x256xf32, #tpu.memory_space<vmem>>, vector<8x256xf32>
    %134 = arith.index_cast %131 : i32 to index
    %c0_54 = arith.constant 0 : index
    %135 = vector.load %arg11[%134, %c0_54] : memref<64x256xf32, #tpu.memory_space<vmem>>, vector<8x256xf32>
    %136 = arith.addf %133, %135 : vector<8x256xf32>
    %cst_55 = arith.constant dense<0.000000e+00> : vector<8x256xf32>
    %137 = tpu.matmul %118, %19, %cst_55 {dimension_numbers = #tpu.dot_dimension_numbers<[1], [0], [0], [1], [0, 0, 1, 1], [], []>} : vector<8x64xf32>, vector<64x256xf32>, vector<8x256xf32> -> vector<8x256xf32>
    %138 = arith.addf %136, %137 : vector<8x256xf32>
    %139 = arith.negf %138 : vector<8x256xf32>
    %140 = math.exp %139 : vector<8x256xf32>
    %cst_56 = arith.constant 1.000000e+00 : f32
    %141 = vector.broadcast %cst_56 : f32 to vector<8x256xf32>
    %142 = arith.addf %141, %140 : vector<8x256xf32>
    %143 = arith.divf %141, %142 : vector<8x256xf32>
    %144 = math.tanh %138 : vector<8x256xf32>
    %145 = vector.extract_strided_slice %143 {offsets = [0, 0], sizes = [8, 64], strides = [1, 1]} : vector<8x256xf32> to vector<8x64xf32>
    %146 = vector.extract_strided_slice %143 {offsets = [0, 64], sizes = [8, 64], strides = [1, 1]} : vector<8x256xf32> to vector<8x64xf32>
    %147 = vector.extract_strided_slice %144 {offsets = [0, 128], sizes = [8, 64], strides = [1, 1]} : vector<8x256xf32> to vector<8x64xf32>
    %148 = vector.extract_strided_slice %143 {offsets = [0, 192], sizes = [8, 64], strides = [1, 1]} : vector<8x256xf32> to vector<8x64xf32>
    %149 = arith.mulf %146, %116 : vector<8x64xf32>
    %150 = arith.mulf %145, %147 : vector<8x64xf32>
    %151 = arith.addf %149, %150 : vector<8x64xf32>
    %152 = math.tanh %151 : vector<8x64xf32>
    %153 = arith.mulf %148, %152 : vector<8x64xf32>
    %154 = vector.extract_strided_slice %153 {offsets = [0, 0], sizes = [8, 32], strides = [1, 1]} : vector<8x64xf32> to vector<8x32xf32>
    %155 = arith.truncf %154 : vector<8x32xf32> to vector<8x32xbf16>
    %156 = arith.index_cast %129 : i32 to index
    %c0_57 = arith.constant 0 : index
    %157 = vector.load %arg6[%156, %c0_57] : memref<64x32xbf16, #tpu.memory_space<vmem>>, vector<8x32xbf16>
    tpu.vector_store %arg6[%156, %c0_57], %155 {strides = array<i32>} : memref<64x32xbf16, #tpu.memory_space<vmem>>, vector<8x32xbf16>,
    %158 = vector.extract_strided_slice %153 {offsets = [0, 32], sizes = [8, 32], strides = [1, 1]} : vector<8x64xf32> to vector<8x32xf32>
    %159 = arith.truncf %158 : vector<8x32xf32> to vector<8x32xbf16>
    %160 = arith.index_cast %131 : i32 to index
    %c0_58 = arith.constant 0 : index
    %161 = vector.load %arg7[%160, %c0_58] : memref<64x32xbf16, #tpu.memory_space<vmem>>, vector<8x32xbf16>
    tpu.vector_store %arg7[%160, %c0_58], %159 {strides = array<i32>} : memref<64x32xbf16, #tpu.memory_space<vmem>>, vector<8x32xbf16>,
    %c4_i32 = arith.constant 4 : i32
    %c7_i32_59 = arith.constant 7 : i32
    %162 = arith.subi %c7_i32_59, %c4_i32 : i32
    %c8_i32_60 = arith.constant 8 : i32
    %163 = arith.muli %c4_i32, %c8_i32_60 : i32
    %164 = tpu.assume_multiple %163, 8 : i32
    %c8_i32_61 = arith.constant 8 : i32
    %165 = arith.muli %162, %c8_i32_61 : i32
    %166 = tpu.assume_multiple %165, 8 : i32
    %167 = arith.index_cast %164 : i32 to index
    %c0_62 = arith.constant 0 : index
    %168 = vector.load %arg10[%167, %c0_62] : memref<64x256xf32, #tpu.memory_space<vmem>>, vector<8x256xf32>
    %169 = arith.index_cast %166 : i32 to index
    %c0_63 = arith.constant 0 : index
    %170 = vector.load %arg11[%169, %c0_63] : memref<64x256xf32, #tpu.memory_space<vmem>>, vector<8x256xf32>
    %171 = arith.addf %168, %170 : vector<8x256xf32>
    %cst_64 = arith.constant dense<0.000000e+00> : vector<8x256xf32>
    %172 = tpu.matmul %153, %19, %cst_64 {dimension_numbers = #tpu.dot_dimension_numbers<[1], [0], [0], [1], [0, 0, 1, 1], [], []>} : vector<8x64xf32>, vector<64x256xf32>, vector<8x256xf32> -> vector<8x256xf32>
    %173 = arith.addf %171, %172 : vector<8x256xf32>
    %174 = arith.negf %173 : vector<8x256xf32>
    %175 = math.exp %174 : vector<8x256xf32>
    %cst_65 = arith.constant 1.000000e+00 : f32
    %176 = vector.broadcast %cst_65 : f32 to vector<8x256xf32>
    %177 = arith.addf %176, %175 : vector<8x256xf32>
    %178 = arith.divf %176, %177 : vector<8x256xf32>
    %179 = math.tanh %173 : vector<8x256xf32>
    %180 = vector.extract_strided_slice %178 {offsets = [0, 0], sizes = [8, 64], strides = [1, 1]} : vector<8x256xf32> to vector<8x64xf32>
    %181 = vector.extract_strided_slice %178 {offsets = [0, 64], sizes = [8, 64], strides = [1, 1]} : vector<8x256xf32> to vector<8x64xf32>
    %182 = vector.extract_strided_slice %179 {offsets = [0, 128], sizes = [8, 64], strides = [1, 1]} : vector<8x256xf32> to vector<8x64xf32>
    %183 = vector.extract_strided_slice %178 {offsets = [0, 192], sizes = [8, 64], strides = [1, 1]} : vector<8x256xf32> to vector<8x64xf32>
    %184 = arith.mulf %181, %151 : vector<8x64xf32>
    %185 = arith.mulf %180, %182 : vector<8x64xf32>
    %186 = arith.addf %184, %185 : vector<8x64xf32>
    %187 = math.tanh %186 : vector<8x64xf32>
    %188 = arith.mulf %183, %187 : vector<8x64xf32>
    %189 = vector.extract_strided_slice %188 {offsets = [0, 0], sizes = [8, 32], strides = [1, 1]} : vector<8x64xf32> to vector<8x32xf32>
    %190 = arith.truncf %189 : vector<8x32xf32> to vector<8x32xbf16>
    %191 = arith.index_cast %164 : i32 to index
    %c0_66 = arith.constant 0 : index
    %192 = vector.load %arg6[%191, %c0_66] : memref<64x32xbf16, #tpu.memory_space<vmem>>, vector<8x32xbf16>
    tpu.vector_store %arg6[%191, %c0_66], %190 {strides = array<i32>} : memref<64x32xbf16, #tpu.memory_space<vmem>>, vector<8x32xbf16>,
    %193 = vector.extract_strided_slice %188 {offsets = [0, 32], sizes = [8, 32], strides = [1, 1]} : vector<8x64xf32> to vector<8x32xf32>
    %194 = arith.truncf %193 : vector<8x32xf32> to vector<8x32xbf16>
    %195 = arith.index_cast %166 : i32 to index
    %c0_67 = arith.constant 0 : index
    %196 = vector.load %arg7[%195, %c0_67] : memref<64x32xbf16, #tpu.memory_space<vmem>>, vector<8x32xbf16>
    tpu.vector_store %arg7[%195, %c0_67], %194 {strides = array<i32>} : memref<64x32xbf16, #tpu.memory_space<vmem>>, vector<8x32xbf16>,
    %c5_i32 = arith.constant 5 : i32
    %c7_i32_68 = arith.constant 7 : i32
    %197 = arith.subi %c7_i32_68, %c5_i32 : i32
    %c8_i32_69 = arith.constant 8 : i32
    %198 = arith.muli %c5_i32, %c8_i32_69 : i32
    %199 = tpu.assume_multiple %198, 8 : i32
    %c8_i32_70 = arith.constant 8 : i32
    %200 = arith.muli %197, %c8_i32_70 : i32
    %201 = tpu.assume_multiple %200, 8 : i32
    %202 = arith.index_cast %199 : i32 to index
    %c0_71 = arith.constant 0 : index
    %203 = vector.load %arg10[%202, %c0_71] : memref<64x256xf32, #tpu.memory_space<vmem>>, vector<8x256xf32>
    %204 = arith.index_cast %201 : i32 to index
    %c0_72 = arith.constant 0 : index
    %205 = vector.load %arg11[%204, %c0_72] : memref<64x256xf32, #tpu.memory_space<vmem>>, vector<8x256xf32>
    %206 = arith.addf %203, %205 : vector<8x256xf32>
    %cst_73 = arith.constant dense<0.000000e+00> : vector<8x256xf32>
    %207 = tpu.matmul %188, %19, %cst_73 {dimension_numbers = #tpu.dot_dimension_numbers<[1], [0], [0], [1], [0, 0, 1, 1], [], []>} : vector<8x64xf32>, vector<64x256xf32>, vector<8x256xf32> -> vector<8x256xf32>
    %208 = arith.addf %206, %207 : vector<8x256xf32>
    %209 = arith.negf %208 : vector<8x256xf32>
    %210 = math.exp %209 : vector<8x256xf32>
    %cst_74 = arith.constant 1.000000e+00 : f32
    %211 = vector.broadcast %cst_74 : f32 to vector<8x256xf32>
    %212 = arith.addf %211, %210 : vector<8x256xf32>
    %213 = arith.divf %211, %212 : vector<8x256xf32>
    %214 = math.tanh %208 : vector<8x256xf32>
    %215 = vector.extract_strided_slice %213 {offsets = [0, 0], sizes = [8, 64], strides = [1, 1]} : vector<8x256xf32> to vector<8x64xf32>
    %216 = vector.extract_strided_slice %213 {offsets = [0, 64], sizes = [8, 64], strides = [1, 1]} : vector<8x256xf32> to vector<8x64xf32>
    %217 = vector.extract_strided_slice %214 {offsets = [0, 128], sizes = [8, 64], strides = [1, 1]} : vector<8x256xf32> to vector<8x64xf32>
    %218 = vector.extract_strided_slice %213 {offsets = [0, 192], sizes = [8, 64], strides = [1, 1]} : vector<8x256xf32> to vector<8x64xf32>
    %219 = arith.mulf %216, %186 : vector<8x64xf32>
    %220 = arith.mulf %215, %217 : vector<8x64xf32>
    %221 = arith.addf %219, %220 : vector<8x64xf32>
    %222 = math.tanh %221 : vector<8x64xf32>
    %223 = arith.mulf %218, %222 : vector<8x64xf32>
    %224 = vector.extract_strided_slice %223 {offsets = [0, 0], sizes = [8, 32], strides = [1, 1]} : vector<8x64xf32> to vector<8x32xf32>
    %225 = arith.truncf %224 : vector<8x32xf32> to vector<8x32xbf16>
    %226 = arith.index_cast %199 : i32 to index
    %c0_75 = arith.constant 0 : index
    %227 = vector.load %arg6[%226, %c0_75] : memref<64x32xbf16, #tpu.memory_space<vmem>>, vector<8x32xbf16>
    tpu.vector_store %arg6[%226, %c0_75], %225 {strides = array<i32>} : memref<64x32xbf16, #tpu.memory_space<vmem>>, vector<8x32xbf16>,
    %228 = vector.extract_strided_slice %223 {offsets = [0, 32], sizes = [8, 32], strides = [1, 1]} : vector<8x64xf32> to vector<8x32xf32>
    %229 = arith.truncf %228 : vector<8x32xf32> to vector<8x32xbf16>
    %230 = arith.index_cast %201 : i32 to index
    %c0_76 = arith.constant 0 : index
    %231 = vector.load %arg7[%230, %c0_76] : memref<64x32xbf16, #tpu.memory_space<vmem>>, vector<8x32xbf16>
    tpu.vector_store %arg7[%230, %c0_76], %229 {strides = array<i32>} : memref<64x32xbf16, #tpu.memory_space<vmem>>, vector<8x32xbf16>,
    %c6_i32 = arith.constant 6 : i32
    %c7_i32_77 = arith.constant 7 : i32
    %232 = arith.subi %c7_i32_77, %c6_i32 : i32
    %c8_i32_78 = arith.constant 8 : i32
    %233 = arith.muli %c6_i32, %c8_i32_78 : i32
    %234 = tpu.assume_multiple %233, 8 : i32
    %c8_i32_79 = arith.constant 8 : i32
    %235 = arith.muli %232, %c8_i32_79 : i32
    %236 = tpu.assume_multiple %235, 8 : i32
    %237 = arith.index_cast %234 : i32 to index
    %c0_80 = arith.constant 0 : index
    %238 = vector.load %arg10[%237, %c0_80] : memref<64x256xf32, #tpu.memory_space<vmem>>, vector<8x256xf32>
    %239 = arith.index_cast %236 : i32 to index
    %c0_81 = arith.constant 0 : index
    %240 = vector.load %arg11[%239, %c0_81] : memref<64x256xf32, #tpu.memory_space<vmem>>, vector<8x256xf32>
    %241 = arith.addf %238, %240 : vector<8x256xf32>
    %cst_82 = arith.constant dense<0.000000e+00> : vector<8x256xf32>
    %242 = tpu.matmul %223, %19, %cst_82 {dimension_numbers = #tpu.dot_dimension_numbers<[1], [0], [0], [1], [0, 0, 1, 1], [], []>} : vector<8x64xf32>, vector<64x256xf32>, vector<8x256xf32> -> vector<8x256xf32>
    %243 = arith.addf %241, %242 : vector<8x256xf32>
    %244 = arith.negf %243 : vector<8x256xf32>
    %245 = math.exp %244 : vector<8x256xf32>
    %cst_83 = arith.constant 1.000000e+00 : f32
    %246 = vector.broadcast %cst_83 : f32 to vector<8x256xf32>
    %247 = arith.addf %246, %245 : vector<8x256xf32>
    %248 = arith.divf %246, %247 : vector<8x256xf32>
    %249 = math.tanh %243 : vector<8x256xf32>
    %250 = vector.extract_strided_slice %248 {offsets = [0, 0], sizes = [8, 64], strides = [1, 1]} : vector<8x256xf32> to vector<8x64xf32>
    %251 = vector.extract_strided_slice %248 {offsets = [0, 64], sizes = [8, 64], strides = [1, 1]} : vector<8x256xf32> to vector<8x64xf32>
    %252 = vector.extract_strided_slice %249 {offsets = [0, 128], sizes = [8, 64], strides = [1, 1]} : vector<8x256xf32> to vector<8x64xf32>
    %253 = vector.extract_strided_slice %248 {offsets = [0, 192], sizes = [8, 64], strides = [1, 1]} : vector<8x256xf32> to vector<8x64xf32>
    %254 = arith.mulf %251, %221 : vector<8x64xf32>
    %255 = arith.mulf %250, %252 : vector<8x64xf32>
    %256 = arith.addf %254, %255 : vector<8x64xf32>
    %257 = math.tanh %256 : vector<8x64xf32>
    %258 = arith.mulf %253, %257 : vector<8x64xf32>
    %259 = vector.extract_strided_slice %258 {offsets = [0, 0], sizes = [8, 32], strides = [1, 1]} : vector<8x64xf32> to vector<8x32xf32>
    %260 = arith.truncf %259 : vector<8x32xf32> to vector<8x32xbf16>
    %261 = arith.index_cast %234 : i32 to index
    %c0_84 = arith.constant 0 : index
    %262 = vector.load %arg6[%261, %c0_84] : memref<64x32xbf16, #tpu.memory_space<vmem>>, vector<8x32xbf16>
    tpu.vector_store %arg6[%261, %c0_84], %260 {strides = array<i32>} : memref<64x32xbf16, #tpu.memory_space<vmem>>, vector<8x32xbf16>,
    %263 = vector.extract_strided_slice %258 {offsets = [0, 32], sizes = [8, 32], strides = [1, 1]} : vector<8x64xf32> to vector<8x32xf32>
    %264 = arith.truncf %263 : vector<8x32xf32> to vector<8x32xbf16>
    %265 = arith.index_cast %236 : i32 to index
    %c0_85 = arith.constant 0 : index
    %266 = vector.load %arg7[%265, %c0_85] : memref<64x32xbf16, #tpu.memory_space<vmem>>, vector<8x32xbf16>
    tpu.vector_store %arg7[%265, %c0_85], %264 {strides = array<i32>} : memref<64x32xbf16, #tpu.memory_space<vmem>>, vector<8x32xbf16>,
    %c7_i32_86 = arith.constant 7 : i32
    %c7_i32_87 = arith.constant 7 : i32
    %267 = arith.subi %c7_i32_87, %c7_i32_86 : i32
    %c8_i32_88 = arith.constant 8 : i32
    %268 = arith.muli %c7_i32_86, %c8_i32_88 : i32
    %269 = tpu.assume_multiple %268, 8 : i32
    %c8_i32_89 = arith.constant 8 : i32
    %270 = arith.muli %267, %c8_i32_89 : i32
    %271 = tpu.assume_multiple %270, 8 : i32
    %272 = arith.index_cast %269 : i32 to index
    %c0_90 = arith.constant 0 : index
    %273 = vector.load %arg10[%272, %c0_90] : memref<64x256xf32, #tpu.memory_space<vmem>>, vector<8x256xf32>
    %274 = arith.index_cast %271 : i32 to index
    %c0_91 = arith.constant 0 : index
    %275 = vector.load %arg11[%274, %c0_91] : memref<64x256xf32, #tpu.memory_space<vmem>>, vector<8x256xf32>
    %276 = arith.addf %273, %275 : vector<8x256xf32>
    %cst_92 = arith.constant dense<0.000000e+00> : vector<8x256xf32>
    %277 = tpu.matmul %258, %19, %cst_92 {dimension_numbers = #tpu.dot_dimension_numbers<[1], [0], [0], [1], [0, 0, 1, 1], [], []>} : vector<8x64xf32>, vector<64x256xf32>, vector<8x256xf32> -> vector<8x256xf32>
    %278 = arith.addf %276, %277 : vector<8x256xf32>
    %279 = arith.negf %278 : vector<8x256xf32>
    %280 = math.exp %279 : vector<8x256xf32>
    %cst_93 = arith.constant 1.000000e+00 : f32
    %281 = vector.broadcast %cst_93 : f32 to vector<8x256xf32>
    %282 = arith.addf %281, %280 : vector<8x256xf32>
    %283 = arith.divf %281, %282 : vector<8x256xf32>
    %284 = math.tanh %278 : vector<8x256xf32>
    %285 = vector.extract_strided_slice %283 {offsets = [0, 0], sizes = [8, 64], strides = [1, 1]} : vector<8x256xf32> to vector<8x64xf32>
    %286 = vector.extract_strided_slice %283 {offsets = [0, 64], sizes = [8, 64], strides = [1, 1]} : vector<8x256xf32> to vector<8x64xf32>
    %287 = vector.extract_strided_slice %284 {offsets = [0, 128], sizes = [8, 64], strides = [1, 1]} : vector<8x256xf32> to vector<8x64xf32>
    %288 = vector.extract_strided_slice %283 {offsets = [0, 192], sizes = [8, 64], strides = [1, 1]} : vector<8x256xf32> to vector<8x64xf32>
    %289 = arith.mulf %286, %256 : vector<8x64xf32>
    %290 = arith.mulf %285, %287 : vector<8x64xf32>
    %291 = arith.addf %289, %290 : vector<8x64xf32>
    %292 = math.tanh %291 : vector<8x64xf32>
    %293 = arith.mulf %288, %292 : vector<8x64xf32>
    %294 = vector.extract_strided_slice %293 {offsets = [0, 0], sizes = [8, 32], strides = [1, 1]} : vector<8x64xf32> to vector<8x32xf32>
    %295 = arith.truncf %294 : vector<8x32xf32> to vector<8x32xbf16>
    %296 = arith.index_cast %269 : i32 to index
    %c0_94 = arith.constant 0 : index
    %297 = vector.load %arg6[%296, %c0_94] : memref<64x32xbf16, #tpu.memory_space<vmem>>, vector<8x32xbf16>
    tpu.vector_store %arg6[%296, %c0_94], %295 {strides = array<i32>} : memref<64x32xbf16, #tpu.memory_space<vmem>>, vector<8x32xbf16>,
    %298 = vector.extract_strided_slice %293 {offsets = [0, 32], sizes = [8, 32], strides = [1, 1]} : vector<8x64xf32> to vector<8x32xf32>
    %299 = arith.truncf %298 : vector<8x32xf32> to vector<8x32xbf16>
    %300 = arith.index_cast %271 : i32 to index
    %c0_95 = arith.constant 0 : index
    %301 = vector.load %arg7[%300, %c0_95] : memref<64x32xbf16, #tpu.memory_space<vmem>>, vector<8x32xbf16>
    tpu.vector_store %arg7[%300, %c0_95], %299 {strides = array<i32>} : memref<64x32xbf16, #tpu.memory_space<vmem>>, vector<8x32xbf16>,
    %c8_i32_96 = arith.constant 8 : i32
    %c0_97 = arith.constant 0 : index
    %c0_98 = arith.constant 0 : index
    %302 = vector.load %arg12[%c0_97, %c0_98] : memref<8x64xf32, #tpu.memory_space<vmem>>, vector<8x64xf32>
    tpu.vector_store %arg12[%c0_97, %c0_98], %293 {strides = array<i32>} : memref<8x64xf32, #tpu.memory_space<vmem>>, vector<8x64xf32>,
    %c0_99 = arith.constant 0 : index
    %c0_100 = arith.constant 0 : index
    %303 = vector.load %arg13[%c0_99, %c0_100] : memref<8x64xf32, #tpu.memory_space<vmem>>, vector<8x64xf32>
    tpu.vector_store %arg13[%c0_99, %c0_100], %291 {strides = array<i32>} : memref<8x64xf32, #tpu.memory_space<vmem>>, vector<8x64xf32>,
    %c0_i32_101 = arith.constant 0 : i32
    %304 = arith.cmpi eq, %arg0, %c0_i32_101 : i32
    %305 = arith.extui %304 : i1 to i32
    %c0_i32_102 = arith.constant 0 : i32
    %306 = arith.cmpi ne, %305, %c0_i32_102 : i32
    scf.if %306 {
      %307 = vector.extract_strided_slice %293 {offsets = [0, 0], sizes = [8, 32], strides = [1, 1]} : vector<8x64xf32> to vector<8x32xf32>
      %c0_103 = arith.constant 0 : index
      %c0_104 = arith.constant 0 : index
      %c0_105 = arith.constant 0 : index
      %308 = vector.load %arg8[%c0_103, %c0_104, %c0_105] : memref<2x8x32xf32, #tpu.memory_space<vmem>>, vector<1x8x32xf32>
      %309 = vector.shape_cast %308 : vector<1x8x32xf32> to vector<8x32xf32>
      %310 = vector.shape_cast %307 : vector<8x32xf32> to vector<1x8x32xf32>
      tpu.vector_store %arg8[%c0_103, %c0_104, %c0_105], %310 {strides = array<i32>} : memref<2x8x32xf32, #tpu.memory_space<vmem>>, vector<1x8x32xf32>,
      %311 = vector.extract_strided_slice %293 {offsets = [0, 32], sizes = [8, 32], strides = [1, 1]} : vector<8x64xf32> to vector<8x32xf32>
      %c1_106 = arith.constant 1 : index
      %c0_107 = arith.constant 0 : index
      %c0_108 = arith.constant 0 : index
      %312 = vector.load %arg8[%c1_106, %c0_107, %c0_108] : memref<2x8x32xf32, #tpu.memory_space<vmem>>, vector<1x8x32xf32>
      %313 = vector.shape_cast %312 : vector<1x8x32xf32> to vector<8x32xf32>
      %314 = vector.shape_cast %311 : vector<8x32xf32> to vector<1x8x32xf32>
      tpu.vector_store %arg8[%c1_106, %c0_107, %c0_108], %314 {strides = array<i32>} : memref<2x8x32xf32, #tpu.memory_space<vmem>>, vector<1x8x32xf32>,
      %315 = vector.extract_strided_slice %291 {offsets = [0, 0], sizes = [8, 32], strides = [1, 1]} : vector<8x64xf32> to vector<8x32xf32>
      %c0_109 = arith.constant 0 : index
      %c0_110 = arith.constant 0 : index
      %c0_111 = arith.constant 0 : index
      %316 = vector.load %arg9[%c0_109, %c0_110, %c0_111] : memref<2x8x32xf32, #tpu.memory_space<vmem>>, vector<1x8x32xf32>
      %317 = vector.shape_cast %316 : vector<1x8x32xf32> to vector<8x32xf32>
      %318 = vector.shape_cast %315 : vector<8x32xf32> to vector<1x8x32xf32>
      tpu.vector_store %arg9[%c0_109, %c0_110, %c0_111], %318 {strides = array<i32>} : memref<2x8x32xf32, #tpu.memory_space<vmem>>, vector<1x8x32xf32>,
      %319 = vector.extract_strided_slice %291 {offsets = [0, 32], sizes = [8, 32], strides = [1, 1]} : vector<8x64xf32> to vector<8x32xf32>
      %c1_112 = arith.constant 1 : index
      %c0_113 = arith.constant 0 : index
      %c0_114 = arith.constant 0 : index
      %320 = vector.load %arg9[%c1_112, %c0_113, %c0_114] : memref<2x8x32xf32, #tpu.memory_space<vmem>>, vector<1x8x32xf32>
      %321 = vector.shape_cast %320 : vector<1x8x32xf32> to vector<8x32xf32>
      %322 = vector.shape_cast %319 : vector<8x32xf32> to vector<1x8x32xf32>
      tpu.vector_store %arg9[%c1_112, %c0_113, %c0_114], %322 {strides = array<i32>} : memref<2x8x32xf32, #tpu.memory_space<vmem>>, vector<1x8x32xf32>,
    } else {
    }
    return
  }
  func.func @transform_0(%arg0: i32) -> (i32, i32) {
    %c0_i32 = arith.constant 0 : i32
    %c0_i32_0 = arith.constant 0 : i32
    return %arg0, %c0_i32 : i32, i32
  }
  func.func @transform_1(%arg0: i32) -> (i32, i32) {
    %c0_i32 = arith.constant 0 : i32
    %0 = arith.subi %c0_i32, %arg0 : i32
    %c0_i32_0 = arith.constant 0 : i32
    %c0_i32_1 = arith.constant 0 : i32
    return %0, %c0_i32_0 : i32, i32
  }
  func.func @transform_2(%arg0: i32) -> (i32, i32, i32) {
    %c0_i32 = arith.constant 0 : i32
    %c0_i32_0 = arith.constant 0 : i32
    %c0_i32_1 = arith.constant 0 : i32
    %c0_i32_2 = arith.constant 0 : i32
    return %c0_i32, %c0_i32_0, %c0_i32_1 : i32, i32, i32
  }
  func.func @transform_3(%arg0: i32) -> (i32, i32) {
    %c0_i32 = arith.constant 0 : i32
    %c0_i32_0 = arith.constant 0 : i32
    %c0_i32_1 = arith.constant 0 : i32
    return %c0_i32, %c0_i32_0 : i32, i32
  }
  func.func @transform_4(%arg0: i32) -> (i32, i32) {
    %c0_i32 = arith.constant 0 : i32
    %c0_i32_0 = arith.constant 0 : i32
    %c0_i32_1 = arith.constant 0 : i32
    return %c0_i32, %c0_i32_0 : i32, i32
  }
  func.func @transform_5(%arg0: i32) -> (i32, i32) {
    %c0_i32 = arith.constant 0 : i32
    %c0_i32_0 = arith.constant 0 : i32
    return %arg0, %c0_i32 : i32, i32
  }
  func.func @transform_6(%arg0: i32) -> (i32, i32) {
    %c0_i32 = arith.constant 0 : i32
    %0 = arith.subi %c0_i32, %arg0 : i32
    %c0_i32_0 = arith.constant 0 : i32
    %c0_i32_1 = arith.constant 0 : i32
    return %0, %c0_i32_0 : i32, i32
  }
  func.func @transform_7(%arg0: i32) -> (i32, i32, i32) {
    %c0_i32 = arith.constant 0 : i32
    %c0_i32_0 = arith.constant 0 : i32
    %c0_i32_1 = arith.constant 0 : i32
    %c0_i32_2 = arith.constant 0 : i32
    return %c0_i32, %c0_i32_0, %c0_i32_1 : i32, i32, i32
  }
  func.func @transform_8(%arg0: i32) -> (i32, i32, i32) {
    %c0_i32 = arith.constant 0 : i32
    %c0_i32_0 = arith.constant 0 : i32
    %c0_i32_1 = arith.constant 0 : i32
    %c0_i32_2 = arith.constant 0 : i32
    return %c0_i32, %c0_i32_0, %c0_i32_1 : i32, i32, i32
  }
}

module attributes {stable_mosaic.version = 11 : i64} {
  func.func @_crf_kernel(%arg0: i32, %arg1: memref<64x32xbf16, #tpu.memory_space<vmem>>, %arg2: memref<64x32xbf16, #tpu.memory_space<vmem>>, %arg3: memref<2x32x8xbf16, #tpu.memory_space<vmem>>, %arg4: memref<8x128xf32, #tpu.memory_space<vmem>>, %arg5: memref<1x128xf32, #tpu.memory_space<vmem>>, %arg6: memref<64x128xf32, #tpu.memory_space<vmem>>) attributes {dimension_semantics = [#tpu.dimension_semantics<parallel>], iteration_bounds = array<i64: 1>, scalar_prefetch = 0 : i64, scratch_operands = 0 : i64, tpu.core_type = #tpu.core_type<tc>, window_params = [{transform_indices = @transform_0, window_bounds = array<i64: 64, 32>}, {transform_indices = @transform_1, window_bounds = array<i64: 64, 32>}, {pipeline_mode = #tpu.pipeline_mode<synchronous>, transform_indices = @transform_2, window_bounds = array<i64: 2, 32, 8>}, {pipeline_mode = #tpu.pipeline_mode<synchronous>, transform_indices = @transform_3, window_bounds = array<i64: 8, 128>}, {pipeline_mode = #tpu.pipeline_mode<synchronous>, transform_indices = @transform_4, window_bounds = array<i64: 1, 128>}, {transform_indices = @transform_5, window_bounds = array<i64: 64, 128>}]} {
    %c0 = arith.constant 0 : index
    %c0_0 = arith.constant 0 : index
    %0 = vector.load %arg1[%c0, %c0_0] : memref<64x32xbf16, #tpu.memory_space<vmem>>, vector<64x32xbf16>
    %c0_1 = arith.constant 0 : index
    %c0_2 = arith.constant 0 : index
    %c0_3 = arith.constant 0 : index
    %1 = vector.load %arg3[%c0_1, %c0_2, %c0_3] : memref<2x32x8xbf16, #tpu.memory_space<vmem>>, vector<1x32x8xbf16>
    %2 = vector.shape_cast %1 : vector<1x32x8xbf16> to vector<32x8xbf16>
    %cst = arith.constant dense<0.000000e+00> : vector<64x8xf32>
    %3 = tpu.matmul %0, %2, %cst {dimension_numbers = #tpu.dot_dimension_numbers<[1], [0], [0], [1], [0, 0, 1, 1], [], []>} : vector<64x32xbf16>, vector<32x8xbf16>, vector<64x8xf32> -> vector<64x8xf32>
    %c0_4 = arith.constant 0 : index
    %c0_5 = arith.constant 0 : index
    %4 = vector.load %arg2[%c0_4, %c0_5] : memref<64x32xbf16, #tpu.memory_space<vmem>>, vector<64x32xbf16>
    %c1 = arith.constant 1 : index
    %c0_6 = arith.constant 0 : index
    %c0_7 = arith.constant 0 : index
    %5 = vector.load %arg3[%c1, %c0_6, %c0_7] : memref<2x32x8xbf16, #tpu.memory_space<vmem>>, vector<1x32x8xbf16>
    %6 = vector.shape_cast %5 : vector<1x32x8xbf16> to vector<32x8xbf16>
    %cst_8 = arith.constant dense<0.000000e+00> : vector<64x8xf32>
    %7 = tpu.matmul %4, %6, %cst_8 {dimension_numbers = #tpu.dot_dimension_numbers<[1], [0], [0], [1], [0, 0, 1, 1], [], []>} : vector<64x32xbf16>, vector<32x8xbf16>, vector<64x8xf32> -> vector<64x8xf32>
    %8 = arith.addf %3, %7 : vector<64x8xf32>
    %c0_9 = arith.constant 0 : index
    %c0_10 = arith.constant 0 : index
    %9 = vector.load %arg4[%c0_9, %c0_10] : memref<8x128xf32, #tpu.memory_space<vmem>>, vector<8x128xf32>
    %cst_11 = arith.constant dense<0.000000e+00> : vector<64x128xf32>
    %10 = tpu.matmul %8, %9, %cst_11 {dimension_numbers = #tpu.dot_dimension_numbers<[1], [0], [0], [1], [0, 0, 1, 1], [], []>} : vector<64x8xf32>, vector<8x128xf32>, vector<64x128xf32> -> vector<64x128xf32>
    %c0_12 = arith.constant 0 : index
    %c0_13 = arith.constant 0 : index
    %11 = vector.load %arg5[%c0_12, %c0_13] : memref<1x128xf32, #tpu.memory_space<vmem>>, vector<1x128xf32>
    %12 = vector.broadcast %11 : vector<1x128xf32> to vector<64x128xf32>
    %13 = arith.addf %10, %12 : vector<64x128xf32>
    %c0_14 = arith.constant 0 : index
    %c0_15 = arith.constant 0 : index
    %14 = vector.load %arg6[%c0_14, %c0_15] : memref<64x128xf32, #tpu.memory_space<vmem>>, vector<64x128xf32>
    tpu.vector_store %arg6[%c0_14, %c0_15], %13 {strides = array<i32>} : memref<64x128xf32, #tpu.memory_space<vmem>>, vector<64x128xf32>,
    return
  }
  func.func @transform_0(%arg0: i32) -> (i32, i32) {
    %c0_i32 = arith.constant 0 : i32
    %c0_i32_0 = arith.constant 0 : i32
    return %arg0, %c0_i32 : i32, i32
  }
  func.func @transform_1(%arg0: i32) -> (i32, i32) {
    %c0_i32 = arith.constant 0 : i32
    %c0_i32_0 = arith.constant 0 : i32
    return %arg0, %c0_i32 : i32, i32
  }
  func.func @transform_2(%arg0: i32) -> (i32, i32, i32) {
    %c0_i32 = arith.constant 0 : i32
    %c0_i32_0 = arith.constant 0 : i32
    %c0_i32_1 = arith.constant 0 : i32
    %c0_i32_2 = arith.constant 0 : i32
    return %c0_i32, %c0_i32_0, %c0_i32_1 : i32, i32, i32
  }
  func.func @transform_3(%arg0: i32) -> (i32, i32) {
    %c0_i32 = arith.constant 0 : i32
    %c0_i32_0 = arith.constant 0 : i32
    %c0_i32_1 = arith.constant 0 : i32
    return %c0_i32, %c0_i32_0 : i32, i32
  }
  func.func @transform_4(%arg0: i32) -> (i32, i32) {
    %c0_i32 = arith.constant 0 : i32
    %c0_i32_0 = arith.constant 0 : i32
    %c0_i32_1 = arith.constant 0 : i32
    return %c0_i32, %c0_i32_0 : i32, i32
  }
  func.func @transform_5(%arg0: i32) -> (i32, i32) {
    %c0_i32 = arith.constant 0 : i32
    %c0_i32_0 = arith.constant 0 : i32
    return %arg0, %c0_i32 : i32, i32
  }
}

module attributes {stable_mosaic.version = 11 : i64} {
  func.func @_bilstm_layer_kernel(%arg0: i32, %arg1: memref<64x32xbf16, #tpu.memory_space<vmem>>, %arg2: memref<64x32xbf16, #tpu.memory_space<vmem>>, %arg3: memref<64x32xbf16, #tpu.memory_space<vmem>>, %arg4: memref<64x32xbf16, #tpu.memory_space<vmem>>, %arg5: memref<4x32x256xbf16, #tpu.memory_space<vmem>>, %arg6: memref<64x256xf32, #tpu.memory_space<vmem>>, %arg7: memref<2x256xf32, #tpu.memory_space<vmem>>, %arg8: memref<64x32xbf16, #tpu.memory_space<vmem>>, %arg9: memref<64x32xbf16, #tpu.memory_space<vmem>>, %arg10: memref<2x8x32xf32, #tpu.memory_space<vmem>>, %arg11: memref<2x8x32xf32, #tpu.memory_space<vmem>>, %arg12: memref<64x256xf32, #tpu.memory_space<vmem>>, %arg13: memref<64x256xf32, #tpu.memory_space<vmem>>, %arg14: memref<8x64xf32, #tpu.memory_space<vmem>>, %arg15: memref<8x64xf32, #tpu.memory_space<vmem>>) attributes {dimension_semantics = [#tpu.dimension_semantics<arbitrary>], iteration_bounds = array<i64: 1>, scalar_prefetch = 0 : i64, scratch_operands = 4 : i64, tpu.core_type = #tpu.core_type<tc>, window_params = [{transform_indices = @transform_0, window_bounds = array<i64: 64, 32>}, {transform_indices = @transform_1, window_bounds = array<i64: 64, 32>}, {transform_indices = @transform_2, window_bounds = array<i64: 64, 32>}, {transform_indices = @transform_3, window_bounds = array<i64: 64, 32>}, {pipeline_mode = #tpu.pipeline_mode<synchronous>, transform_indices = @transform_4, window_bounds = array<i64: 4, 32, 256>}, {pipeline_mode = #tpu.pipeline_mode<synchronous>, transform_indices = @transform_5, window_bounds = array<i64: 64, 256>}, {pipeline_mode = #tpu.pipeline_mode<synchronous>, transform_indices = @transform_6, window_bounds = array<i64: 2, 256>}, {transform_indices = @transform_7, window_bounds = array<i64: 64, 32>}, {transform_indices = @transform_8, window_bounds = array<i64: 64, 32>}, {pipeline_mode = #tpu.pipeline_mode<synchronous>, transform_indices = @transform_9, window_bounds = array<i64: 2, 8, 32>}, {pipeline_mode = #tpu.pipeline_mode<synchronous>, transform_indices = @transform_10, window_bounds = array<i64: 2, 8, 32>}]} {
    %c0_i32 = arith.constant 0 : i32
    %0 = arith.cmpi eq, %arg0, %c0_i32 : i32
    %1 = arith.extui %0 : i1 to i32
    %c0_i32_0 = arith.constant 0 : i32
    %2 = arith.cmpi ne, %1, %c0_i32_0 : i32
    scf.if %2 {
      %cst_113 = arith.constant 0.000000e+00 : f32
      %317 = vector.broadcast %cst_113 : f32 to vector<8x64xf32>
      %c0_114 = arith.constant 0 : index
      %c0_115 = arith.constant 0 : index
      %318 = vector.load %arg14[%c0_114, %c0_115] : memref<8x64xf32, #tpu.memory_space<vmem>>, vector<8x64xf32>
      tpu.vector_store %arg14[%c0_114, %c0_115], %317 {strides = array<i32>} : memref<8x64xf32, #tpu.memory_space<vmem>>, vector<8x64xf32>,
      %cst_116 = arith.constant 0.000000e+00 : f32
      %319 = vector.broadcast %cst_116 : f32 to vector<8x64xf32>
      %c0_117 = arith.constant 0 : index
      %c0_118 = arith.constant 0 : index
      %320 = vector.load %arg15[%c0_117, %c0_118] : memref<8x64xf32, #tpu.memory_space<vmem>>, vector<8x64xf32>
      tpu.vector_store %arg15[%c0_117, %c0_118], %319 {strides = array<i32>} : memref<8x64xf32, #tpu.memory_space<vmem>>, vector<8x64xf32>,
    } else {
    }
    %c0 = arith.constant 0 : index
    %c0_1 = arith.constant 0 : index
    %3 = vector.load %arg1[%c0, %c0_1] : memref<64x32xbf16, #tpu.memory_space<vmem>>, vector<64x32xbf16>
    %c0_2 = arith.constant 0 : index
    %c0_3 = arith.constant 0 : index
    %c0_4 = arith.constant 0 : index
    %4 = vector.load %arg5[%c0_2, %c0_3, %c0_4] : memref<4x32x256xbf16, #tpu.memory_space<vmem>>, vector<1x32x256xbf16>
    %5 = vector.shape_cast %4 : vector<1x32x256xbf16> to vector<32x256xbf16>
    %cst = arith.constant dense<0.000000e+00> : vector<64x256xf32>
    %6 = tpu.matmul %3, %5, %cst {dimension_numbers = #tpu.dot_dimension_numbers<[1], [0], [0], [1], [0, 0, 1, 1], [], []>} : vector<64x32xbf16>, vector<32x256xbf16>, vector<64x256xf32> -> vector<64x256xf32>
    %c0_5 = arith.constant 0 : index
    %c0_6 = arith.constant 0 : index
    %7 = vector.load %arg2[%c0_5, %c0_6] : memref<64x32xbf16, #tpu.memory_space<vmem>>, vector<64x32xbf16>
    %c1 = arith.constant 1 : index
    %c0_7 = arith.constant 0 : index
    %c0_8 = arith.constant 0 : index
    %8 = vector.load %arg5[%c1, %c0_7, %c0_8] : memref<4x32x256xbf16, #tpu.memory_space<vmem>>, vector<1x32x256xbf16>
    %9 = vector.shape_cast %8 : vector<1x32x256xbf16> to vector<32x256xbf16>
    %cst_9 = arith.constant dense<0.000000e+00> : vector<64x256xf32>
    %10 = tpu.matmul %7, %9, %cst_9 {dimension_numbers = #tpu.dot_dimension_numbers<[1], [0], [0], [1], [0, 0, 1, 1], [], []>} : vector<64x32xbf16>, vector<32x256xbf16>, vector<64x256xf32> -> vector<64x256xf32>
    %c0_10 = arith.constant 0 : index
    %c0_11 = arith.constant 0 : index
    %11 = vector.load %arg3[%c0_10, %c0_11] : memref<64x32xbf16, #tpu.memory_space<vmem>>, vector<64x32xbf16>
    %c2 = arith.constant 2 : index
    %c0_12 = arith.constant 0 : index
    %c0_13 = arith.constant 0 : index
    %12 = vector.load %arg5[%c2, %c0_12, %c0_13] : memref<4x32x256xbf16, #tpu.memory_space<vmem>>, vector<1x32x256xbf16>
    %13 = vector.shape_cast %12 : vector<1x32x256xbf16> to vector<32x256xbf16>
    %cst_14 = arith.constant dense<0.000000e+00> : vector<64x256xf32>
    %14 = tpu.matmul %11, %13, %cst_14 {dimension_numbers = #tpu.dot_dimension_numbers<[1], [0], [0], [1], [0, 0, 1, 1], [], []>} : vector<64x32xbf16>, vector<32x256xbf16>, vector<64x256xf32> -> vector<64x256xf32>
    %15 = arith.addf %6, %14 : vector<64x256xf32>
    %c0_15 = arith.constant 0 : index
    %c0_16 = arith.constant 0 : index
    %16 = vector.load %arg4[%c0_15, %c0_16] : memref<64x32xbf16, #tpu.memory_space<vmem>>, vector<64x32xbf16>
    %c3 = arith.constant 3 : index
    %c0_17 = arith.constant 0 : index
    %c0_18 = arith.constant 0 : index
    %17 = vector.load %arg5[%c3, %c0_17, %c0_18] : memref<4x32x256xbf16, #tpu.memory_space<vmem>>, vector<1x32x256xbf16>
    %18 = vector.shape_cast %17 : vector<1x32x256xbf16> to vector<32x256xbf16>
    %cst_19 = arith.constant dense<0.000000e+00> : vector<64x256xf32>
    %19 = tpu.matmul %16, %18, %cst_19 {dimension_numbers = #tpu.dot_dimension_numbers<[1], [0], [0], [1], [0, 0, 1, 1], [], []>} : vector<64x32xbf16>, vector<32x256xbf16>, vector<64x256xf32> -> vector<64x256xf32>
    %20 = arith.addf %10, %19 : vector<64x256xf32>
    %c0_20 = arith.constant 0 : index
    %c0_21 = arith.constant 0 : index
    %21 = vector.load %arg7[%c0_20, %c0_21] : memref<2x256xf32, #tpu.memory_space<vmem>>, vector<1x256xf32>
    %22 = vector.broadcast %21 : vector<1x256xf32> to vector<64x256xf32>
    %23 = arith.addf %15, %22 : vector<64x256xf32>
    %c0_22 = arith.constant 0 : index
    %c0_23 = arith.constant 0 : index
    %24 = vector.load %arg12[%c0_22, %c0_23] : memref<64x256xf32, #tpu.memory_space<vmem>>, vector<64x256xf32>
    tpu.vector_store %arg12[%c0_22, %c0_23], %23 {strides = array<i32>} : memref<64x256xf32, #tpu.memory_space<vmem>>, vector<64x256xf32>,
    %c1_24 = arith.constant 1 : index
    %c0_25 = arith.constant 0 : index
    %25 = vector.load %arg7[%c1_24, %c0_25] : memref<2x256xf32, #tpu.memory_space<vmem>>, vector<1x256xf32>
    %26 = vector.broadcast %25 : vector<1x256xf32> to vector<64x256xf32>
    %27 = arith.addf %20, %26 : vector<64x256xf32>
    %c0_26 = arith.constant 0 : index
    %c0_27 = arith.constant 0 : index
    %28 = vector.load %arg13[%c0_26, %c0_27] : memref<64x256xf32, #tpu.memory_space<vmem>>, vector<64x256xf32>
    tpu.vector_store %arg13[%c0_26, %c0_27], %27 {strides = array<i32>} : memref<64x256xf32, #tpu.memory_space<vmem>>, vector<64x256xf32>,
    %c0_28 = arith.constant 0 : index
    %c0_29 = arith.constant 0 : index
    %29 = vector.load %arg6[%c0_28, %c0_29] : memref<64x256xf32, #tpu.memory_space<vmem>>, vector<64x256xf32>
    %c0_30 = arith.constant 0 : index
    %c0_31 = arith.constant 0 : index
    %30 = vector.load %arg14[%c0_30, %c0_31] : memref<8x64xf32, #tpu.memory_space<vmem>>, vector<8x64xf32>
    %c0_32 = arith.constant 0 : index
    %c0_33 = arith.constant 0 : index
    %31 = vector.load %arg15[%c0_32, %c0_33] : memref<8x64xf32, #tpu.memory_space<vmem>>, vector<8x64xf32>
    %c0_i32_34 = arith.constant 0 : i32
    %c7_i32 = arith.constant 7 : i32
    %32 = arith.subi %c7_i32, %c0_i32_34 : i32
    %c8_i32 = arith.constant 8 : i32
    %33 = arith.muli %c0_i32_34, %c8_i32 : i32
    %34 = tpu.assume_multiple %33, 8 : i32
    %c8_i32_35 = arith.constant 8 : i32
    %35 = arith.muli %32, %c8_i32_35 : i32
    %36 = tpu.assume_multiple %35, 8 : i32
    %37 = arith.index_cast %34 : i32 to index
    %c0_36 = arith.constant 0 : index
    %38 = vector.load %arg12[%37, %c0_36] : memref<64x256xf32, #tpu.memory_space<vmem>>, vector<8x256xf32>
    %39 = arith.index_cast %36 : i32 to index
    %c0_37 = arith.constant 0 : index
    %40 = vector.load %arg13[%39, %c0_37] : memref<64x256xf32, #tpu.memory_space<vmem>>, vector<8x256xf32>
    %41 = arith.addf %38, %40 : vector<8x256xf32>
    %cst_38 = arith.constant dense<0.000000e+00> : vector<8x256xf32>
    %42 = tpu.matmul %30, %29, %cst_38 {dimension_numbers = #tpu.dot_dimension_numbers<[1], [0], [0], [1], [0, 0, 1, 1], [], []>} : vector<8x64xf32>, vector<64x256xf32>, vector<8x256xf32> -> vector<8x256xf32>
    %43 = arith.addf %41, %42 : vector<8x256xf32>
    %44 = arith.negf %43 : vector<8x256xf32>
    %45 = math.exp %44 : vector<8x256xf32>
    %cst_39 = arith.constant 1.000000e+00 : f32
    %46 = vector.broadcast %cst_39 : f32 to vector<8x256xf32>
    %47 = arith.addf %46, %45 : vector<8x256xf32>
    %48 = arith.divf %46, %47 : vector<8x256xf32>
    %49 = math.tanh %43 : vector<8x256xf32>
    %50 = vector.extract_strided_slice %48 {offsets = [0, 0], sizes = [8, 64], strides = [1, 1]} : vector<8x256xf32> to vector<8x64xf32>
    %51 = vector.extract_strided_slice %48 {offsets = [0, 64], sizes = [8, 64], strides = [1, 1]} : vector<8x256xf32> to vector<8x64xf32>
    %52 = vector.extract_strided_slice %49 {offsets = [0, 128], sizes = [8, 64], strides = [1, 1]} : vector<8x256xf32> to vector<8x64xf32>
    %53 = vector.extract_strided_slice %48 {offsets = [0, 192], sizes = [8, 64], strides = [1, 1]} : vector<8x256xf32> to vector<8x64xf32>
    %54 = arith.mulf %51, %31 : vector<8x64xf32>
    %55 = arith.mulf %50, %52 : vector<8x64xf32>
    %56 = arith.addf %54, %55 : vector<8x64xf32>
    %57 = math.tanh %56 : vector<8x64xf32>
    %58 = arith.mulf %53, %57 : vector<8x64xf32>
    %59 = vector.extract_strided_slice %58 {offsets = [0, 0], sizes = [8, 32], strides = [1, 1]} : vector<8x64xf32> to vector<8x32xf32>
    %60 = arith.truncf %59 : vector<8x32xf32> to vector<8x32xbf16>
    %61 = arith.index_cast %34 : i32 to index
    %c0_40 = arith.constant 0 : index
    %62 = vector.load %arg8[%61, %c0_40] : memref<64x32xbf16, #tpu.memory_space<vmem>>, vector<8x32xbf16>
    tpu.vector_store %arg8[%61, %c0_40], %60 {strides = array<i32>} : memref<64x32xbf16, #tpu.memory_space<vmem>>, vector<8x32xbf16>,
    %63 = vector.extract_strided_slice %58 {offsets = [0, 32], sizes = [8, 32], strides = [1, 1]} : vector<8x64xf32> to vector<8x32xf32>
    %64 = arith.truncf %63 : vector<8x32xf32> to vector<8x32xbf16>
    %65 = arith.index_cast %36 : i32 to index
    %c0_41 = arith.constant 0 : index
    %66 = vector.load %arg9[%65, %c0_41] : memref<64x32xbf16, #tpu.memory_space<vmem>>, vector<8x32xbf16>
    tpu.vector_store %arg9[%65, %c0_41], %64 {strides = array<i32>} : memref<64x32xbf16, #tpu.memory_space<vmem>>, vector<8x32xbf16>,
    %c1_i32 = arith.constant 1 : i32
    %c7_i32_42 = arith.constant 7 : i32
    %67 = arith.subi %c7_i32_42, %c1_i32 : i32
    %c8_i32_43 = arith.constant 8 : i32
    %68 = arith.muli %c1_i32, %c8_i32_43 : i32
    %69 = tpu.assume_multiple %68, 8 : i32
    %c8_i32_44 = arith.constant 8 : i32
    %70 = arith.muli %67, %c8_i32_44 : i32
    %71 = tpu.assume_multiple %70, 8 : i32
    %72 = arith.index_cast %69 : i32 to index
    %c0_45 = arith.constant 0 : index
    %73 = vector.load %arg12[%72, %c0_45] : memref<64x256xf32, #tpu.memory_space<vmem>>, vector<8x256xf32>
    %74 = arith.index_cast %71 : i32 to index
    %c0_46 = arith.constant 0 : index
    %75 = vector.load %arg13[%74, %c0_46] : memref<64x256xf32, #tpu.memory_space<vmem>>, vector<8x256xf32>
    %76 = arith.addf %73, %75 : vector<8x256xf32>
    %cst_47 = arith.constant dense<0.000000e+00> : vector<8x256xf32>
    %77 = tpu.matmul %58, %29, %cst_47 {dimension_numbers = #tpu.dot_dimension_numbers<[1], [0], [0], [1], [0, 0, 1, 1], [], []>} : vector<8x64xf32>, vector<64x256xf32>, vector<8x256xf32> -> vector<8x256xf32>
    %78 = arith.addf %76, %77 : vector<8x256xf32>
    %79 = arith.negf %78 : vector<8x256xf32>
    %80 = math.exp %79 : vector<8x256xf32>
    %cst_48 = arith.constant 1.000000e+00 : f32
    %81 = vector.broadcast %cst_48 : f32 to vector<8x256xf32>
    %82 = arith.addf %81, %80 : vector<8x256xf32>
    %83 = arith.divf %81, %82 : vector<8x256xf32>
    %84 = math.tanh %78 : vector<8x256xf32>
    %85 = vector.extract_strided_slice %83 {offsets = [0, 0], sizes = [8, 64], strides = [1, 1]} : vector<8x256xf32> to vector<8x64xf32>
    %86 = vector.extract_strided_slice %83 {offsets = [0, 64], sizes = [8, 64], strides = [1, 1]} : vector<8x256xf32> to vector<8x64xf32>
    %87 = vector.extract_strided_slice %84 {offsets = [0, 128], sizes = [8, 64], strides = [1, 1]} : vector<8x256xf32> to vector<8x64xf32>
    %88 = vector.extract_strided_slice %83 {offsets = [0, 192], sizes = [8, 64], strides = [1, 1]} : vector<8x256xf32> to vector<8x64xf32>
    %89 = arith.mulf %86, %56 : vector<8x64xf32>
    %90 = arith.mulf %85, %87 : vector<8x64xf32>
    %91 = arith.addf %89, %90 : vector<8x64xf32>
    %92 = math.tanh %91 : vector<8x64xf32>
    %93 = arith.mulf %88, %92 : vector<8x64xf32>
    %94 = vector.extract_strided_slice %93 {offsets = [0, 0], sizes = [8, 32], strides = [1, 1]} : vector<8x64xf32> to vector<8x32xf32>
    %95 = arith.truncf %94 : vector<8x32xf32> to vector<8x32xbf16>
    %96 = arith.index_cast %69 : i32 to index
    %c0_49 = arith.constant 0 : index
    %97 = vector.load %arg8[%96, %c0_49] : memref<64x32xbf16, #tpu.memory_space<vmem>>, vector<8x32xbf16>
    tpu.vector_store %arg8[%96, %c0_49], %95 {strides = array<i32>} : memref<64x32xbf16, #tpu.memory_space<vmem>>, vector<8x32xbf16>,
    %98 = vector.extract_strided_slice %93 {offsets = [0, 32], sizes = [8, 32], strides = [1, 1]} : vector<8x64xf32> to vector<8x32xf32>
    %99 = arith.truncf %98 : vector<8x32xf32> to vector<8x32xbf16>
    %100 = arith.index_cast %71 : i32 to index
    %c0_50 = arith.constant 0 : index
    %101 = vector.load %arg9[%100, %c0_50] : memref<64x32xbf16, #tpu.memory_space<vmem>>, vector<8x32xbf16>
    tpu.vector_store %arg9[%100, %c0_50], %99 {strides = array<i32>} : memref<64x32xbf16, #tpu.memory_space<vmem>>, vector<8x32xbf16>,
    %c2_i32 = arith.constant 2 : i32
    %c7_i32_51 = arith.constant 7 : i32
    %102 = arith.subi %c7_i32_51, %c2_i32 : i32
    %c8_i32_52 = arith.constant 8 : i32
    %103 = arith.muli %c2_i32, %c8_i32_52 : i32
    %104 = tpu.assume_multiple %103, 8 : i32
    %c8_i32_53 = arith.constant 8 : i32
    %105 = arith.muli %102, %c8_i32_53 : i32
    %106 = tpu.assume_multiple %105, 8 : i32
    %107 = arith.index_cast %104 : i32 to index
    %c0_54 = arith.constant 0 : index
    %108 = vector.load %arg12[%107, %c0_54] : memref<64x256xf32, #tpu.memory_space<vmem>>, vector<8x256xf32>
    %109 = arith.index_cast %106 : i32 to index
    %c0_55 = arith.constant 0 : index
    %110 = vector.load %arg13[%109, %c0_55] : memref<64x256xf32, #tpu.memory_space<vmem>>, vector<8x256xf32>
    %111 = arith.addf %108, %110 : vector<8x256xf32>
    %cst_56 = arith.constant dense<0.000000e+00> : vector<8x256xf32>
    %112 = tpu.matmul %93, %29, %cst_56 {dimension_numbers = #tpu.dot_dimension_numbers<[1], [0], [0], [1], [0, 0, 1, 1], [], []>} : vector<8x64xf32>, vector<64x256xf32>, vector<8x256xf32> -> vector<8x256xf32>
    %113 = arith.addf %111, %112 : vector<8x256xf32>
    %114 = arith.negf %113 : vector<8x256xf32>
    %115 = math.exp %114 : vector<8x256xf32>
    %cst_57 = arith.constant 1.000000e+00 : f32
    %116 = vector.broadcast %cst_57 : f32 to vector<8x256xf32>
    %117 = arith.addf %116, %115 : vector<8x256xf32>
    %118 = arith.divf %116, %117 : vector<8x256xf32>
    %119 = math.tanh %113 : vector<8x256xf32>
    %120 = vector.extract_strided_slice %118 {offsets = [0, 0], sizes = [8, 64], strides = [1, 1]} : vector<8x256xf32> to vector<8x64xf32>
    %121 = vector.extract_strided_slice %118 {offsets = [0, 64], sizes = [8, 64], strides = [1, 1]} : vector<8x256xf32> to vector<8x64xf32>
    %122 = vector.extract_strided_slice %119 {offsets = [0, 128], sizes = [8, 64], strides = [1, 1]} : vector<8x256xf32> to vector<8x64xf32>
    %123 = vector.extract_strided_slice %118 {offsets = [0, 192], sizes = [8, 64], strides = [1, 1]} : vector<8x256xf32> to vector<8x64xf32>
    %124 = arith.mulf %121, %91 : vector<8x64xf32>
    %125 = arith.mulf %120, %122 : vector<8x64xf32>
    %126 = arith.addf %124, %125 : vector<8x64xf32>
    %127 = math.tanh %126 : vector<8x64xf32>
    %128 = arith.mulf %123, %127 : vector<8x64xf32>
    %129 = vector.extract_strided_slice %128 {offsets = [0, 0], sizes = [8, 32], strides = [1, 1]} : vector<8x64xf32> to vector<8x32xf32>
    %130 = arith.truncf %129 : vector<8x32xf32> to vector<8x32xbf16>
    %131 = arith.index_cast %104 : i32 to index
    %c0_58 = arith.constant 0 : index
    %132 = vector.load %arg8[%131, %c0_58] : memref<64x32xbf16, #tpu.memory_space<vmem>>, vector<8x32xbf16>
    tpu.vector_store %arg8[%131, %c0_58], %130 {strides = array<i32>} : memref<64x32xbf16, #tpu.memory_space<vmem>>, vector<8x32xbf16>,
    %133 = vector.extract_strided_slice %128 {offsets = [0, 32], sizes = [8, 32], strides = [1, 1]} : vector<8x64xf32> to vector<8x32xf32>
    %134 = arith.truncf %133 : vector<8x32xf32> to vector<8x32xbf16>
    %135 = arith.index_cast %106 : i32 to index
    %c0_59 = arith.constant 0 : index
    %136 = vector.load %arg9[%135, %c0_59] : memref<64x32xbf16, #tpu.memory_space<vmem>>, vector<8x32xbf16>
    tpu.vector_store %arg9[%135, %c0_59], %134 {strides = array<i32>} : memref<64x32xbf16, #tpu.memory_space<vmem>>, vector<8x32xbf16>,
    %c3_i32 = arith.constant 3 : i32
    %c7_i32_60 = arith.constant 7 : i32
    %137 = arith.subi %c7_i32_60, %c3_i32 : i32
    %c8_i32_61 = arith.constant 8 : i32
    %138 = arith.muli %c3_i32, %c8_i32_61 : i32
    %139 = tpu.assume_multiple %138, 8 : i32
    %c8_i32_62 = arith.constant 8 : i32
    %140 = arith.muli %137, %c8_i32_62 : i32
    %141 = tpu.assume_multiple %140, 8 : i32
    %142 = arith.index_cast %139 : i32 to index
    %c0_63 = arith.constant 0 : index
    %143 = vector.load %arg12[%142, %c0_63] : memref<64x256xf32, #tpu.memory_space<vmem>>, vector<8x256xf32>
    %144 = arith.index_cast %141 : i32 to index
    %c0_64 = arith.constant 0 : index
    %145 = vector.load %arg13[%144, %c0_64] : memref<64x256xf32, #tpu.memory_space<vmem>>, vector<8x256xf32>
    %146 = arith.addf %143, %145 : vector<8x256xf32>
    %cst_65 = arith.constant dense<0.000000e+00> : vector<8x256xf32>
    %147 = tpu.matmul %128, %29, %cst_65 {dimension_numbers = #tpu.dot_dimension_numbers<[1], [0], [0], [1], [0, 0, 1, 1], [], []>} : vector<8x64xf32>, vector<64x256xf32>, vector<8x256xf32> -> vector<8x256xf32>
    %148 = arith.addf %146, %147 : vector<8x256xf32>
    %149 = arith.negf %148 : vector<8x256xf32>
    %150 = math.exp %149 : vector<8x256xf32>
    %cst_66 = arith.constant 1.000000e+00 : f32
    %151 = vector.broadcast %cst_66 : f32 to vector<8x256xf32>
    %152 = arith.addf %151, %150 : vector<8x256xf32>
    %153 = arith.divf %151, %152 : vector<8x256xf32>
    %154 = math.tanh %148 : vector<8x256xf32>
    %155 = vector.extract_strided_slice %153 {offsets = [0, 0], sizes = [8, 64], strides = [1, 1]} : vector<8x256xf32> to vector<8x64xf32>
    %156 = vector.extract_strided_slice %153 {offsets = [0, 64], sizes = [8, 64], strides = [1, 1]} : vector<8x256xf32> to vector<8x64xf32>
    %157 = vector.extract_strided_slice %154 {offsets = [0, 128], sizes = [8, 64], strides = [1, 1]} : vector<8x256xf32> to vector<8x64xf32>
    %158 = vector.extract_strided_slice %153 {offsets = [0, 192], sizes = [8, 64], strides = [1, 1]} : vector<8x256xf32> to vector<8x64xf32>
    %159 = arith.mulf %156, %126 : vector<8x64xf32>
    %160 = arith.mulf %155, %157 : vector<8x64xf32>
    %161 = arith.addf %159, %160 : vector<8x64xf32>
    %162 = math.tanh %161 : vector<8x64xf32>
    %163 = arith.mulf %158, %162 : vector<8x64xf32>
    %164 = vector.extract_strided_slice %163 {offsets = [0, 0], sizes = [8, 32], strides = [1, 1]} : vector<8x64xf32> to vector<8x32xf32>
    %165 = arith.truncf %164 : vector<8x32xf32> to vector<8x32xbf16>
    %166 = arith.index_cast %139 : i32 to index
    %c0_67 = arith.constant 0 : index
    %167 = vector.load %arg8[%166, %c0_67] : memref<64x32xbf16, #tpu.memory_space<vmem>>, vector<8x32xbf16>
    tpu.vector_store %arg8[%166, %c0_67], %165 {strides = array<i32>} : memref<64x32xbf16, #tpu.memory_space<vmem>>, vector<8x32xbf16>,
    %168 = vector.extract_strided_slice %163 {offsets = [0, 32], sizes = [8, 32], strides = [1, 1]} : vector<8x64xf32> to vector<8x32xf32>
    %169 = arith.truncf %168 : vector<8x32xf32> to vector<8x32xbf16>
    %170 = arith.index_cast %141 : i32 to index
    %c0_68 = arith.constant 0 : index
    %171 = vector.load %arg9[%170, %c0_68] : memref<64x32xbf16, #tpu.memory_space<vmem>>, vector<8x32xbf16>
    tpu.vector_store %arg9[%170, %c0_68], %169 {strides = array<i32>} : memref<64x32xbf16, #tpu.memory_space<vmem>>, vector<8x32xbf16>,
    %c4_i32 = arith.constant 4 : i32
    %c7_i32_69 = arith.constant 7 : i32
    %172 = arith.subi %c7_i32_69, %c4_i32 : i32
    %c8_i32_70 = arith.constant 8 : i32
    %173 = arith.muli %c4_i32, %c8_i32_70 : i32
    %174 = tpu.assume_multiple %173, 8 : i32
    %c8_i32_71 = arith.constant 8 : i32
    %175 = arith.muli %172, %c8_i32_71 : i32
    %176 = tpu.assume_multiple %175, 8 : i32
    %177 = arith.index_cast %174 : i32 to index
    %c0_72 = arith.constant 0 : index
    %178 = vector.load %arg12[%177, %c0_72] : memref<64x256xf32, #tpu.memory_space<vmem>>, vector<8x256xf32>
    %179 = arith.index_cast %176 : i32 to index
    %c0_73 = arith.constant 0 : index
    %180 = vector.load %arg13[%179, %c0_73] : memref<64x256xf32, #tpu.memory_space<vmem>>, vector<8x256xf32>
    %181 = arith.addf %178, %180 : vector<8x256xf32>
    %cst_74 = arith.constant dense<0.000000e+00> : vector<8x256xf32>
    %182 = tpu.matmul %163, %29, %cst_74 {dimension_numbers = #tpu.dot_dimension_numbers<[1], [0], [0], [1], [0, 0, 1, 1], [], []>} : vector<8x64xf32>, vector<64x256xf32>, vector<8x256xf32> -> vector<8x256xf32>
    %183 = arith.addf %181, %182 : vector<8x256xf32>
    %184 = arith.negf %183 : vector<8x256xf32>
    %185 = math.exp %184 : vector<8x256xf32>
    %cst_75 = arith.constant 1.000000e+00 : f32
    %186 = vector.broadcast %cst_75 : f32 to vector<8x256xf32>
    %187 = arith.addf %186, %185 : vector<8x256xf32>
    %188 = arith.divf %186, %187 : vector<8x256xf32>
    %189 = math.tanh %183 : vector<8x256xf32>
    %190 = vector.extract_strided_slice %188 {offsets = [0, 0], sizes = [8, 64], strides = [1, 1]} : vector<8x256xf32> to vector<8x64xf32>
    %191 = vector.extract_strided_slice %188 {offsets = [0, 64], sizes = [8, 64], strides = [1, 1]} : vector<8x256xf32> to vector<8x64xf32>
    %192 = vector.extract_strided_slice %189 {offsets = [0, 128], sizes = [8, 64], strides = [1, 1]} : vector<8x256xf32> to vector<8x64xf32>
    %193 = vector.extract_strided_slice %188 {offsets = [0, 192], sizes = [8, 64], strides = [1, 1]} : vector<8x256xf32> to vector<8x64xf32>
    %194 = arith.mulf %191, %161 : vector<8x64xf32>
    %195 = arith.mulf %190, %192 : vector<8x64xf32>
    %196 = arith.addf %194, %195 : vector<8x64xf32>
    %197 = math.tanh %196 : vector<8x64xf32>
    %198 = arith.mulf %193, %197 : vector<8x64xf32>
    %199 = vector.extract_strided_slice %198 {offsets = [0, 0], sizes = [8, 32], strides = [1, 1]} : vector<8x64xf32> to vector<8x32xf32>
    %200 = arith.truncf %199 : vector<8x32xf32> to vector<8x32xbf16>
    %201 = arith.index_cast %174 : i32 to index
    %c0_76 = arith.constant 0 : index
    %202 = vector.load %arg8[%201, %c0_76] : memref<64x32xbf16, #tpu.memory_space<vmem>>, vector<8x32xbf16>
    tpu.vector_store %arg8[%201, %c0_76], %200 {strides = array<i32>} : memref<64x32xbf16, #tpu.memory_space<vmem>>, vector<8x32xbf16>,
    %203 = vector.extract_strided_slice %198 {offsets = [0, 32], sizes = [8, 32], strides = [1, 1]} : vector<8x64xf32> to vector<8x32xf32>
    %204 = arith.truncf %203 : vector<8x32xf32> to vector<8x32xbf16>
    %205 = arith.index_cast %176 : i32 to index
    %c0_77 = arith.constant 0 : index
    %206 = vector.load %arg9[%205, %c0_77] : memref<64x32xbf16, #tpu.memory_space<vmem>>, vector<8x32xbf16>
    tpu.vector_store %arg9[%205, %c0_77], %204 {strides = array<i32>} : memref<64x32xbf16, #tpu.memory_space<vmem>>, vector<8x32xbf16>,
    %c5_i32 = arith.constant 5 : i32
    %c7_i32_78 = arith.constant 7 : i32
    %207 = arith.subi %c7_i32_78, %c5_i32 : i32
    %c8_i32_79 = arith.constant 8 : i32
    %208 = arith.muli %c5_i32, %c8_i32_79 : i32
    %209 = tpu.assume_multiple %208, 8 : i32
    %c8_i32_80 = arith.constant 8 : i32
    %210 = arith.muli %207, %c8_i32_80 : i32
    %211 = tpu.assume_multiple %210, 8 : i32
    %212 = arith.index_cast %209 : i32 to index
    %c0_81 = arith.constant 0 : index
    %213 = vector.load %arg12[%212, %c0_81] : memref<64x256xf32, #tpu.memory_space<vmem>>, vector<8x256xf32>
    %214 = arith.index_cast %211 : i32 to index
    %c0_82 = arith.constant 0 : index
    %215 = vector.load %arg13[%214, %c0_82] : memref<64x256xf32, #tpu.memory_space<vmem>>, vector<8x256xf32>
    %216 = arith.addf %213, %215 : vector<8x256xf32>
    %cst_83 = arith.constant dense<0.000000e+00> : vector<8x256xf32>
    %217 = tpu.matmul %198, %29, %cst_83 {dimension_numbers = #tpu.dot_dimension_numbers<[1], [0], [0], [1], [0, 0, 1, 1], [], []>} : vector<8x64xf32>, vector<64x256xf32>, vector<8x256xf32> -> vector<8x256xf32>
    %218 = arith.addf %216, %217 : vector<8x256xf32>
    %219 = arith.negf %218 : vector<8x256xf32>
    %220 = math.exp %219 : vector<8x256xf32>
    %cst_84 = arith.constant 1.000000e+00 : f32
    %221 = vector.broadcast %cst_84 : f32 to vector<8x256xf32>
    %222 = arith.addf %221, %220 : vector<8x256xf32>
    %223 = arith.divf %221, %222 : vector<8x256xf32>
    %224 = math.tanh %218 : vector<8x256xf32>
    %225 = vector.extract_strided_slice %223 {offsets = [0, 0], sizes = [8, 64], strides = [1, 1]} : vector<8x256xf32> to vector<8x64xf32>
    %226 = vector.extract_strided_slice %223 {offsets = [0, 64], sizes = [8, 64], strides = [1, 1]} : vector<8x256xf32> to vector<8x64xf32>
    %227 = vector.extract_strided_slice %224 {offsets = [0, 128], sizes = [8, 64], strides = [1, 1]} : vector<8x256xf32> to vector<8x64xf32>
    %228 = vector.extract_strided_slice %223 {offsets = [0, 192], sizes = [8, 64], strides = [1, 1]} : vector<8x256xf32> to vector<8x64xf32>
    %229 = arith.mulf %226, %196 : vector<8x64xf32>
    %230 = arith.mulf %225, %227 : vector<8x64xf32>
    %231 = arith.addf %229, %230 : vector<8x64xf32>
    %232 = math.tanh %231 : vector<8x64xf32>
    %233 = arith.mulf %228, %232 : vector<8x64xf32>
    %234 = vector.extract_strided_slice %233 {offsets = [0, 0], sizes = [8, 32], strides = [1, 1]} : vector<8x64xf32> to vector<8x32xf32>
    %235 = arith.truncf %234 : vector<8x32xf32> to vector<8x32xbf16>
    %236 = arith.index_cast %209 : i32 to index
    %c0_85 = arith.constant 0 : index
    %237 = vector.load %arg8[%236, %c0_85] : memref<64x32xbf16, #tpu.memory_space<vmem>>, vector<8x32xbf16>
    tpu.vector_store %arg8[%236, %c0_85], %235 {strides = array<i32>} : memref<64x32xbf16, #tpu.memory_space<vmem>>, vector<8x32xbf16>,
    %238 = vector.extract_strided_slice %233 {offsets = [0, 32], sizes = [8, 32], strides = [1, 1]} : vector<8x64xf32> to vector<8x32xf32>
    %239 = arith.truncf %238 : vector<8x32xf32> to vector<8x32xbf16>
    %240 = arith.index_cast %211 : i32 to index
    %c0_86 = arith.constant 0 : index
    %241 = vector.load %arg9[%240, %c0_86] : memref<64x32xbf16, #tpu.memory_space<vmem>>, vector<8x32xbf16>
    tpu.vector_store %arg9[%240, %c0_86], %239 {strides = array<i32>} : memref<64x32xbf16, #tpu.memory_space<vmem>>, vector<8x32xbf16>,
    %c6_i32 = arith.constant 6 : i32
    %c7_i32_87 = arith.constant 7 : i32
    %242 = arith.subi %c7_i32_87, %c6_i32 : i32
    %c8_i32_88 = arith.constant 8 : i32
    %243 = arith.muli %c6_i32, %c8_i32_88 : i32
    %244 = tpu.assume_multiple %243, 8 : i32
    %c8_i32_89 = arith.constant 8 : i32
    %245 = arith.muli %242, %c8_i32_89 : i32
    %246 = tpu.assume_multiple %245, 8 : i32
    %247 = arith.index_cast %244 : i32 to index
    %c0_90 = arith.constant 0 : index
    %248 = vector.load %arg12[%247, %c0_90] : memref<64x256xf32, #tpu.memory_space<vmem>>, vector<8x256xf32>
    %249 = arith.index_cast %246 : i32 to index
    %c0_91 = arith.constant 0 : index
    %250 = vector.load %arg13[%249, %c0_91] : memref<64x256xf32, #tpu.memory_space<vmem>>, vector<8x256xf32>
    %251 = arith.addf %248, %250 : vector<8x256xf32>
    %cst_92 = arith.constant dense<0.000000e+00> : vector<8x256xf32>
    %252 = tpu.matmul %233, %29, %cst_92 {dimension_numbers = #tpu.dot_dimension_numbers<[1], [0], [0], [1], [0, 0, 1, 1], [], []>} : vector<8x64xf32>, vector<64x256xf32>, vector<8x256xf32> -> vector<8x256xf32>
    %253 = arith.addf %251, %252 : vector<8x256xf32>
    %254 = arith.negf %253 : vector<8x256xf32>
    %255 = math.exp %254 : vector<8x256xf32>
    %cst_93 = arith.constant 1.000000e+00 : f32
    %256 = vector.broadcast %cst_93 : f32 to vector<8x256xf32>
    %257 = arith.addf %256, %255 : vector<8x256xf32>
    %258 = arith.divf %256, %257 : vector<8x256xf32>
    %259 = math.tanh %253 : vector<8x256xf32>
    %260 = vector.extract_strided_slice %258 {offsets = [0, 0], sizes = [8, 64], strides = [1, 1]} : vector<8x256xf32> to vector<8x64xf32>
    %261 = vector.extract_strided_slice %258 {offsets = [0, 64], sizes = [8, 64], strides = [1, 1]} : vector<8x256xf32> to vector<8x64xf32>
    %262 = vector.extract_strided_slice %259 {offsets = [0, 128], sizes = [8, 64], strides = [1, 1]} : vector<8x256xf32> to vector<8x64xf32>
    %263 = vector.extract_strided_slice %258 {offsets = [0, 192], sizes = [8, 64], strides = [1, 1]} : vector<8x256xf32> to vector<8x64xf32>
    %264 = arith.mulf %261, %231 : vector<8x64xf32>
    %265 = arith.mulf %260, %262 : vector<8x64xf32>
    %266 = arith.addf %264, %265 : vector<8x64xf32>
    %267 = math.tanh %266 : vector<8x64xf32>
    %268 = arith.mulf %263, %267 : vector<8x64xf32>
    %269 = vector.extract_strided_slice %268 {offsets = [0, 0], sizes = [8, 32], strides = [1, 1]} : vector<8x64xf32> to vector<8x32xf32>
    %270 = arith.truncf %269 : vector<8x32xf32> to vector<8x32xbf16>
    %271 = arith.index_cast %244 : i32 to index
    %c0_94 = arith.constant 0 : index
    %272 = vector.load %arg8[%271, %c0_94] : memref<64x32xbf16, #tpu.memory_space<vmem>>, vector<8x32xbf16>
    tpu.vector_store %arg8[%271, %c0_94], %270 {strides = array<i32>} : memref<64x32xbf16, #tpu.memory_space<vmem>>, vector<8x32xbf16>,
    %273 = vector.extract_strided_slice %268 {offsets = [0, 32], sizes = [8, 32], strides = [1, 1]} : vector<8x64xf32> to vector<8x32xf32>
    %274 = arith.truncf %273 : vector<8x32xf32> to vector<8x32xbf16>
    %275 = arith.index_cast %246 : i32 to index
    %c0_95 = arith.constant 0 : index
    %276 = vector.load %arg9[%275, %c0_95] : memref<64x32xbf16, #tpu.memory_space<vmem>>, vector<8x32xbf16>
    tpu.vector_store %arg9[%275, %c0_95], %274 {strides = array<i32>} : memref<64x32xbf16, #tpu.memory_space<vmem>>, vector<8x32xbf16>,
    %c7_i32_96 = arith.constant 7 : i32
    %c7_i32_97 = arith.constant 7 : i32
    %277 = arith.subi %c7_i32_97, %c7_i32_96 : i32
    %c8_i32_98 = arith.constant 8 : i32
    %278 = arith.muli %c7_i32_96, %c8_i32_98 : i32
    %279 = tpu.assume_multiple %278, 8 : i32
    %c8_i32_99 = arith.constant 8 : i32
    %280 = arith.muli %277, %c8_i32_99 : i32
    %281 = tpu.assume_multiple %280, 8 : i32
    %282 = arith.index_cast %279 : i32 to index
    %c0_100 = arith.constant 0 : index
    %283 = vector.load %arg12[%282, %c0_100] : memref<64x256xf32, #tpu.memory_space<vmem>>, vector<8x256xf32>
    %284 = arith.index_cast %281 : i32 to index
    %c0_101 = arith.constant 0 : index
    %285 = vector.load %arg13[%284, %c0_101] : memref<64x256xf32, #tpu.memory_space<vmem>>, vector<8x256xf32>
    %286 = arith.addf %283, %285 : vector<8x256xf32>
    %cst_102 = arith.constant dense<0.000000e+00> : vector<8x256xf32>
    %287 = tpu.matmul %268, %29, %cst_102 {dimension_numbers = #tpu.dot_dimension_numbers<[1], [0], [0], [1], [0, 0, 1, 1], [], []>} : vector<8x64xf32>, vector<64x256xf32>, vector<8x256xf32> -> vector<8x256xf32>
    %288 = arith.addf %286, %287 : vector<8x256xf32>
    %289 = arith.negf %288 : vector<8x256xf32>
    %290 = math.exp %289 : vector<8x256xf32>
    %cst_103 = arith.constant 1.000000e+00 : f32
    %291 = vector.broadcast %cst_103 : f32 to vector<8x256xf32>
    %292 = arith.addf %291, %290 : vector<8x256xf32>
    %293 = arith.divf %291, %292 : vector<8x256xf32>
    %294 = math.tanh %288 : vector<8x256xf32>
    %295 = vector.extract_strided_slice %293 {offsets = [0, 0], sizes = [8, 64], strides = [1, 1]} : vector<8x256xf32> to vector<8x64xf32>
    %296 = vector.extract_strided_slice %293 {offsets = [0, 64], sizes = [8, 64], strides = [1, 1]} : vector<8x256xf32> to vector<8x64xf32>
    %297 = vector.extract_strided_slice %294 {offsets = [0, 128], sizes = [8, 64], strides = [1, 1]} : vector<8x256xf32> to vector<8x64xf32>
    %298 = vector.extract_strided_slice %293 {offsets = [0, 192], sizes = [8, 64], strides = [1, 1]} : vector<8x256xf32> to vector<8x64xf32>
    %299 = arith.mulf %296, %266 : vector<8x64xf32>
    %300 = arith.mulf %295, %297 : vector<8x64xf32>
    %301 = arith.addf %299, %300 : vector<8x64xf32>
    %302 = math.tanh %301 : vector<8x64xf32>
    %303 = arith.mulf %298, %302 : vector<8x64xf32>
    %304 = vector.extract_strided_slice %303 {offsets = [0, 0], sizes = [8, 32], strides = [1, 1]} : vector<8x64xf32> to vector<8x32xf32>
    %305 = arith.truncf %304 : vector<8x32xf32> to vector<8x32xbf16>
    %306 = arith.index_cast %279 : i32 to index
    %c0_104 = arith.constant 0 : index
    %307 = vector.load %arg8[%306, %c0_104] : memref<64x32xbf16, #tpu.memory_space<vmem>>, vector<8x32xbf16>
    tpu.vector_store %arg8[%306, %c0_104], %305 {strides = array<i32>} : memref<64x32xbf16, #tpu.memory_space<vmem>>, vector<8x32xbf16>,
    %308 = vector.extract_strided_slice %303 {offsets = [0, 32], sizes = [8, 32], strides = [1, 1]} : vector<8x64xf32> to vector<8x32xf32>
    %309 = arith.truncf %308 : vector<8x32xf32> to vector<8x32xbf16>
    %310 = arith.index_cast %281 : i32 to index
    %c0_105 = arith.constant 0 : index
    %311 = vector.load %arg9[%310, %c0_105] : memref<64x32xbf16, #tpu.memory_space<vmem>>, vector<8x32xbf16>
    tpu.vector_store %arg9[%310, %c0_105], %309 {strides = array<i32>} : memref<64x32xbf16, #tpu.memory_space<vmem>>, vector<8x32xbf16>,
    %c8_i32_106 = arith.constant 8 : i32
    %c0_107 = arith.constant 0 : index
    %c0_108 = arith.constant 0 : index
    %312 = vector.load %arg14[%c0_107, %c0_108] : memref<8x64xf32, #tpu.memory_space<vmem>>, vector<8x64xf32>
    tpu.vector_store %arg14[%c0_107, %c0_108], %303 {strides = array<i32>} : memref<8x64xf32, #tpu.memory_space<vmem>>, vector<8x64xf32>,
    %c0_109 = arith.constant 0 : index
    %c0_110 = arith.constant 0 : index
    %313 = vector.load %arg15[%c0_109, %c0_110] : memref<8x64xf32, #tpu.memory_space<vmem>>, vector<8x64xf32>
    tpu.vector_store %arg15[%c0_109, %c0_110], %301 {strides = array<i32>} : memref<8x64xf32, #tpu.memory_space<vmem>>, vector<8x64xf32>,
    %c0_i32_111 = arith.constant 0 : i32
    %314 = arith.cmpi eq, %arg0, %c0_i32_111 : i32
    %315 = arith.extui %314 : i1 to i32
    %c0_i32_112 = arith.constant 0 : i32
    %316 = arith.cmpi ne, %315, %c0_i32_112 : i32
    scf.if %316 {
      %317 = vector.extract_strided_slice %303 {offsets = [0, 0], sizes = [8, 32], strides = [1, 1]} : vector<8x64xf32> to vector<8x32xf32>
      %c0_113 = arith.constant 0 : index
      %c0_114 = arith.constant 0 : index
      %c0_115 = arith.constant 0 : index
      %318 = vector.load %arg10[%c0_113, %c0_114, %c0_115] : memref<2x8x32xf32, #tpu.memory_space<vmem>>, vector<1x8x32xf32>
      %319 = vector.shape_cast %318 : vector<1x8x32xf32> to vector<8x32xf32>
      %320 = vector.shape_cast %317 : vector<8x32xf32> to vector<1x8x32xf32>
      tpu.vector_store %arg10[%c0_113, %c0_114, %c0_115], %320 {strides = array<i32>} : memref<2x8x32xf32, #tpu.memory_space<vmem>>, vector<1x8x32xf32>,
      %321 = vector.extract_strided_slice %303 {offsets = [0, 32], sizes = [8, 32], strides = [1, 1]} : vector<8x64xf32> to vector<8x32xf32>
      %c1_116 = arith.constant 1 : index
      %c0_117 = arith.constant 0 : index
      %c0_118 = arith.constant 0 : index
      %322 = vector.load %arg10[%c1_116, %c0_117, %c0_118] : memref<2x8x32xf32, #tpu.memory_space<vmem>>, vector<1x8x32xf32>
      %323 = vector.shape_cast %322 : vector<1x8x32xf32> to vector<8x32xf32>
      %324 = vector.shape_cast %321 : vector<8x32xf32> to vector<1x8x32xf32>
      tpu.vector_store %arg10[%c1_116, %c0_117, %c0_118], %324 {strides = array<i32>} : memref<2x8x32xf32, #tpu.memory_space<vmem>>, vector<1x8x32xf32>,
      %325 = vector.extract_strided_slice %301 {offsets = [0, 0], sizes = [8, 32], strides = [1, 1]} : vector<8x64xf32> to vector<8x32xf32>
      %c0_119 = arith.constant 0 : index
      %c0_120 = arith.constant 0 : index
      %c0_121 = arith.constant 0 : index
      %326 = vector.load %arg11[%c0_119, %c0_120, %c0_121] : memref<2x8x32xf32, #tpu.memory_space<vmem>>, vector<1x8x32xf32>
      %327 = vector.shape_cast %326 : vector<1x8x32xf32> to vector<8x32xf32>
      %328 = vector.shape_cast %325 : vector<8x32xf32> to vector<1x8x32xf32>
      tpu.vector_store %arg11[%c0_119, %c0_120, %c0_121], %328 {strides = array<i32>} : memref<2x8x32xf32, #tpu.memory_space<vmem>>, vector<1x8x32xf32>,
      %329 = vector.extract_strided_slice %301 {offsets = [0, 32], sizes = [8, 32], strides = [1, 1]} : vector<8x64xf32> to vector<8x32xf32>
      %c1_122 = arith.constant 1 : index
      %c0_123 = arith.constant 0 : index
      %c0_124 = arith.constant 0 : index
      %330 = vector.load %arg11[%c1_122, %c0_123, %c0_124] : memref<2x8x32xf32, #tpu.memory_space<vmem>>, vector<1x8x32xf32>
      %331 = vector.shape_cast %330 : vector<1x8x32xf32> to vector<8x32xf32>
      %332 = vector.shape_cast %329 : vector<8x32xf32> to vector<1x8x32xf32>
      tpu.vector_store %arg11[%c1_122, %c0_123, %c0_124], %332 {strides = array<i32>} : memref<2x8x32xf32, #tpu.memory_space<vmem>>, vector<1x8x32xf32>,
    } else {
    }
    return
  }
  func.func @transform_0(%arg0: i32) -> (i32, i32) {
    %c0_i32 = arith.constant 0 : i32
    %c0_i32_0 = arith.constant 0 : i32
    return %arg0, %c0_i32 : i32, i32
  }
  func.func @transform_1(%arg0: i32) -> (i32, i32) {
    %c0_i32 = arith.constant 0 : i32
    %0 = arith.subi %c0_i32, %arg0 : i32
    %c0_i32_0 = arith.constant 0 : i32
    %c0_i32_1 = arith.constant 0 : i32
    return %0, %c0_i32_0 : i32, i32
  }
  func.func @transform_2(%arg0: i32) -> (i32, i32) {
    %c0_i32 = arith.constant 0 : i32
    %c0_i32_0 = arith.constant 0 : i32
    return %arg0, %c0_i32 : i32, i32
  }
  func.func @transform_3(%arg0: i32) -> (i32, i32) {
    %c0_i32 = arith.constant 0 : i32
    %0 = arith.subi %c0_i32, %arg0 : i32
    %c0_i32_0 = arith.constant 0 : i32
    %c0_i32_1 = arith.constant 0 : i32
    return %0, %c0_i32_0 : i32, i32
  }
  func.func @transform_4(%arg0: i32) -> (i32, i32, i32) {
    %c0_i32 = arith.constant 0 : i32
    %c0_i32_0 = arith.constant 0 : i32
    %c0_i32_1 = arith.constant 0 : i32
    %c0_i32_2 = arith.constant 0 : i32
    return %c0_i32, %c0_i32_0, %c0_i32_1 : i32, i32, i32
  }
  func.func @transform_5(%arg0: i32) -> (i32, i32) {
    %c0_i32 = arith.constant 0 : i32
    %c0_i32_0 = arith.constant 0 : i32
    %c0_i32_1 = arith.constant 0 : i32
    return %c0_i32, %c0_i32_0 : i32, i32
  }
  func.func @transform_6(%arg0: i32) -> (i32, i32) {
    %c0_i32 = arith.constant 0 : i32
    %c0_i32_0 = arith.constant 0 : i32
    %c0_i32_1 = arith.constant 0 : i32
    return %c0_i32, %c0_i32_0 : i32, i32
  }
  func.func @transform_7(%arg0: i32) -> (i32, i32) {
    %c0_i32 = arith.constant 0 : i32
    %c0_i32_0 = arith.constant 0 : i32
    return %arg0, %c0_i32 : i32, i32
  }
  func.func @transform_8(%arg0: i32) -> (i32, i32) {
    %c0_i32 = arith.constant 0 : i32
    %0 = arith.subi %c0_i32, %arg0 : i32
    %c0_i32_0 = arith.constant 0 : i32
    %c0_i32_1 = arith.constant 0 : i32
    return %0, %c0_i32_0 : i32, i32
  }
  func.func @transform_9(%arg0: i32) -> (i32, i32, i32) {
    %c0_i32 = arith.constant 0 : i32
    %c0_i32_0 = arith.constant 0 : i32
    %c0_i32_1 = arith.constant 0 : i32
    %c0_i32_2 = arith.constant 0 : i32
    return %c0_i32, %c0_i32_0, %c0_i32_1 : i32, i32, i32
  }
  func.func @transform_10(%arg0: i32) -> (i32, i32, i32) {
    %c0_i32 = arith.constant 0 : i32
    %c0_i32_0 = arith.constant 0 : i32
    %c0_i32_1 = arith.constant 0 : i32
    %c0_i32_2 = arith.constant 0 : i32
    return %c0_i32, %c0_i32_0, %c0_i32_1 : i32, i32, i32
  }
}

</mosaic_0001>

<llo_original>
// kernel: lstm_sec_crf_forward.5
$region0: #{lstm_sec_crf_forward.5}
  #allocation0 [shape = 'u32[]', space=smem, size = 0x4, offset = 0x4, fixed_abs, tag = 'smem constant byte address 0x4 - core index']
  #allocation1 [shape = 'u32[144,128]{1,0:T(1,128)}', space=vmem, size = 0x12000, scoped, tag = 'internal scratch']
  %s0 = inlined_call_operand.vmem [shape: bf16[64,32], index: 0, kind: input, shape index: {}]
  %s1 = inlined_call_operand.vmem [shape: bf16[64,32], index: 1, kind: input, shape index: {}]
  %s2 = inlined_call_operand.vmem [shape: bf16[2,32,8], index: 2, kind: input, shape index: {}]
  %s3 = inlined_call_operand.vmem [shape: f32[8,128], index: 3, kind: input, shape index: {}]
  %s4 = inlined_call_operand.vmem [shape: f32[1,128], index: 4, kind: input, shape index: {}]
  %s5 = inlined_call_operand.vmem [shape: f32[64,128], index: 5, kind: output, shape index: {}]
  %s6 = sld [smem:[#allocation0]]
  $region30: #{lstm_sec_crf_forward.5} parent=0
    _
  %s8 = ssub.s32 1, %s6
  %s9 = scalar_select 0, %s8, %s6
  // Predicated region
  $region2: #{lstm_sec_crf_forward.5} parent=0 // pred_check
    _
  $region3: #{lstm_sec_crf_forward.5} parent=0 // pred_check_branch
    %11 = sbr.rel (0) target = $region5
  $region4: #{lstm_sec_crf_forward.5} parent=0 // pred_region
    _
  $region5: #{lstm_sec_crf_forward.5} parent=0 // pred_fallthru
    _
  // Predicated region
  $region6: #{lstm_sec_crf_forward.5} parent=0 // pred_check
    _
  $region7: #{lstm_sec_crf_forward.5} parent=0 // pred_check_branch
    %13 = sbr.rel (0) target = $region9
  $region8: #{lstm_sec_crf_forward.5} parent=0 // pred_region
    _
  $region9: #{lstm_sec_crf_forward.5} parent=0 // pred_fallthru
    _
  // Predicated region
  $region10: #{lstm_sec_crf_forward.5} parent=0 // pred_check
    _
  $region11: #{lstm_sec_crf_forward.5} parent=0 // pred_check_branch
    %15 = sbr.rel (0) target = $region13
  $region12: #{lstm_sec_crf_forward.5} parent=0 // pred_region
    _
  $region13: #{lstm_sec_crf_forward.5} parent=0 // pred_fallthru
    _
  // Predicated region
  $region14: #{lstm_sec_crf_forward.5} parent=0 // pred_check
    _
  $region15: #{lstm_sec_crf_forward.5} parent=0 // pred_check_branch
    %17 = sbr.rel (0) target = $region17
  $region16: #{lstm_sec_crf_forward.5} parent=0 // pred_region
    _
  $region17: #{lstm_sec_crf_forward.5} parent=0 // pred_fallthru
    _
  // Predicated region
  $region18: #{lstm_sec_crf_forward.5} parent=0 // pred_check
    _
  $region19: #{lstm_sec_crf_forward.5} parent=0 // pred_check_branch
    %19 = sbr.rel (0) target = $region21
  $region20: #{lstm_sec_crf_forward.5} parent=0 // pred_region
    _
  $region21: #{lstm_sec_crf_forward.5} parent=0 // pred_fallthru
    _
  %v21 = vld [vmem:[%s0] sm:$0xf]
  %v22 = vld [vmem:[%s0 + $0x4] sm:$0xf]
  %v23 = vld [vmem:[%s0 + $0x8] sm:$0xf]
  %v24 = vld [vmem:[%s0 + $0xc] sm:$0xf]
  %v25 = vld [vmem:[%s0 + $0x10] sm:$0xf]
  %v26 = vld [vmem:[%s0 + $0x14] sm:$0xf]
  %v27 = vld [vmem:[%s0 + $0x18] sm:$0xf]
  %v28 = vld [vmem:[%s0 + $0x1c] sm:$0xf]
  %v29 = vld [vmem:[%s2] sm:$0xf]
  %v30 = vld [vmem:[%s2 + $0x4] sm:$0xf]
  %v31 = vld [vmem:[%s2 + $0x8] sm:$0xf]
  %v32 = vld [vmem:[%s2 + $0xc] sm:$0xf]
  %v33 = vld [vmem:[%s1] sm:$0xf]
  %v34 = vld [vmem:[%s1 + $0x4] sm:$0xf]
  %v35 = vld [vmem:[%s1 + $0x8] sm:$0xf]
  %v36 = vld [vmem:[%s1 + $0xc] sm:$0xf]
  %v37 = vld [vmem:[%s1 + $0x10] sm:$0xf]
  %v38 = vld [vmem:[%s1 + $0x14] sm:$0xf]
  %v39 = vld [vmem:[%s1 + $0x18] sm:$0xf]
  %v40 = vld [vmem:[%s1 + $0x1c] sm:$0xf]
  %s41 = scalar_lea.vmem %s2, 16
  %v42 = vld [vmem:[%s41] sm:$0xf]
  %v43 = vld [vmem:[%s41 + $0x4] sm:$0xf]
  %v44 = vld [vmem:[%s41 + $0x8] sm:$0xf]
  %v45 = vld [vmem:[%s41 + $0xc] sm:$0xf]
  %v54 = vunpack.c.l.b16 %v33
  %v55 = vunpack.c.l.b16 %v34
  %v56 = vunpack.c.l.b16 %v35
  %v57 = vunpack.c.l.b16 %v36
  %v58 = vunpack.c.l.b16 %v37
  %v59 = vunpack.c.l.b16 %v38
  %v60 = vunpack.c.l.b16 %v39
  %v61 = vunpack.c.l.b16 %v40
  %v62 = vpack.c.b16 %v55, %v54
  %v63 = vpack.c.b16 %v57, %v56
  %v64 = vpack.c.b16 %v59, %v58
  %v65 = vpack.c.b16 %v61, %v60
  %v70 = vunpack.c.l.b16 %v42
  %v71 = vunpack.c.l.b16 %v43
  %v72 = vunpack.c.l.b16 %v44
  %v73 = vunpack.c.l.b16 %v45
  %v74 = vpack.c.b16 %v71, %v70
  %v75 = vpack.c.b16 %v73, %v72
  %vm78 = vcmask 261120
  %v80 = vsel %vm78, %v62, 0
  %v83 = vsel %vm78, %v63, 0
  %v86 = vsel %vm78, %v64, 0
  %v89 = vsel %vm78, %v65, 0
  %91 = vmatprep.subr.bf16.mxu0 0
  %92 = vmatpush1.bf16.msra.mxu0 %v74
  %93 = vmatprep.subr.bf16.mxu0 0
  %94 = vmatpush1.bf16.msra.mxu0 %v75
  %95 = vmatprep.subr.bf16.mxu0 0
  %96 = vmatpush1.bf16.msra.mxu0 0
  %97 = vmatprep.subr.bf16.mxu0 0
  %98 = vmatpush1.bf16.msra.mxu0 0
  %99 = vmatprep.subr.bf16.mxu0 0
  %100 = vmatpush1.bf16.msra.mxu0 0
  %101 = vmatprep.subr.bf16.mxu0 0
  %102 = vmatpush1.bf16.msra.mxu0 0
  %103 = vmatprep.subr.bf16.mxu0 0
  %104 = vmatpush1.bf16.msra.mxu0 0
  %105 = vmatprep.subr.bf16.mxu0 0
  %106 = vmatpush1.bf16.msra.mxu0 0
  %107 = vmatprep.subr.bf16.mxu0 0
  %108 = vmatpush1.bf16.msra.mxu0 0
  %109 = vmatprep.subr.bf16.mxu0 0
  %110 = vmatpush1.bf16.msra.mxu0 0
  %111 = vmatprep.subr.bf16.mxu0 0
  %112 = vmatpush1.bf16.msra.mxu0 0
  %113 = vmatprep.subr.bf16.mxu0 0
  %114 = vmatpush1.bf16.msra.mxu0 0
  %115 = vmatprep.subr.bf16.mxu0 0
  %116 = vmatpush1.bf16.msra.mxu0 0
  %117 = vmatprep.subr.bf16.mxu0 0
  %118 = vmatpush1.bf16.msra.mxu0 0
  %119 = vmatprep.subr.bf16.mxu0 0
  %120 = vmatpush1.bf16.msra.mxu0 0
  %121 = vmatprep.subr.bf16.mxu0 0
  %122 = vmatpush1.bf16.msra.mxu0 0
  %123 = vmatprep.mubr.bf16.mxu0 0
  %124 = vmatmul.mubr.bf16.gmra.mrb[0].mxu0 %v80
  %v125 = vpop.f32.mrb[0].mxu0
  %v126 = vadd.f32 0.0, %v125
  %v127 = vpop.f32.mrb[0].mxu0
  %v128 = vpop.f32.mrb[0].mxu0
  %v129 = vadd.f32 0.0, %v128
  %v130 = vpop.f32.mrb[0].mxu0
  %131 = vmatprep.mubr.bf16.mxu0 0
  %132 = vmatmul.mubr.bf16.gmra.mrb[0].mxu0 %v83
  %v133 = vpop.f32.mrb[0].mxu0
  %v134 = vadd.f32 0.0, %v133
  %v135 = vpop.f32.mrb[0].mxu0
  %v136 = vpop.f32.mrb[0].mxu0
  %v137 = vadd.f32 0.0, %v136
  %v138 = vpop.f32.mrb[0].mxu0
  %139 = vmatprep.mubr.bf16.mxu0 0
  %140 = vmatmul.mubr.bf16.gmra.mrb[0].mxu0 %v86
  %v141 = vpop.f32.mrb[0].mxu0
  %v142 = vadd.f32 0.0, %v141
  %v143 = vpop.f32.mrb[0].mxu0
  %v144 = vpop.f32.mrb[0].mxu0
  %v145 = vadd.f32 0.0, %v144
  %v146 = vpop.f32.mrb[0].mxu0
  %147 = vmatprep.mubr.bf16.mxu0 0
  %148 = vmatmul.mubr.bf16.gmra.mrb[0].mxu0 %v89
  %v149 = vpop.f32.mrb[0].mxu0
  %v150 = vadd.f32 0.0, %v149
  %v151 = vpop.f32.mrb[0].mxu0
  %v152 = vpop.f32.mrb[0].mxu0
  %v153 = vadd.f32 0.0, %v152
  %v154 = vpop.f32.mrb[0].mxu0
  %155 = vdwg.mxu0
  %v164 = vunpack.c.l.b16 %v21
  %v165 = vunpack.c.l.b16 %v22
  %v166 = vunpack.c.l.b16 %v23
  %v167 = vunpack.c.l.b16 %v24
  %v168 = vunpack.c.l.b16 %v25
  %v169 = vunpack.c.l.b16 %v26
  %v170 = vunpack.c.l.b16 %v27
  %v171 = vunpack.c.l.b16 %v28
  %v172 = vpack.c.b16 %v165, %v164
  %v173 = vpack.c.b16 %v167, %v166
  %v174 = vpack.c.b16 %v169, %v168
  %v175 = vpack.c.b16 %v171, %v170
  %v180 = vunpack.c.l.b16 %v29
  %v181 = vunpack.c.l.b16 %v30
  %v182 = vunpack.c.l.b16 %v31
  %v183 = vunpack.c.l.b16 %v32
  %v184 = vpack.c.b16 %v181, %v180
  %v185 = vpack.c.b16 %v183, %v182
  %v189 = vsel %vm78, %v172, 0
  %v192 = vsel %vm78, %v173, 0
  %v195 = vsel %vm78, %v174, 0
  %v198 = vsel %vm78, %v175, 0
  %200 = vmatprep.subr.bf16.mxu0 0
  %201 = vmatpush1.bf16.msra.mxu0 %v184
  %202 = vmatprep.subr.bf16.mxu0 0
  %203 = vmatpush1.bf16.msra.mxu0 %v185
  %204 = vmatprep.subr.bf16.mxu0 0
  %205 = vmatpush1.bf16.msra.mxu0 0
  %206 = vmatprep.subr.bf16.mxu0 0
  %207 = vmatpush1.bf16.msra.mxu0 0
  %208 = vmatprep.subr.bf16.mxu0 0
  %209 = vmatpush1.bf16.msra.mxu0 0
  %210 = vmatprep.subr.bf16.mxu0 0
  %211 = vmatpush1.bf16.msra.mxu0 0
  %212 = vmatprep.subr.bf16.mxu0 0
  %213 = vmatpush1.bf16.msra.mxu0 0
  %214 = vmatprep.subr.bf16.mxu0 0
  %215 = vmatpush1.bf16.msra.mxu0 0
  %216 = vmatprep.subr.bf16.mxu0 0
  %217 = vmatpush1.bf16.msra.mxu0 0
  %218 = vmatprep.subr.bf16.mxu0 0
  %219 = vmatpush1.bf16.msra.mxu0 0
  %220 = vmatprep.subr.bf16.mxu0 0
  %221 = vmatpush1.bf16.msra.mxu0 0
  %222 = vmatprep.subr.bf16.mxu0 0
  %223 = vmatpush1.bf16.msra.mxu0 0
  %224 = vmatprep.subr.bf16.mxu0 0
  %225 = vmatpush1.bf16.msra.mxu0 0
  %226 = vmatprep.subr.bf16.mxu0 0
  %227 = vmatpush1.bf16.msra.mxu0 0
  %228 = vmatprep.subr.bf16.mxu0 0
  %229 = vmatpush1.bf16.msra.mxu0 0
  %230 = vmatprep.subr.bf16.mxu0 0
  %231 = vmatpush1.bf16.msra.mxu0 0
  %232 = vmatprep.mubr.bf16.mxu0 0
  %233 = vmatmul.mubr.bf16.gmra.mrb[0].mxu0 %v189
  %v234 = vpop.f32.mrb[0].mxu0
  %v235 = vadd.f32 %v126, %v234
  %v236 = vpop.f32.mrb[0].mxu0
  %v237 = vpop.f32.mrb[0].mxu0
  %v238 = vadd.f32 %v129, %v237
  %v239 = vpop.f32.mrb[0].mxu0
  %240 = vmatprep.mubr.bf16.mxu0 0
  %241 = vmatmul.mubr.bf16.gmra.mrb[0].mxu0 %v192
  %v242 = vpop.f32.mrb[0].mxu0
  %v243 = vadd.f32 %v134, %v242
  %v244 = vpop.f32.mrb[0].mxu0
  %v245 = vpop.f32.mrb[0].mxu0
  %v246 = vadd.f32 %v137, %v245
  %v247 = vpop.f32.mrb[0].mxu0
  %248 = vmatprep.mubr.bf16.mxu0 0
  %249 = vmatmul.mubr.bf16.gmra.mrb[0].mxu0 %v195
  %v250 = vpop.f32.mrb[0].mxu0
  %v251 = vadd.f32 %v142, %v250
  %v252 = vpop.f32.mrb[0].mxu0
  %v253 = vpop.f32.mrb[0].mxu0
  %v254 = vadd.f32 %v145, %v253
  %v255 = vpop.f32.mrb[0].mxu0
  %256 = vmatprep.mubr.bf16.mxu0 0
  %257 = vmatmul.mubr.bf16.gmra.mrb[0].mxu0 %v198
  %v258 = vpop.f32.mrb[0].mxu0
  %v259 = vadd.f32 %v150, %v258
  %v260 = vpop.f32.mrb[0].mxu0
  %v261 = vpop.f32.mrb[0].mxu0
  %v262 = vadd.f32 %v153, %v261
  %v263 = vpop.f32.mrb[0].mxu0
  %264 = vdwg.mxu0
  %v265 = vld [vmem:[%s3] sm:$0xff]
  %v266 = vld [vmem:[%s4] sm:$0x1]
  %v268 = vlaneseq
  %v269 = vshrl.u32 %v268, 7
  %v270 = vsub.s32 0, %v269
  %v271 = vrot.slane %v266, %v270
  %vm273 = vcmask 64512
  %v275 = vsel %vm273, %v235, 0
  %v278 = vsel %vm273, %v238, 0
  %v281 = vsel %vm273, %v243, 0
  %v284 = vsel %vm273, %v246, 0
  %v287 = vsel %vm273, %v251, 0
  %v290 = vsel %vm273, %v254, 0
  %v293 = vsel %vm273, %v259, 0
  %v296 = vsel %vm273, %v262, 0
  %298 = vmatprep.subr.mxu0 0.0
  %299 = vmatpush1.msra.mxu0 %v265
  %300 = vmatprep.subr.mxu0 0.0
  %301 = vmatpush1.msra.mxu0 0.0
  %302 = vmatprep.subr.mxu0 0.0
  %303 = vmatpush1.msra.mxu0 0.0
  %304 = vmatprep.subr.mxu0 0.0
  %305 = vmatpush1.msra.mxu0 0.0
  %306 = vmatprep.subr.mxu0 0.0
  %307 = vmatpush1.msra.mxu0 0.0
  %308 = vmatprep.subr.mxu0 0.0
  %309 = vmatpush1.msra.mxu0 0.0
  %310 = vmatprep.subr.mxu0 0.0
  %311 = vmatpush1.msra.mxu0 0.0
  %312 = vmatprep.subr.mxu0 0.0
  %313 = vmatpush1.msra.mxu0 0.0
  %314 = vmatprep.subr.mxu0 0.0
  %315 = vmatpush1.msra.mxu0 0.0
  %316 = vmatprep.subr.mxu0 0.0
  %317 = vmatpush1.msra.mxu0 0.0
  %318 = vmatprep.subr.mxu0 0.0
  %319 = vmatpush1.msra.mxu0 0.0
  %320 = vmatprep.subr.mxu0 0.0
  %321 = vmatpush1.msra.mxu0 0.0
  %322 = vmatprep.subr.mxu0 0.0
  %323 = vmatpush1.msra.mxu0 0.0
  %324 = vmatprep.subr.mxu0 0.0
  %325 = vmatpush1.msra.mxu0 0.0
  %326 = vmatprep.subr.mxu0 0.0
  %327 = vmatpush1.msra.mxu0 0.0
  %328 = vmatprep.subr.mxu0 0.0
  %329 = vmatpush1.msra.mxu0 0.0
  %330 = vmatprep.subr.mxu0 0.0
  %331 = vmatpush1.msra.mxu0 0.0
  %332 = vmatprep.subr.mxu0 0.0
  %333 = vmatpush1.msra.mxu0 0.0
  %334 = vmatprep.subr.mxu0 0.0
  %335 = vmatpush1.msra.mxu0 0.0
  %336 = vmatprep.subr.mxu0 0.0
  %337 = vmatpush1.msra.mxu0 0.0
  %338 = vmatprep.subr.mxu0 0.0
  %339 = vmatpush1.msra.mxu0 0.0
  %340 = vmatprep.subr.mxu0 0.0
  %341 = vmatpush1.msra.mxu0 0.0
  %342 = vmatprep.subr.mxu0 0.0
  %343 = vmatpush1.msra.mxu0 0.0
  %344 = vmatprep.subr.mxu0 0.0
  %345 = vmatpush1.msra.mxu0 0.0
  %346 = vmatprep.subr.mxu0 0.0
  %347 = vmatpush1.msra.mxu0 0.0
  %348 = vmatprep.subr.mxu0 0.0
  %349 = vmatpush1.msra.mxu0 0.0
  %350 = vmatprep.subr.mxu0 0.0
  %351 = vmatpush1.msra.mxu0 0.0
  %352 = vmatprep.subr.mxu0 0.0
  %353 = vmatpush1.msra.mxu0 0.0
  %354 = vmatprep.subr.mxu0 0.0
  %355 = vmatpush1.msra.mxu0 0.0
  %356 = vmatprep.subr.mxu0 0.0
  %357 = vmatpush1.msra.mxu0 0.0
  %358 = vmatprep.subr.mxu0 0.0
  %359 = vmatpush1.msra.mxu0 0.0
  %360 = vmatprep.subr.mxu0 0.0
  %361 = vmatpush1.msra.mxu0 0.0
  %362 = vmatprep.mubr.f32.mxu0 0.0
  %363 = vmatmul.mubr.f32.gmra.mrb[0].mxu0 %v275
  %v364 = vpop.f32.mrb[0].mxu0
  %v365 = vadd.f32 %v271, %v364
  %v366 = vpop.f32.mrb[0].mxu0
  %367 = vmatprep.mubr.f32.mxu0 0.0
  %368 = vmatmul.mubr.f32.gmra.mrb[0].mxu0 %v278
  %v369 = vpop.f32.mrb[0].mxu0
  %v370 = vadd.f32 %v271, %v369
  %v371 = vpop.f32.mrb[0].mxu0
  %372 = vmatprep.mubr.f32.mxu0 0.0
  %373 = vmatmul.mubr.f32.gmra.mrb[0].mxu0 %v281
  %v374 = vpop.f32.mrb[0].mxu0
  %v375 = vadd.f32 %v271, %v374
  %v376 = vpop.f32.mrb[0].mxu0
  %377 = vmatprep.mubr.f32.mxu0 0.0
  %378 = vmatmul.mubr.f32.gmra.mrb[0].mxu0 %v284
  %v379 = vpop.f32.mrb[0].mxu0
  %v380 = vadd.f32 %v271, %v379
  %v381 = vpop.f32.mrb[0].mxu0
  %382 = vmatprep.mubr.f32.mxu0 0.0
  %383 = vmatmul.mubr.f32.gmra.mrb[0].mxu0 %v287
  %v384 = vpop.f32.mrb[0].mxu0
  %v385 = vadd.f32 %v271, %v384
  %v386 = vpop.f32.mrb[0].mxu0
  %387 = vmatprep.mubr.f32.mxu0 0.0
  %388 = vmatmul.mubr.f32.gmra.mrb[0].mxu0 %v290
  %v389 = vpop.f32.mrb[0].mxu0
  %v390 = vadd.f32 %v271, %v389
  %v391 = vpop.f32.mrb[0].mxu0
  %392 = vmatprep.mubr.f32.mxu0 0.0
  %393 = vmatmul.mubr.f32.gmra.mrb[0].mxu0 %v293
  %v394 = vpop.f32.mrb[0].mxu0
  %v395 = vadd.f32 %v271, %v394
  %v396 = vpop.f32.mrb[0].mxu0
  %397 = vmatprep.mubr.f32.mxu0 0.0
  %398 = vmatmul.mubr.f32.gmra.mrb[0].mxu0 %v296
  %v399 = vpop.f32.mrb[0].mxu0
  %v400 = vadd.f32 %v271, %v399
  %v401 = vpop.f32.mrb[0].mxu0
  %402 = vdwg.mxu0
  %403 = vst [vmem:[%s5] sm:$0xff] %v365
  %404 = vst [vmem:[%s5 + $0x8] sm:$0xff] %v370
  %405 = vst [vmem:[%s5 + $0x10] sm:$0xff] %v375
  %406 = vst [vmem:[%s5 + $0x18] sm:$0xff] %v380
  %407 = vst [vmem:[%s5 + $0x20] sm:$0xff] %v385
  %408 = vst [vmem:[%s5 + $0x28] sm:$0xff] %v390
  %409 = vst [vmem:[%s5 + $0x30] sm:$0xff] %v395
  %410 = vst [vmem:[%s5 + $0x38] sm:$0xff] %v400
  // Predicated region
  $region22: #{lstm_sec_crf_forward.5} parent=0 // pred_check
    _
  $region23: #{lstm_sec_crf_forward.5} parent=0 // pred_check_branch
    %412 = sbr.rel (0) target = $region25
  $region24: #{lstm_sec_crf_forward.5} parent=0 // pred_region
    _
  $region25: #{lstm_sec_crf_forward.5} parent=0 // pred_fallthru
    _
  // Predicated region
  $region26: #{lstm_sec_crf_forward.5} parent=0 // pred_check
    _
  $region27: #{lstm_sec_crf_forward.5} parent=0 // pred_check_branch
    %414 = sbr.rel (0) target = $region29
  $region28: #{lstm_sec_crf_forward.5} parent=0 // pred_region
    _
  $region29: #{lstm_sec_crf_forward.5} parent=0 // pred_fallthru
    _

// kernel: lstm_sec_crf_forward.3
$region0: #{lstm_sec_crf_forward.3}
  #allocation0 [shape = 'u32[]', space=smem, size = 0x4, offset = 0x4, fixed_abs, tag = 'smem constant byte address 0x4 - core index']
  #allocation1 [shape = 'u32[144,128]{1,0:T(1,128)}', space=vmem, size = 0x12000, scoped, tag = 'internal scratch']
  #allocation2 [shape = 'f32[64,256]{1,0:T(8,128)}', space=vmem, size = 0x10000, scoped, tag = 'scratch operand']
  #allocation3 [shape = 'f32[64,256]{1,0:T(8,128)}', space=vmem, size = 0x10000, scoped, tag = 'scratch operand']
  #allocation4 [shape = 'f32[8,64]{1,0:T(8,128)}', space=vmem, size = 0x1000, scoped, tag = 'scratch operand']
  #allocation5 [shape = 'f32[8,64]{1,0:T(8,128)}', space=vmem, size = 0x1000, scoped, tag = 'scratch operand']
  %s0 = inlined_call_operand.vmem [shape: bf16[64,32], index: 0, kind: input, shape index: {}, may-alias: {0,1}]
  %s1 = inlined_call_operand.vmem [shape: bf16[64,32], index: 1, kind: input, shape index: {}, may-alias: {0,1}]
  %s2 = inlined_call_operand.vmem [shape: bf16[2,32,256], index: 2, kind: input, shape index: {}]
  %s3 = inlined_call_operand.vmem [shape: f32[64,256], index: 3, kind: input, shape index: {}]
  %s4 = inlined_call_operand.vmem [shape: f32[2,256], index: 4, kind: input, shape index: {}]
  %s5 = inlined_call_operand.vmem [shape: bf16[64,32], index: 5, kind: output, shape index: {0}]
  %s6 = inlined_call_operand.vmem [shape: bf16[64,32], index: 6, kind: output, shape index: {1}]
  %s7 = inlined_call_operand.vmem [shape: f32[2,8,32], index: 7, kind: output, shape index: {2}]
  %s8 = inlined_call_operand.vmem [shape: f32[2,8,32], index: 8, kind: output, shape index: {3}]
  %9 = xla_tuple %s5, %s6, %s7, %s8
  %s10 = sld [smem:[#allocation0]]
  $region62: #{lstm_sec_crf_forward.3} parent=0
    _
  %s12 = ssub.s32 1, %s10
  %s13 = scalar_select 0, %s12, %s10
  // Predicated region
  $region2: #{lstm_sec_crf_forward.3} parent=0 // pred_check
    _
  $region3: #{lstm_sec_crf_forward.3} parent=0 // pred_check_branch
    %15 = sbr.rel (0) target = $region5
  $region4: #{lstm_sec_crf_forward.3} parent=0 // pred_region
    _
  $region5: #{lstm_sec_crf_forward.3} parent=0 // pred_fallthru
    _
  // Predicated region
  $region6: #{lstm_sec_crf_forward.3} parent=0 // pred_check
    _
  $region7: #{lstm_sec_crf_forward.3} parent=0 // pred_check_branch
    %17 = sbr.rel (0) target = $region9
  $region8: #{lstm_sec_crf_forward.3} parent=0 // pred_region
    %s18 = ssub.s32 0, 0
    %s19 = smul.u32 8, %s18
    %p20 = scmp.lt.s32.totalorder %s19, 7
    %s21 = scalar_select %p20, %s19, 7
    %s22 = smul.addr %s21, 4
    %s23 = scalar_lea.vmem %s1, %s22
    %s24 = ssub.s32 0, 0
    %s25 = smul.u32 8, %s24
  $region9: #{lstm_sec_crf_forward.3} parent=0 // pred_fallthru
    _
  // Predicated region
  $region10: #{lstm_sec_crf_forward.3} parent=0 // pred_check
    _
  $region11: #{lstm_sec_crf_forward.3} parent=0 // pred_check_branch
    %27 = sbr.rel (0) target = $region13
  $region12: #{lstm_sec_crf_forward.3} parent=0 // pred_region
    _
  $region13: #{lstm_sec_crf_forward.3} parent=0 // pred_fallthru
    _
  // Predicated region
  $region14: #{lstm_sec_crf_forward.3} parent=0 // pred_check
    _
  $region15: #{lstm_sec_crf_forward.3} parent=0 // pred_check_branch
    %29 = sbr.rel (0) target = $region17
  $region16: #{lstm_sec_crf_forward.3} parent=0 // pred_region
    _
  $region17: #{lstm_sec_crf_forward.3} parent=0 // pred_fallthru
    _
  // Predicated region
  $region18: #{lstm_sec_crf_forward.3} parent=0 // pred_check
    _
  $region19: #{lstm_sec_crf_forward.3} parent=0 // pred_check_branch
    %31 = sbr.rel (0) target = $region21
  $region20: #{lstm_sec_crf_forward.3} parent=0 // pred_region
    _
  $region21: #{lstm_sec_crf_forward.3} parent=0 // pred_fallthru
    _
  %s32 = ssub.s32 0, 0
  %s33 = smul.u32 8, %s32
  %p34 = scmp.lt.s32.totalorder %s33, 7
  %s35 = scalar_select %p34, %s33, 7
  %s36 = smul.addr %s35, 4
  %s37 = scalar_lea.vmem %s1, %s36
  %s38 = ssub.s32 0, 0
  %s39 = smul.u32 8, %s38
  %p40 = scmp.lt.s32.totalorder %s39, 7
  %s41 = scalar_select %p40, %s39, 7
  %s42 = smul.addr %s41, 4
  %s43 = scalar_lea.vmem %s6, %s42
  %s44 = ssub.s32 0, 0
  %s45 = smul.u32 8, %s44
  %p46 = scmp.lt.s32.totalorder %s45, 7
  %s47 = scalar_select %p46, %s45, 7
  %s48 = smul.addr %s47, 4
  %s49 = scalar_lea.vmem %s1, %s48
  %s50 = ssub.s32 0, 0
  %s51 = smul.u32 8, %s50
  %s52 = ssub.s32 0, 0
  %s53 = smul.u32 8, %s52
  %p54 = scmp.lt.s32.totalorder %s53, 7
  %s55 = scalar_select %p54, %s53, 7
  %s56 = smul.addr %s55, 4
  %s57 = scalar_lea.vmem %s6, %s56
  %s58 = ssub.s32 0, 0
  %s59 = smul.u32 8, %s58
  %p61 = scmp.eq.s32.totalorder 0, 0
  // Predicated region
  $region22: #{lstm_sec_crf_forward.3} parent=0 // pred_check
    %p62 = pneg %p61
  $region23: #{lstm_sec_crf_forward.3} parent=0 // pred_check_branch
    %64 = sbr.rel (%p62) target = $region25
  $region24: #{lstm_sec_crf_forward.3} parent=0 // pred_region
    %vm65 = vcmask 523264
    %66 = vst.msk [vmem:[#allocation4] sm:$0xff] %vm65, 0.0
    %67 = vst.msk [vmem:[#allocation5] sm:$0xff] %vm65, 0.0
  $region25: #{lstm_sec_crf_forward.3} parent=0 // pred_fallthru
    _
  %v68 = vld [vmem:[%s0] sm:$0xf]
  %v69 = vld [vmem:[%s0 + $0x4] sm:$0xf]
  %v70 = vld [vmem:[%s0 + $0x8] sm:$0xf]
  %v71 = vld [vmem:[%s0 + $0xc] sm:$0xf]
  %v72 = vld [vmem:[%s0 + $0x10] sm:$0xf]
  %v73 = vld [vmem:[%s0 + $0x14] sm:$0xf]
  %v74 = vld [vmem:[%s0 + $0x18] sm:$0xf]
  %v75 = vld [vmem:[%s0 + $0x1c] sm:$0xf]
  %v76 = vld [vmem:[%s2] sm:$0xff]
  %v77 = vld [vmem:[%s2 + $0x8] sm:$0xff]
  %v78 = vld [vmem:[%s2 + $0x10] sm:$0xff]
  %v79 = vld [vmem:[%s2 + $0x18] sm:$0xff]
  %v80 = vld [vmem:[%s49] sm:$0xf]
  %v81 = vld [vmem:[%s49 + $0x4] sm:$0xf]
  %v82 = vld [vmem:[%s49 + $0x8] sm:$0xf]
  %v83 = vld [vmem:[%s49 + $0xc] sm:$0xf]
  %v84 = vld [vmem:[%s49 + $0x10] sm:$0xf]
  %v85 = vld [vmem:[%s49 + $0x14] sm:$0xf]
  %v86 = vld [vmem:[%s49 + $0x18] sm:$0xf]
  %v87 = vld [vmem:[%s49 + $0x1c] sm:$0xf]
  %s88 = scalar_lea.vmem %s2, 32
  %v89 = vld [vmem:[%s88] sm:$0xff]
  %v90 = vld [vmem:[%s88 + $0x8] sm:$0xff]
  %v91 = vld [vmem:[%s88 + $0x10] sm:$0xff]
  %v92 = vld [vmem:[%s88 + $0x18] sm:$0xff]
  %v93 = vld [vmem:[%s4] ss:$2 sm:$0x3]
  %v95 = vlaneseq
  %v96 = vshrl.u32 %v95, 7
  %v97 = vsub.s32 0, %v96
  %v98 = vrot.slane %v93, %v97
  %v99 = vlaneseq
  %v100 = vshrl.u32 %v99, 7
  %v101 = vsub.s32 1, %v100
  %v102 = vrot.slane %v93, %v101
  %v113 = vunpack.c.l.b16 %v68
  %v114 = vunpack.c.l.b16 %v69
  %v115 = vunpack.c.l.b16 %v70
  %v116 = vunpack.c.l.b16 %v71
  %v117 = vunpack.c.l.b16 %v72
  %v118 = vunpack.c.l.b16 %v73
  %v119 = vunpack.c.l.b16 %v74
  %v120 = vunpack.c.l.b16 %v75
  %v121 = vpack.c.b16 %v114, %v113
  %v122 = vpack.c.b16 %v116, %v115
  %v123 = vpack.c.b16 %v118, %v117
  %v124 = vpack.c.b16 %v120, %v119
  %v129 = vunpack.c.l.b16 %v76
  %v130 = vunpack.c.h.b16 %v76
  %v131 = vunpack.c.l.b16 %v77
  %v132 = vunpack.c.h.b16 %v77
  %v133 = vunpack.c.l.b16 %v78
  %v134 = vunpack.c.h.b16 %v78
  %v135 = vunpack.c.l.b16 %v79
  %v136 = vunpack.c.h.b16 %v79
  %v137 = vpack.c.b16 %v131, %v129
  %v138 = vpack.c.b16 %v132, %v130
  %v139 = vpack.c.b16 %v135, %v133
  %v140 = vpack.c.b16 %v136, %v134
  %vm145 = vcmask 261120
  %v147 = vsel %vm145, %v121, 0
  %v150 = vsel %vm145, %v122, 0
  %v153 = vsel %vm145, %v123, 0
  %v156 = vsel %vm145, %v124, 0
  %158 = vmatprep.subr.bf16.mxu0 %v138
  %159 = vmatpush1.bf16.msra.mxu0 %v137
  %160 = vmatprep.subr.bf16.mxu0 %v140
  %161 = vmatpush1.bf16.msra.mxu0 %v139
  %162 = vmatprep.subr.bf16.mxu0 0
  %163 = vmatpush1.bf16.msra.mxu0 0
  %164 = vmatprep.subr.bf16.mxu0 0
  %165 = vmatpush1.bf16.msra.mxu0 0
  %166 = vmatprep.subr.bf16.mxu0 0
  %167 = vmatpush1.bf16.msra.mxu0 0
  %168 = vmatprep.subr.bf16.mxu0 0
  %169 = vmatpush1.bf16.msra.mxu0 0
  %170 = vmatprep.subr.bf16.mxu0 0
  %171 = vmatpush1.bf16.msra.mxu0 0
  %172 = vmatprep.subr.bf16.mxu0 0
  %173 = vmatpush1.bf16.msra.mxu0 0
  %174 = vmatprep.subr.bf16.mxu0 0
  %175 = vmatpush1.bf16.msra.mxu0 0
  %176 = vmatprep.subr.bf16.mxu0 0
  %177 = vmatpush1.bf16.msra.mxu0 0
  %178 = vmatprep.subr.bf16.mxu0 0
  %179 = vmatpush1.bf16.msra.mxu0 0
  %180 = vmatprep.subr.bf16.mxu0 0
  %181 = vmatpush1.bf16.msra.mxu0 0
  %182 = vmatprep.subr.bf16.mxu0 0
  %183 = vmatpush1.bf16.msra.mxu0 0
  %184 = vmatprep.subr.bf16.mxu0 0
  %185 = vmatpush1.bf16.msra.mxu0 0
  %186 = vmatprep.subr.bf16.mxu0 0
  %187 = vmatpush1.bf16.msra.mxu0 0
  %188 = vmatprep.subr.bf16.mxu0 0
  %189 = vmatpush1.bf16.msra.mxu0 0
  %190 = vmatprep.mubr.bf16.mxu0 0
  %191 = vmatmul.mubr.bf16.gmra.mrb[0].mxu0 %v147
  %v192 = vpop.f32.mrb[0].mxu0
  %v193 = vadd.f32 %v98, %v192
  %v194 = vpop.f32.mrb[0].mxu0
  %v195 = vadd.f32 %v102, %v194
  %v196 = vpop.f32.mrb[0].mxu0
  %v197 = vadd.f32 %v98, %v196
  %v198 = vpop.f32.mrb[0].mxu0
  %v199 = vadd.f32 %v102, %v198
  %200 = vmatprep.mubr.bf16.mxu0 0
  %201 = vmatmul.mubr.bf16.gmra.mrb[0].mxu0 %v150
  %v202 = vpop.f32.mrb[0].mxu0
  %v203 = vadd.f32 %v98, %v202
  %v204 = vpop.f32.mrb[0].mxu0
  %v205 = vadd.f32 %v102, %v204
  %v206 = vpop.f32.mrb[0].mxu0
  %v207 = vadd.f32 %v98, %v206
  %v208 = vpop.f32.mrb[0].mxu0
  %v209 = vadd.f32 %v102, %v208
  %210 = vmatprep.mubr.bf16.mxu0 0
  %211 = vmatmul.mubr.bf16.gmra.mrb[0].mxu0 %v153
  %v212 = vpop.f32.mrb[0].mxu0
  %v213 = vadd.f32 %v98, %v212
  %v214 = vpop.f32.mrb[0].mxu0
  %v215 = vadd.f32 %v102, %v214
  %v216 = vpop.f32.mrb[0].mxu0
  %v217 = vadd.f32 %v98, %v216
  %v218 = vpop.f32.mrb[0].mxu0
  %v219 = vadd.f32 %v102, %v218
  %220 = vmatprep.mubr.bf16.mxu0 0
  %221 = vmatmul.mubr.bf16.gmra.mrb[0].mxu0 %v156
  %v222 = vpop.f32.mrb[0].mxu0
  %v223 = vadd.f32 %v98, %v222
  %v224 = vpop.f32.mrb[0].mxu0
  %v225 = vadd.f32 %v102, %v224
  %v226 = vpop.f32.mrb[0].mxu0
  %v227 = vadd.f32 %v98, %v226
  %v228 = vpop.f32.mrb[0].mxu0
  %v229 = vadd.f32 %v102, %v228
  %230 = vdwg.mxu0
  %231 = vst [vmem:[#allocation2] sm:$0xff] %v193
  %232 = vst [vmem:[#allocation2 + $0x8] sm:$0xff] %v195
  %233 = vst [vmem:[#allocation2 + $0x10] sm:$0xff] %v197
  %234 = vst [vmem:[#allocation2 + $0x18] sm:$0xff] %v199
  %235 = vst [vmem:[#allocation2 + $0x20] sm:$0xff] %v203
  %236 = vst [vmem:[#allocation2 + $0x28] sm:$0xff] %v205
  %237 = vst [vmem:[#allocation2 + $0x30] sm:$0xff] %v207
  %238 = vst [vmem:[#allocation2 + $0x38] sm:$0xff] %v209
  %239 = vst [vmem:[#allocation2 + $0x40] sm:$0xff] %v213
  %240 = vst [vmem:[#allocation2 + $0x48] sm:$0xff] %v215
  %241 = vst [vmem:[#allocation2 + $0x50] sm:$0xff] %v217
  %242 = vst [vmem:[#allocation2 + $0x58] sm:$0xff] %v219
  %243 = vst [vmem:[#allocation2 + $0x60] sm:$0xff] %v223
  %244 = vst [vmem:[#allocation2 + $0x68] sm:$0xff] %v225
  %245 = vst [vmem:[#allocation2 + $0x70] sm:$0xff] %v227
  %246 = vst [vmem:[#allocation2 + $0x78] sm:$0xff] %v229
  %s247 = scalar_lea.vmem %s4, 1
  %v248 = vld [vmem:[%s247] ss:$2 sm:$0x3]
  %v250 = vlaneseq
  %v251 = vshrl.u32 %v250, 7
  %v252 = vsub.s32 0, %v251
  %v253 = vrot.slane %v248, %v252
  %v254 = vlaneseq
  %v255 = vshrl.u32 %v254, 7
  %v256 = vsub.s32 1, %v255
  %v257 = vrot.slane %v248, %v256
  %v268 = vunpack.c.l.b16 %v80
  %v269 = vunpack.c.l.b16 %v81
  %v270 = vunpack.c.l.b16 %v82
  %v271 = vunpack.c.l.b16 %v83
  %v272 = vunpack.c.l.b16 %v84
  %v273 = vunpack.c.l.b16 %v85
  %v274 = vunpack.c.l.b16 %v86
  %v275 = vunpack.c.l.b16 %v87
  %v276 = vpack.c.b16 %v269, %v268
  %v277 = vpack.c.b16 %v271, %v270
  %v278 = vpack.c.b16 %v273, %v272
  %v279 = vpack.c.b16 %v275, %v274
  %v284 = vunpack.c.l.b16 %v89
  %v285 = vunpack.c.h.b16 %v89
  %v286 = vunpack.c.l.b16 %v90
  %v287 = vunpack.c.h.b16 %v90
  %v288 = vunpack.c.l.b16 %v91
  %v289 = vunpack.c.h.b16 %v91
  %v290 = vunpack.c.l.b16 %v92
  %v291 = vunpack.c.h.b16 %v92
  %v292 = vpack.c.b16 %v286, %v284
  %v293 = vpack.c.b16 %v287, %v285
  %v294 = vpack.c.b16 %v290, %v288
  %v295 = vpack.c.b16 %v291, %v289
  %v301 = vsel %vm145, %v276, 0
  %v304 = vsel %vm145, %v277, 0
  %v307 = vsel %vm145, %v278, 0
  %v310 = vsel %vm145, %v279, 0
  %312 = vmatprep.subr.bf16.mxu0 %v293
  %313 = vmatpush1.bf16.msra.mxu0 %v292
  %314 = vmatprep.subr.bf16.mxu0 %v295
  %315 = vmatpush1.bf16.msra.mxu0 %v294
  %316 = vmatprep.subr.bf16.mxu0 0
  %317 = vmatpush1.bf16.msra.mxu0 0
  %318 = vmatprep.subr.bf16.mxu0 0
  %319 = vmatpush1.bf16.msra.mxu0 0
  %320 = vmatprep.subr.bf16.mxu0 0
  %321 = vmatpush1.bf16.msra.mxu0 0
  %322 = vmatprep.subr.bf16.mxu0 0
  %323 = vmatpush1.bf16.msra.mxu0 0
  %324 = vmatprep.subr.bf16.mxu0 0
  %325 = vmatpush1.bf16.msra.mxu0 0
  %326 = vmatprep.subr.bf16.mxu0 0
  %327 = vmatpush1.bf16.msra.mxu0 0
  %328 = vmatprep.subr.bf16.mxu0 0
  %329 = vmatpush1.bf16.msra.mxu0 0
  %330 = vmatprep.subr.bf16.mxu0 0
  %331 = vmatpush1.bf16.msra.mxu0 0
  %332 = vmatprep.subr.bf16.mxu0 0
  %333 = vmatpush1.bf16.msra.mxu0 0
  %334 = vmatprep.subr.bf16.mxu0 0
  %335 = vmatpush1.bf16.msra.mxu0 0
  %336 = vmatprep.subr.bf16.mxu0 0
  %337 = vmatpush1.bf16.msra.mxu0 0
  %338 = vmatprep.subr.bf16.mxu0 0
  %339 = vmatpush1.bf16.msra.mxu0 0
  %340 = vmatprep.subr.bf16.mxu0 0
  %341 = vmatpush1.bf16.msra.mxu0 0
  %342 = vmatprep.subr.bf16.mxu0 0
  %343 = vmatpush1.bf16.msra.mxu0 0
  %344 = vmatprep.mubr.bf16.mxu0 0
  %345 = vmatmul.mubr.bf16.gmra.mrb[0].mxu0 %v301
  %v346 = vpop.f32.mrb[0].mxu0
  %v347 = vadd.f32 %v253, %v346
  %v348 = vpop.f32.mrb[0].mxu0
  %v349 = vadd.f32 %v257, %v348
  %v350 = vpop.f32.mrb[0].mxu0
  %v351 = vadd.f32 %v253, %v350
  %v352 = vpop.f32.mrb[0].mxu0
  %v353 = vadd.f32 %v257, %v352
  %354 = vmatprep.mubr.bf16.mxu0 0
  %355 = vmatmul.mubr.bf16.gmra.mrb[0].mxu0 %v304
  %v356 = vpop.f32.mrb[0].mxu0
  %v357 = vadd.f32 %v253, %v356
  %v358 = vpop.f32.mrb[0].mxu0
  %v359 = vadd.f32 %v257, %v358
  %v360 = vpop.f32.mrb[0].mxu0
  %v361 = vadd.f32 %v253, %v360
  %v362 = vpop.f32.mrb[0].mxu0
  %v363 = vadd.f32 %v257, %v362
  %364 = vmatprep.mubr.bf16.mxu0 0
  %365 = vmatmul.mubr.bf16.gmra.mrb[0].mxu0 %v307
  %v366 = vpop.f32.mrb[0].mxu0
  %v367 = vadd.f32 %v253, %v366
  %v368 = vpop.f32.mrb[0].mxu0
  %v369 = vadd.f32 %v257, %v368
  %v370 = vpop.f32.mrb[0].mxu0
  %v371 = vadd.f32 %v253, %v370
  %v372 = vpop.f32.mrb[0].mxu0
  %v373 = vadd.f32 %v257, %v372
  %374 = vmatprep.mubr.bf16.mxu0 0
  %375 = vmatmul.mubr.bf16.gmra.mrb[0].mxu0 %v310
  %v376 = vpop.f32.mrb[0].mxu0
  %v377 = vadd.f32 %v253, %v376
  %v378 = vpop.f32.mrb[0].mxu0
  %v379 = vadd.f32 %v257, %v378
  %v380 = vpop.f32.mrb[0].mxu0
  %v381 = vadd.f32 %v253, %v380
  %v382 = vpop.f32.mrb[0].mxu0
  %v383 = vadd.f32 %v257, %v382
  %384 = vdwg.mxu0
  %385 = vst [vmem:[#allocation3] sm:$0xff] %v347
  %386 = vst [vmem:[#allocation3 + $0x8] sm:$0xff] %v349
  %387 = vst [vmem:[#allocation3 + $0x10] sm:$0xff] %v351
  %388 = vst [vmem:[#allocation3 + $0x18] sm:$0xff] %v353
  %389 = vst [vmem:[#allocation3 + $0x20] sm:$0xff] %v357
  %390 = vst [vmem:[#allocation3 + $0x28] sm:$0xff] %v359
  %391 = vst [vmem:[#allocation3 + $0x30] sm:$0xff] %v361
  %392 = vst [vmem:[#allocation3 + $0x38] sm:$0xff] %v363
  %393 = vst [vmem:[#allocation3 + $0x40] sm:$0xff] %v367
  %394 = vst [vmem:[#allocation3 + $0x48] sm:$0xff] %v369
  %395 = vst [vmem:[#allocation3 + $0x50] sm:$0xff] %v371
  %396 = vst [vmem:[#allocation3 + $0x58] sm:$0xff] %v373
  %397 = vst [vmem:[#allocation3 + $0x60] sm:$0xff] %v377
  %398 = vst [vmem:[#allocation3 + $0x68] sm:$0xff] %v379
  %399 = vst [vmem:[#allocation3 + $0x70] sm:$0xff] %v381
  %400 = vst [vmem:[#allocation3 + $0x78] sm:$0xff] %v383
  %v401 = vld [vmem:[%s3] sm:$0xff]
  %v402 = vld [vmem:[%s3 + $0x8] sm:$0xff]
  %v403 = vld [vmem:[%s3 + $0x10] sm:$0xff]
  %v404 = vld [vmem:[%s3 + $0x18] sm:$0xff]
  %v405 = vld [vmem:[%s3 + $0x20] sm:$0xff]
  %v406 = vld [vmem:[%s3 + $0x28] sm:$0xff]
  %v407 = vld [vmem:[%s3 + $0x30] sm:$0xff]
  %v408 = vld [vmem:[%s3 + $0x38] sm:$0xff]
  %v409 = vld [vmem:[%s3 + $0x40] sm:$0xff]
  %v410 = vld [vmem:[%s3 + $0x48] sm:$0xff]
  %v411 = vld [vmem:[%s3 + $0x50] sm:$0xff]
  %v412 = vld [vmem:[%s3 + $0x58] sm:$0xff]
  %v413 = vld [vmem:[%s3 + $0x60] sm:$0xff]
  %v414 = vld [vmem:[%s3 + $0x68] sm:$0xff]
  %v415 = vld [vmem:[%s3 + $0x70] sm:$0xff]
  %v416 = vld [vmem:[%s3 + $0x78] sm:$0xff]
  %v417 = vld [vmem:[#allocation4] sm:$0xff]
  %v418 = vld [vmem:[#allocation5] sm:$0xff]
  %s419 = smul.u32 0, 2
  %s420 = smul.addr %s419, 8
  %s421 = scalar_lea.vmem [#allocation2], %s420
  %v422 = vld [vmem:[%s421] sm:$0xff]
  %v423 = vld [vmem:[%s421 + $0x8] sm:$0xff]
  %s424 = smul.u32 7, 2
  %s425 = smul.addr %s424, 8
  %s426 = scalar_lea.vmem [#allocation3], %s425
  %v427 = vld [vmem:[%s426] sm:$0xff]
  %v428 = vld [vmem:[%s426 + $0x8] sm:$0xff]
  %v429 = vadd.f32 %v422, %v427
  %v430 = vadd.f32 %v423, %v428
  %vm431 = vcmask 523264
  %v433 = vsel %vm431, %v417, 0
  %435 = vmatprep.subr.mxu0 %v402
  %436 = vmatpush1.msra.mxu0 %v401
  %437 = vmatprep.subr.mxu0 %v404
  %438 = vmatpush1.msra.mxu0 %v403
  %439 = vmatprep.subr.mxu0 %v406
  %440 = vmatpush1.msra.mxu0 %v405
  %441 = vmatprep.subr.mxu0 %v408
  %442 = vmatpush1.msra.mxu0 %v407
  %443 = vmatprep.subr.mxu0 %v410
  %444 = vmatpush1.msra.mxu0 %v409
  %445 = vmatprep.subr.mxu0 %v412
  %446 = vmatpush1.msra.mxu0 %v411
  %447 = vmatprep.subr.mxu0 %v414
  %448 = vmatpush1.msra.mxu0 %v413
  %449 = vmatprep.subr.mxu0 %v416
  %450 = vmatpush1.msra.mxu0 %v415
  %451 = vmatprep.subr.mxu0 0.0
  %452 = vmatpush1.msra.mxu0 0.0
  %453 = vmatprep.subr.mxu0 0.0
  %454 = vmatpush1.msra.mxu0 0.0
  %455 = vmatprep.subr.mxu0 0.0
  %456 = vmatpush1.msra.mxu0 0.0
  %457 = vmatprep.subr.mxu0 0.0
  %458 = vmatpush1.msra.mxu0 0.0
  %459 = vmatprep.subr.mxu0 0.0
  %460 = vmatpush1.msra.mxu0 0.0
  %461 = vmatprep.subr.mxu0 0.0
  %462 = vmatpush1.msra.mxu0 0.0
  %463 = vmatprep.subr.mxu0 0.0
  %464 = vmatpush1.msra.mxu0 0.0
  %465 = vmatprep.subr.mxu0 0.0
  %466 = vmatpush1.msra.mxu0 0.0
  %467 = vmatprep.subr.mxu0 0.0
  %468 = vmatpush1.msra.mxu0 0.0
  %469 = vmatprep.subr.mxu0 0.0
  %470 = vmatpush1.msra.mxu0 0.0
  %471 = vmatprep.subr.mxu0 0.0
  %472 = vmatpush1.msra.mxu0 0.0
  %473 = vmatprep.subr.mxu0 0.0
  %474 = vmatpush1.msra.mxu0 0.0
  %475 = vmatprep.subr.mxu0 0.0
  %476 = vmatpush1.msra.mxu0 0.0
  %477 = vmatprep.subr.mxu0 0.0
  %478 = vmatpush1.msra.mxu0 0.0
  %479 = vmatprep.subr.mxu0 0.0
  %480 = vmatpush1.msra.mxu0 0.0
  %481 = vmatprep.subr.mxu0 0.0
  %482 = vmatpush1.msra.mxu0 0.0
  %483 = vmatprep.subr.mxu0 0.0
  %484 = vmatpush1.msra.mxu0 0.0
  %485 = vmatprep.subr.mxu0 0.0
  %486 = vmatpush1.msra.mxu0 0.0
  %487 = vmatprep.subr.mxu0 0.0
  %488 = vmatpush1.msra.mxu0 0.0
  %489 = vmatprep.subr.mxu0 0.0
  %490 = vmatpush1.msra.mxu0 0.0
  %491 = vmatprep.subr.mxu0 0.0
  %492 = vmatpush1.msra.mxu0 0.0
  %493 = vmatprep.subr.mxu0 0.0
  %494 = vmatpush1.msra.mxu0 0.0
  %495 = vmatprep.subr.mxu0 0.0
  %496 = vmatpush1.msra.mxu0 0.0
  %497 = vmatprep.subr.mxu0 0.0
  %498 = vmatpush1.msra.mxu0 0.0
  %499 = vmatprep.mubr.f32.mxu0 0.0
  %500 = vmatmul.mubr.f32.gmra.mrb[0].mxu0 %v433
  %v501 = vpop.f32.mrb[0].mxu0
  %v502 = vadd.f32 0.0, %v501
  %v503 = vpop.f32.mrb[0].mxu0
  %v504 = vadd.f32 0.0, %v503
  %505 = vdwg.mxu0
  %v506 = vadd.f32 %v429, %v502
  %v507 = vadd.f32 %v430, %v504
  %v508 = vxor.u32 %v506, 2147483648
  %v509 = vxor.u32 %v507, 2147483648
  %v510 = vmul.f32 %v508, 1.442695
  %v511 = vpow.pop %v510
  %v512 = vmul.f32 %v509, 1.442695
  %v513 = vpow.pop %v512
  %v514 = vadd.f32 %v511, 1.0
  %v515 = vadd.f32 %v513, 1.0
  %v516 = vrcp.pop %v514
  %v517 = vmul.f32 1.0, %v516
  %v518 = vrcp.pop %v515
  %v519 = vmul.f32 1.0, %v518
  %v520 = vtanh.pop %v507
  %522 = vrot.lane.b32.xlu0 %v418, 64
  %v523 = vpop.permute.xlu0 %522
  %v525 = vmul.f32 %v517, %v523
  %v526 = vmul.f32 %v517, %v520
  %528 = vrot.lane.b32.xlu0 %v526, 64
  %v529 = vpop.permute.xlu0 %528
  %v531 = vadd.f32 %v525, %v529
  %v532 = vtanh.pop %v531
  %v533 = vmul.f32 %v519, %v532
  %v534 = vpack.c.bf16 %v533, %v533
  %v536 = vunpack.c.l.b16 %v534
  %v537 = vpack.c.b16 %v536, %v536
  %538 = vrot.lane.b32.xlu0 %v537, 64
  %v539 = vpop.permute.xlu0 %538
  %vm541 = vcmask 257024
  %542 = vst.msk [vmem:[%s5] sm:$0xf] %vm541, %v539
  %543 = vrot.lane.b32.xlu0 %v537, 32
  %v544 = vpop.permute.xlu0 %543
  %s546 = scalar_lea.vmem %s57, 28
  %547 = vst.msk [vmem:[%s546] sm:$0xf] %vm541, %v544
  %s548 = smul.u32 1, 2
  %s549 = smul.addr %s548, 8
  %s550 = scalar_lea.vmem [#allocation2], %s549
  %v551 = vld [vmem:[%s550] sm:$0xff]
  %v552 = vld [vmem:[%s550 + $0x8] sm:$0xff]
  %s553 = smul.u32 6, 2
  %s554 = smul.addr %s553, 8
  %s555 = scalar_lea.vmem [#allocation3], %s554
  %v556 = vld [vmem:[%s555] sm:$0xff]
  %v557 = vld [vmem:[%s555 + $0x8] sm:$0xff]
  %v558 = vadd.f32 %v551, %v556
  %v559 = vadd.f32 %v552, %v557
  %561 = vrot.lane.b32.xlu0 %v533, 64
  %v562 = vpop.permute.xlu0 %561
  %v563 = vsel %vm431, %v562, 0
  %565 = vmatprep.subr.mxu0 %v402
  %566 = vmatpush1.msra.mxu0 %v401
  %567 = vmatprep.subr.mxu0 %v404
  %568 = vmatpush1.msra.mxu0 %v403
  %569 = vmatprep.subr.mxu0 %v406
  %570 = vmatpush1.msra.mxu0 %v405
  %571 = vmatprep.subr.mxu0 %v408
  %572 = vmatpush1.msra.mxu0 %v407
  %573 = vmatprep.subr.mxu0 %v410
  %574 = vmatpush1.msra.mxu0 %v409
  %575 = vmatprep.subr.mxu0 %v412
  %576 = vmatpush1.msra.mxu0 %v411
  %577 = vmatprep.subr.mxu0 %v414
  %578 = vmatpush1.msra.mxu0 %v413
  %579 = vmatprep.subr.mxu0 %v416
  %580 = vmatpush1.msra.mxu0 %v415
  %581 = vmatprep.subr.mxu0 0.0
  %582 = vmatpush1.msra.mxu0 0.0
  %583 = vmatprep.subr.mxu0 0.0
  %584 = vmatpush1.msra.mxu0 0.0
  %585 = vmatprep.subr.mxu0 0.0
  %586 = vmatpush1.msra.mxu0 0.0
  %587 = vmatprep.subr.mxu0 0.0
  %588 = vmatpush1.msra.mxu0 0.0
  %589 = vmatprep.subr.mxu0 0.0
  %590 = vmatpush1.msra.mxu0 0.0
  %591 = vmatprep.subr.mxu0 0.0
  %592 = vmatpush1.msra.mxu0 0.0
  %593 = vmatprep.subr.mxu0 0.0
  %594 = vmatpush1.msra.mxu0 0.0
  %595 = vmatprep.subr.mxu0 0.0
  %596 = vmatpush1.msra.mxu0 0.0
  %597 = vmatprep.subr.mxu0 0.0
  %598 = vmatpush1.msra.mxu0 0.0
  %599 = vmatprep.subr.mxu0 0.0
  %600 = vmatpush1.msra.mxu0 0.0
  %601 = vmatprep.subr.mxu0 0.0
  %602 = vmatpush1.msra.mxu0 0.0
  %603 = vmatprep.subr.mxu0 0.0
  %604 = vmatpush1.msra.mxu0 0.0
  %605 = vmatprep.subr.mxu0 0.0
  %606 = vmatpush1.msra.mxu0 0.0
  %607 = vmatprep.subr.mxu0 0.0
  %608 = vmatpush1.msra.mxu0 0.0
  %609 = vmatprep.subr.mxu0 0.0
  %610 = vmatpush1.msra.mxu0 0.0
  %611 = vmatprep.subr.mxu0 0.0
  %612 = vmatpush1.msra.mxu0 0.0
  %613 = vmatprep.subr.mxu0 0.0
  %614 = vmatpush1.msra.mxu0 0.0
  %615 = vmatprep.subr.mxu0 0.0
  %616 = vmatpush1.msra.mxu0 0.0
  %617 = vmatprep.subr.mxu0 0.0
  %618 = vmatpush1.msra.mxu0 0.0
  %619 = vmatprep.subr.mxu0 0.0
  %620 = vmatpush1.msra.mxu0 0.0
  %621 = vmatprep.subr.mxu0 0.0
  %622 = vmatpush1.msra.mxu0 0.0
  %623 = vmatprep.subr.mxu0 0.0
  %624 = vmatpush1.msra.mxu0 0.0
  %625 = vmatprep.subr.mxu0 0.0
  %626 = vmatpush1.msra.mxu0 0.0
  %627 = vmatprep.subr.mxu0 0.0
  %628 = vmatpush1.msra.mxu0 0.0
  %629 = vmatprep.mubr.f32.mxu0 0.0
  %630 = vmatmul.mubr.f32.gmra.mrb[0].mxu0 %v563
  %v631 = vpop.f32.mrb[0].mxu0
  %v632 = vadd.f32 0.0, %v631
  %v633 = vpop.f32.mrb[0].mxu0
  %v634 = vadd.f32 0.0, %v633
  %635 = vdwg.mxu0
  %v636 = vadd.f32 %v558, %v632
  %v637 = vadd.f32 %v559, %v634
  %v638 = vxor.u32 %v636, 2147483648
  %v639 = vxor.u32 %v637, 2147483648
  %v640 = vmul.f32 %v638, 1.442695
  %v641 = vpow.pop %v640
  %v642 = vmul.f32 %v639, 1.442695
  %v643 = vpow.pop %v642
  %v644 = vadd.f32 %v641, 1.0
  %v645 = vadd.f32 %v643, 1.0
  %v646 = vrcp.pop %v644
  %v647 = vmul.f32 1.0, %v646
  %v648 = vrcp.pop %v645
  %v649 = vmul.f32 1.0, %v648
  %v650 = vtanh.pop %v637
  %v651 = vmul.f32 %v647, %v531
  %v652 = vmul.f32 %v647, %v650
  %654 = vrot.lane.b32.xlu0 %v652, 64
  %v655 = vpop.permute.xlu0 %654
  %v657 = vadd.f32 %v651, %v655
  %v658 = vtanh.pop %v657
  %v659 = vmul.f32 %v649, %v658
  %v660 = vpack.c.bf16 %v659, %v659
  %v662 = vunpack.c.l.b16 %v660
  %v663 = vpack.c.b16 %v662, %v662
  %664 = vrot.lane.b32.xlu0 %v663, 64
  %v665 = vpop.permute.xlu0 %664
  %s667 = scalar_lea.vmem %s5, 4
  %668 = vst.msk [vmem:[%s667] sm:$0xf] %vm541, %v665
  %669 = vrot.lane.b32.xlu0 %v663, 32
  %v670 = vpop.permute.xlu0 %669
  %s672 = scalar_lea.vmem %s57, 24
  %673 = vst.msk [vmem:[%s672] sm:$0xf] %vm541, %v670
  %s674 = smul.u32 2, 2
  %s675 = smul.addr %s674, 8
  %s676 = scalar_lea.vmem [#allocation2], %s675
  %v677 = vld [vmem:[%s676] sm:$0xff]
  %v678 = vld [vmem:[%s676 + $0x8] sm:$0xff]
  %s679 = smul.u32 5, 2
  %s680 = smul.addr %s679, 8
  %s681 = scalar_lea.vmem [#allocation3], %s680
  %v682 = vld [vmem:[%s681] sm:$0xff]
  %v683 = vld [vmem:[%s681 + $0x8] sm:$0xff]
  %v684 = vadd.f32 %v677, %v682
  %v685 = vadd.f32 %v678, %v683
  %687 = vrot.lane.b32.xlu0 %v659, 64
  %v688 = vpop.permute.xlu0 %687
  %v689 = vsel %vm431, %v688, 0
  %691 = vmatprep.subr.mxu0 %v402
  %692 = vmatpush1.msra.mxu0 %v401
  %693 = vmatprep.subr.mxu0 %v404
  %694 = vmatpush1.msra.mxu0 %v403
  %695 = vmatprep.subr.mxu0 %v406
  %696 = vmatpush1.msra.mxu0 %v405
  %697 = vmatprep.subr.mxu0 %v408
  %698 = vmatpush1.msra.mxu0 %v407
  %699 = vmatprep.subr.mxu0 %v410
  %700 = vmatpush1.msra.mxu0 %v409
  %701 = vmatprep.subr.mxu0 %v412
  %702 = vmatpush1.msra.mxu0 %v411
  %703 = vmatprep.subr.mxu0 %v414
  %704 = vmatpush1.msra.mxu0 %v413
  %705 = vmatprep.subr.mxu0 %v416
  %706 = vmatpush1.msra.mxu0 %v415
  %707 = vmatprep.subr.mxu0 0.0
  %708 = vmatpush1.msra.mxu0 0.0
  %709 = vmatprep.subr.mxu0 0.0
  %710 = vmatpush1.msra.mxu0 0.0
  %711 = vmatprep.subr.mxu0 0.0
  %712 = vmatpush1.msra.mxu0 0.0
  %713 = vmatprep.subr.mxu0 0.0
  %714 = vmatpush1.msra.mxu0 0.0
  %715 = vmatprep.subr.mxu0 0.0
  %716 = vmatpush1.msra.mxu0 0.0
  %717 = vmatprep.subr.mxu0 0.0
  %718 = vmatpush1.msra.mxu0 0.0
  %719 = vmatprep.subr.mxu0 0.0
  %720 = vmatpush1.msra.mxu0 0.0
  %721 = vmatprep.subr.mxu0 0.0
  %722 = vmatpush1.msra.mxu0 0.0
  %723 = vmatprep.subr.mxu0 0.0
  %724 = vmatpush1.msra.mxu0 0.0
  %725 = vmatprep.subr.mxu0 0.0
  %726 = vmatpush1.msra.mxu0 0.0
  %727 = vmatprep.subr.mxu0 0.0
  %728 = vmatpush1.msra.mxu0 0.0
  %729 = vmatprep.subr.mxu0 0.0
  %730 = vmatpush1.msra.mxu0 0.0
  %731 = vmatprep.subr.mxu0 0.0
  %732 = vmatpush1.msra.mxu0 0.0
  %733 = vmatprep.subr.mxu0 0.0
  %734 = vmatpush1.msra.mxu0 0.0
  %735 = vmatprep.subr.mxu0 0.0
  %736 = vmatpush1.msra.mxu0 0.0
  %737 = vmatprep.subr.mxu0 0.0
  %738 = vmatpush1.msra.mxu0 0.0
  %739 = vmatprep.subr.mxu0 0.0
  %740 = vmatpush1.msra.mxu0 0.0
  %741 = vmatprep.subr.mxu0 0.0
  %742 = vmatpush1.msra.mxu0 0.0
  %743 = vmatprep.subr.mxu0 0.0
  %744 = vmatpush1.msra.mxu0 0.0
  %745 = vmatprep.subr.mxu0 0.0
  %746 = vmatpush1.msra.mxu0 0.0
  %747 = vmatprep.subr.mxu0 0.0
  %748 = vmatpush1.msra.mxu0 0.0
  %749 = vmatprep.subr.mxu0 0.0
  %750 = vmatpush1.msra.mxu0 0.0
  %751 = vmatprep.subr.mxu0 0.0
  %752 = vmatpush1.msra.mxu0 0.0
  %753 = vmatprep.subr.mxu0 0.0
  %754 = vmatpush1.msra.mxu0 0.0
  %755 = vmatprep.mubr.f32.mxu0 0.0
  %756 = vmatmul.mubr.f32.gmra.mrb[0].mxu0 %v689
  %v757 = vpop.f32.mrb[0].mxu0
  %v758 = vadd.f32 0.0, %v757
  %v759 = vpop.f32.mrb[0].mxu0
  %v760 = vadd.f32 0.0, %v759
  %761 = vdwg.mxu0
  %v762 = vadd.f32 %v684, %v758
  %v763 = vadd.f32 %v685, %v760
  %v764 = vxor.u32 %v762, 2147483648
  %v765 = vxor.u32 %v763, 2147483648
  %v766 = vmul.f32 %v764, 1.442695
  %v767 = vpow.pop %v766
  %v768 = vmul.f32 %v765, 1.442695
  %v769 = vpow.pop %v768
  %v770 = vadd.f32 %v767, 1.0
  %v771 = vadd.f32 %v769, 1.0
  %v772 = vrcp.pop %v770
  %v773 = vmul.f32 1.0, %v772
  %v774 = vrcp.pop %v771
  %v775 = vmul.f32 1.0, %v774
  %v776 = vtanh.pop %v763
  %v777 = vmul.f32 %v773, %v657
  %v778 = vmul.f32 %v773, %v776
  %780 = vrot.lane.b32.xlu0 %v778, 64
  %v781 = vpop.permute.xlu0 %780
  %v783 = vadd.f32 %v777, %v781
  %v784 = vtanh.pop %v783
  %v785 = vmul.f32 %v775, %v784
  %v786 = vpack.c.bf16 %v785, %v785
  %v788 = vunpack.c.l.b16 %v786
  %v789 = vpack.c.b16 %v788, %v788
  %790 = vrot.lane.b32.xlu0 %v789, 64
  %v791 = vpop.permute.xlu0 %790
  %s793 = scalar_lea.vmem %s5, 8
  %794 = vst.msk [vmem:[%s793] sm:$0xf] %vm541, %v791
  %795 = vrot.lane.b32.xlu0 %v789, 32
  %v796 = vpop.permute.xlu0 %795
  %s798 = scalar_lea.vmem %s57, 20
  %799 = vst.msk [vmem:[%s798] sm:$0xf] %vm541, %v796
  %s800 = smul.u32 3, 2
  %s801 = smul.addr %s800, 8
  %s802 = scalar_lea.vmem [#allocation2], %s801
  %v803 = vld [vmem:[%s802] sm:$0xff]
  %v804 = vld [vmem:[%s802 + $0x8] sm:$0xff]
  %s805 = smul.u32 4, 2
  %s806 = smul.addr %s805, 8
  %s807 = scalar_lea.vmem [#allocation3], %s806
  %v808 = vld [vmem:[%s807] sm:$0xff]
  %v809 = vld [vmem:[%s807 + $0x8] sm:$0xff]
  %v810 = vadd.f32 %v803, %v808
  %v811 = vadd.f32 %v804, %v809
  %813 = vrot.lane.b32.xlu0 %v785, 64
  %v814 = vpop.permute.xlu0 %813
  %v815 = vsel %vm431, %v814, 0
  %817 = vmatprep.subr.mxu0 %v402
  %818 = vmatpush1.msra.mxu0 %v401
  %819 = vmatprep.subr.mxu0 %v404
  %820 = vmatpush1.msra.mxu0 %v403
  %821 = vmatprep.subr.mxu0 %v406
  %822 = vmatpush1.msra.mxu0 %v405
  %823 = vmatprep.subr.mxu0 %v408
  %824 = vmatpush1.msra.mxu0 %v407
  %825 = vmatprep.subr.mxu0 %v410
  %826 = vmatpush1.msra.mxu0 %v409
  %827 = vmatprep.subr.mxu0 %v412
  %828 = vmatpush1.msra.mxu0 %v411
  %829 = vmatprep.subr.mxu0 %v414
  %830 = vmatpush1.msra.mxu0 %v413
  %831 = vmatprep.subr.mxu0 %v416
  %832 = vmatpush1.msra.mxu0 %v415
  %833 = vmatprep.subr.mxu0 0.0
  %834 = vmatpush1.msra.mxu0 0.0
  %835 = vmatprep.subr.mxu0 0.0
  %836 = vmatpush1.msra.mxu0 0.0
  %837 = vmatprep.subr.mxu0 0.0
  %838 = vmatpush1.msra.mxu0 0.0
  %839 = vmatprep.subr.mxu0 0.0
  %840 = vmatpush1.msra.mxu0 0.0
  %841 = vmatprep.subr.mxu0 0.0
  %842 = vmatpush1.msra.mxu0 0.0
  %843 = vmatprep.subr.mxu0 0.0
  %844 = vmatpush1.msra.mxu0 0.0
  %845 = vmatprep.subr.mxu0 0.0
  %846 = vmatpush1.msra.mxu0 0.0
  %847 = vmatprep.subr.mxu0 0.0
  %848 = vmatpush1.msra.mxu0 0.0
  %849 = vmatprep.subr.mxu0 0.0
  %850 = vmatpush1.msra.mxu0 0.0
  %851 = vmatprep.subr.mxu0 0.0
  %852 = vmatpush1.msra.mxu0 0.0
  %853 = vmatprep.subr.mxu0 0.0
  %854 = vmatpush1.msra.mxu0 0.0
  %855 = vmatprep.subr.mxu0 0.0
  %856 = vmatpush1.msra.mxu0 0.0
  %857 = vmatprep.subr.mxu0 0.0
  %858 = vmatpush1.msra.mxu0 0.0
  %859 = vmatprep.subr.mxu0 0.0
  %860 = vmatpush1.msra.mxu0 0.0
  %861 = vmatprep.subr.mxu0 0.0
  %862 = vmatpush1.msra.mxu0 0.0
  %863 = vmatprep.subr.mxu0 0.0
  %864 = vmatpush1.msra.mxu0 0.0
  %865 = vmatprep.subr.mxu0 0.0
  %866 = vmatpush1.msra.mxu0 0.0
  %867 = vmatprep.subr.mxu0 0.0
  %868 = vmatpush1.msra.mxu0 0.0
  %869 = vmatprep.subr.mxu0 0.0
  %870 = vmatpush1.msra.mxu0 0.0
  %871 = vmatprep.subr.mxu0 0.0
  %872 = vmatpush1.msra.mxu0 0.0
  %873 = vmatprep.subr.mxu0 0.0
  %874 = vmatpush1.msra.mxu0 0.0
  %875 = vmatprep.subr.mxu0 0.0
  %876 = vmatpush1.msra.mxu0 0.0
  %877 = vmatprep.subr.mxu0 0.0
  %878 = vmatpush1.msra.mxu0 0.0
  %879 = vmatprep.subr.mxu0 0.0
  %880 = vmatpush1.msra.mxu0 0.0
  %881 = vmatprep.mubr.f32.mxu0 0.0
  %882 = vmatmul.mubr.f32.gmra.mrb[0].mxu0 %v815
  %v883 = vpop.f32.mrb[0].mxu0
  %v884 = vadd.f32 0.0, %v883
  %v885 = vpop.f32.mrb[0].mxu0
  %v886 = vadd.f32 0.0, %v885
  %887 = vdwg.mxu0
  %v888 = vadd.f32 %v810, %v884
  %v889 = vadd.f32 %v811, %v886
  %v890 = vxor.u32 %v888, 2147483648
  %v891 = vxor.u32 %v889, 2147483648
  %v892 = vmul.f32 %v890, 1.442695
  %v893 = vpow.pop %v892
  %v894 = vmul.f32 %v891, 1.442695
  %v895 = vpow.pop %v894
  %v896 = vadd.f32 %v893, 1.0
  %v897 = vadd.f32 %v895, 1.0
  %v898 = vrcp.pop %v896
  %v899 = vmul.f32 1.0, %v898
  %v900 = vrcp.pop %v897
  %v901 = vmul.f32 1.0, %v900
  %v902 = vtanh.pop %v889
  %v903 = vmul.f32 %v899, %v783
  %v904 = vmul.f32 %v899, %v902
  %906 = vrot.lane.b32.xlu0 %v904, 64
  %v907 = vpop.permute.xlu0 %906
  %v909 = vadd.f32 %v903, %v907
  %v910 = vtanh.pop %v909
  %v911 = vmul.f32 %v901, %v910
  %v912 = vpack.c.bf16 %v911, %v911
  %v914 = vunpack.c.l.b16 %v912
  %v915 = vpack.c.b16 %v914, %v914
  %916 = vrot.lane.b32.xlu0 %v915, 64
  %v917 = vpop.permute.xlu0 %916
  %s919 = scalar_lea.vmem %s5, 12
  %920 = vst.msk [vmem:[%s919] sm:$0xf] %vm541, %v917
  %921 = vrot.lane.b32.xlu0 %v915, 32
  %v922 = vpop.permute.xlu0 %921
  %s924 = scalar_lea.vmem %s57, 16
  %925 = vst.msk [vmem:[%s924] sm:$0xf] %vm541, %v922
  %s926 = smul.addr %s805, 8
  %s927 = scalar_lea.vmem [#allocation2], %s926
  %v928 = vld [vmem:[%s927] sm:$0xff]
  %v929 = vld [vmem:[%s927 + $0x8] sm:$0xff]
  %s930 = smul.addr %s800, 8
  %s931 = scalar_lea.vmem [#allocation3], %s930
  %v932 = vld [vmem:[%s931] sm:$0xff]
  %v933 = vld [vmem:[%s931 + $0x8] sm:$0xff]
  %v934 = vadd.f32 %v928, %v932
  %v935 = vadd.f32 %v929, %v933
  %937 = vrot.lane.b32.xlu0 %v911, 64
  %v938 = vpop.permute.xlu0 %937
  %v939 = vsel %vm431, %v938, 0
  %941 = vmatprep.subr.mxu0 %v402
  %942 = vmatpush1.msra.mxu0 %v401
  %943 = vmatprep.subr.mxu0 %v404
  %944 = vmatpush1.msra.mxu0 %v403
  %945 = vmatprep.subr.mxu0 %v406
  %946 = vmatpush1.msra.mxu0 %v405
  %947 = vmatprep.subr.mxu0 %v408
  %948 = vmatpush1.msra.mxu0 %v407
  %949 = vmatprep.subr.mxu0 %v410
  %950 = vmatpush1.msra.mxu0 %v409
  %951 = vmatprep.subr.mxu0 %v412
  %952 = vmatpush1.msra.mxu0 %v411
  %953 = vmatprep.subr.mxu0 %v414
  %954 = vmatpush1.msra.mxu0 %v413
  %955 = vmatprep.subr.mxu0 %v416
  %956 = vmatpush1.msra.mxu0 %v415
  %957 = vmatprep.subr.mxu0 0.0
  %958 = vmatpush1.msra.mxu0 0.0
  %959 = vmatprep.subr.mxu0 0.0
  %960 = vmatpush1.msra.mxu0 0.0
  %961 = vmatprep.subr.mxu0 0.0
  %962 = vmatpush1.msra.mxu0 0.0
  %963 = vmatprep.subr.mxu0 0.0
  %964 = vmatpush1.msra.mxu0 0.0
  %965 = vmatprep.subr.mxu0 0.0
  %966 = vmatpush1.msra.mxu0 0.0
  %967 = vmatprep.subr.mxu0 0.0
  %968 = vmatpush1.msra.mxu0 0.0
  %969 = vmatprep.subr.mxu0 0.0
  %970 = vmatpush1.msra.mxu0 0.0
  %971 = vmatprep.subr.mxu0 0.0
  %972 = vmatpush1.msra.mxu0 0.0
  %973 = vmatprep.subr.mxu0 0.0
  %974 = vmatpush1.msra.mxu0 0.0
  %975 = vmatprep.subr.mxu0 0.0
  %976 = vmatpush1.msra.mxu0 0.0
  %977 = vmatprep.subr.mxu0 0.0
  %978 = vmatpush1.msra.mxu0 0.0
  %979 = vmatprep.subr.mxu0 0.0
  %980 = vmatpush1.msra.mxu0 0.0
  %981 = vmatprep.subr.mxu0 0.0
  %982 = vmatpush1.msra.mxu0 0.0
  %983 = vmatprep.subr.mxu0 0.0
  %984 = vmatpush1.msra.mxu0 0.0
  %985 = vmatprep.subr.mxu0 0.0
  %986 = vmatpush1.msra.mxu0 0.0
  %987 = vmatprep.subr.mxu0 0.0
  %988 = vmatpush1.msra.mxu0 0.0
  %989 = vmatprep.subr.mxu0 0.0
  %990 = vmatpush1.msra.mxu0 0.0
  %991 = vmatprep.subr.mxu0 0.0
  %992 = vmatpush1.msra.mxu0 0.0
  %993 = vmatprep.subr.mxu0 0.0
  %994 = vmatpush1.msra.mxu0 0.0
  %995 = vmatprep.subr.mxu0 0.0
  %996 = vmatpush1.msra.mxu0 0.0
  %997 = vmatprep.subr.mxu0 0.0
  %998 = vmatpush1.msra.mxu0 0.0
  %999 = vmatprep.subr.mxu0 0.0
  %1000 = vmatpush1.msra.mxu0 0.0
  %1001 = vmatprep.subr.mxu0 0.0
  %1002 = vmatpush1.msra.mxu0 0.0
  %1003 = vmatprep.subr.mxu0 0.0
  %1004 = vmatpush1.msra.mxu0 0.0
  %1005 = vmatprep.mubr.f32.mxu0 0.0
  %1006 = vmatmul.mubr.f32.gmra.mrb[0].mxu0 %v939
  %v1007 = vpop.f32.mrb[0].mxu0
  %v1008 = vadd.f32 0.0, %v1007
  %v1009 = vpop.f32.mrb[0].mxu0
  %v1010 = vadd.f32 0.0, %v1009
  %1011 = vdwg.mxu0
  %v1012 = vadd.f32 %v934, %v1008
  %v1013 = vadd.f32 %v935, %v1010
  %v1014 = vxor.u32 %v1012, 2147483648
  %v1015 = vxor.u32 %v1013, 2147483648
  %v1016 = vmul.f32 %v1014, 1.442695
  %v1017 = vpow.pop %v1016
  %v1018 = vmul.f32 %v1015, 1.442695
  %v1019 = vpow.pop %v1018
  %v1020 = vadd.f32 %v1017, 1.0
  %v1021 = vadd.f32 %v1019, 1.0
  %v1022 = vrcp.pop %v1020
  %v1023 = vmul.f32 1.0, %v1022
  %v1024 = vrcp.pop %v1021
  %v1025 = vmul.f32 1.0, %v1024
  %v1026 = vtanh.pop %v1013
  %v1027 = vmul.f32 %v1023, %v909
  %v1028 = vmul.f32 %v1023, %v1026
  %1030 = vrot.lane.b32.xlu0 %v1028, 64
  %v1031 = vpop.permute.xlu0 %1030
  %v1033 = vadd.f32 %v1027, %v1031
  %v1034 = vtanh.pop %v1033
  %v1035 = vmul.f32 %v1025, %v1034
  %v1036 = vpack.c.bf16 %v1035, %v1035
  %v1038 = vunpack.c.l.b16 %v1036
  %v1039 = vpack.c.b16 %v1038, %v1038
  %1040 = vrot.lane.b32.xlu0 %v1039, 64
  %v1041 = vpop.permute.xlu0 %1040
  %s1043 = scalar_lea.vmem %s5, 16
  %1044 = vst.msk [vmem:[%s1043] sm:$0xf] %vm541, %v1041
  %1045 = vrot.lane.b32.xlu0 %v1039, 32
  %v1046 = vpop.permute.xlu0 %1045
  %s1048 = scalar_lea.vmem %s57, 12
  %1049 = vst.msk [vmem:[%s1048] sm:$0xf] %vm541, %v1046
  %s1050 = smul.addr %s679, 8
  %s1051 = scalar_lea.vmem [#allocation2], %s1050
  %v1052 = vld [vmem:[%s1051] sm:$0xff]
  %v1053 = vld [vmem:[%s1051 + $0x8] sm:$0xff]
  %s1054 = smul.addr %s674, 8
  %s1055 = scalar_lea.vmem [#allocation3], %s1054
  %v1056 = vld [vmem:[%s1055] sm:$0xff]
  %v1057 = vld [vmem:[%s1055 + $0x8] sm:$0xff]
  %v1058 = vadd.f32 %v1052, %v1056
  %v1059 = vadd.f32 %v1053, %v1057
  %1061 = vrot.lane.b32.xlu0 %v1035, 64
  %v1062 = vpop.permute.xlu0 %1061
  %v1063 = vsel %vm431, %v1062, 0
  %1065 = vmatprep.subr.mxu0 %v402
  %1066 = vmatpush1.msra.mxu0 %v401
  %1067 = vmatprep.subr.mxu0 %v404
  %1068 = vmatpush1.msra.mxu0 %v403
  %1069 = vmatprep.subr.mxu0 %v406
  %1070 = vmatpush1.msra.mxu0 %v405
  %1071 = vmatprep.subr.mxu0 %v408
  %1072 = vmatpush1.msra.mxu0 %v407
  %1073 = vmatprep.subr.mxu0 %v410
  %1074 = vmatpush1.msra.mxu0 %v409
  %1075 = vmatprep.subr.mxu0 %v412
  %1076 = vmatpush1.msra.mxu0 %v411
  %1077 = vmatprep.subr.mxu0 %v414
  %1078 = vmatpush1.msra.mxu0 %v413
  %1079 = vmatprep.subr.mxu0 %v416
  %1080 = vmatpush1.msra.mxu0 %v415
  %1081 = vmatprep.subr.mxu0 0.0
  %1082 = vmatpush1.msra.mxu0 0.0
  %1083 = vmatprep.subr.mxu0 0.0
  %1084 = vmatpush1.msra.mxu0 0.0
  %1085 = vmatprep.subr.mxu0 0.0
  %1086 = vmatpush1.msra.mxu0 0.0
  %1087 = vmatprep.subr.mxu0 0.0
  %1088 = vmatpush1.msra.mxu0 0.0
  %1089 = vmatprep.subr.mxu0 0.0
  %1090 = vmatpush1.msra.mxu0 0.0
  %1091 = vmatprep.subr.mxu0 0.0
  %1092 = vmatpush1.msra.mxu0 0.0
  %1093 = vmatprep.subr.mxu0 0.0
  %1094 = vmatpush1.msra.mxu0 0.0
  %1095 = vmatprep.subr.mxu0 0.0
  %1096 = vmatpush1.msra.mxu0 0.0
  %1097 = vmatprep.subr.mxu0 0.0
  %1098 = vmatpush1.msra.mxu0 0.0
  %1099 = vmatprep.subr.mxu0 0.0
  %1100 = vmatpush1.msra.mxu0 0.0
  %1101 = vmatprep.subr.mxu0 0.0
  %1102 = vmatpush1.msra.mxu0 0.0
  %1103 = vmatprep.subr.mxu0 0.0
  %1104 = vmatpush1.msra.mxu0 0.0
  %1105 = vmatprep.subr.mxu0 0.0
  %1106 = vmatpush1.msra.mxu0 0.0
  %1107 = vmatprep.subr.mxu0 0.0
  %1108 = vmatpush1.msra.mxu0 0.0
  %1109 = vmatprep.subr.mxu0 0.0
  %1110 = vmatpush1.msra.mxu0 0.0
  %1111 = vmatprep.subr.mxu0 0.0
  %1112 = vmatpush1.msra.mxu0 0.0
  %1113 = vmatprep.subr.mxu0 0.0
  %1114 = vmatpush1.msra.mxu0 0.0
  %1115 = vmatprep.subr.mxu0 0.0
  %1116 = vmatpush1.msra.mxu0 0.0
  %1117 = vmatprep.subr.mxu0 0.0
  %1118 = vmatpush1.msra.mxu0 0.0
  %1119 = vmatprep.subr.mxu0 0.0
  %1120 = vmatpush1.msra.mxu0 0.0
  %1121 = vmatprep.subr.mxu0 0.0
  %1122 = vmatpush1.msra.mxu0 0.0
  %1123 = vmatprep.subr.mxu0 0.0
  %1124 = vmatpush1.msra.mxu0 0.0
  %1125 = vmatprep.subr.mxu0 0.0
  %1126 = vmatpush1.msra.mxu0 0.0
  %1127 = vmatprep.subr.mxu0 0.0
  %1128 = vmatpush1.msra.mxu0 0.0
  %1129 = vmatprep.mubr.f32.mxu0 0.0
  %1130 = vmatmul.mubr.f32.gmra.mrb[0].mxu0 %v1063
  %v1131 = vpop.f32.mrb[0].mxu0
  %v1132 = vadd.f32 0.0, %v1131
  %v1133 = vpop.f32.mrb[0].mxu0
  %v1134 = vadd.f32 0.0, %v1133
  %1135 = vdwg.mxu0
  %v1136 = vadd.f32 %v1058, %v1132
  %v1137 = vadd.f32 %v1059, %v1134
  %v1138 = vxor.u32 %v1136, 2147483648
  %v1139 = vxor.u32 %v1137, 2147483648
  %v1140 = vmul.f32 %v1138, 1.442695
  %v1141 = vpow.pop %v1140
  %v1142 = vmul.f32 %v1139, 1.442695
  %v1143 = vpow.pop %v1142
  %v1144 = vadd.f32 %v1141, 1.0
  %v1145 = vadd.f32 %v1143, 1.0
  %v1146 = vrcp.pop %v1144
  %v1147 = vmul.f32 1.0, %v1146
  %v1148 = vrcp.pop %v1145
  %v1149 = vmul.f32 1.0, %v1148
  %v1150 = vtanh.pop %v1137
  %v1151 = vmul.f32 %v1147, %v1033
  %v1152 = vmul.f32 %v1147, %v1150
  %1154 = vrot.lane.b32.xlu0 %v1152, 64
  %v1155 = vpop.permute.xlu0 %1154
  %v1157 = vadd.f32 %v1151, %v1155
  %v1158 = vtanh.pop %v1157
  %v1159 = vmul.f32 %v1149, %v1158
  %v1160 = vpack.c.bf16 %v1159, %v1159
  %v1162 = vunpack.c.l.b16 %v1160
  %v1163 = vpack.c.b16 %v1162, %v1162
  %1164 = vrot.lane.b32.xlu0 %v1163, 64
  %v1165 = vpop.permute.xlu0 %1164
  %s1167 = scalar_lea.vmem %s5, 20
  %1168 = vst.msk [vmem:[%s1167] sm:$0xf] %vm541, %v1165
  %1169 = vrot.lane.b32.xlu0 %v1163, 32
  %v1170 = vpop.permute.xlu0 %1169
  %s1172 = scalar_lea.vmem %s57, 8
  %1173 = vst.msk [vmem:[%s1172] sm:$0xf] %vm541, %v1170
  %s1174 = smul.addr %s553, 8
  %s1175 = scalar_lea.vmem [#allocation2], %s1174
  %v1176 = vld [vmem:[%s1175] sm:$0xff]
  %v1177 = vld [vmem:[%s1175 + $0x8] sm:$0xff]
  %s1178 = smul.addr %s548, 8
  %s1179 = scalar_lea.vmem [#allocation3], %s1178
  %v1180 = vld [vmem:[%s1179] sm:$0xff]
  %v1181 = vld [vmem:[%s1179 + $0x8] sm:$0xff]
  %v1182 = vadd.f32 %v1176, %v1180
  %v1183 = vadd.f32 %v1177, %v1181
  %1185 = vrot.lane.b32.xlu0 %v1159, 64
  %v1186 = vpop.permute.xlu0 %1185
  %v1187 = vsel %vm431, %v1186, 0
  %1189 = vmatprep.subr.mxu0 %v402
  %1190 = vmatpush1.msra.mxu0 %v401
  %1191 = vmatprep.subr.mxu0 %v404
  %1192 = vmatpush1.msra.mxu0 %v403
  %1193 = vmatprep.subr.mxu0 %v406
  %1194 = vmatpush1.msra.mxu0 %v405
  %1195 = vmatprep.subr.mxu0 %v408
  %1196 = vmatpush1.msra.mxu0 %v407
  %1197 = vmatprep.subr.mxu0 %v410
  %1198 = vmatpush1.msra.mxu0 %v409
  %1199 = vmatprep.subr.mxu0 %v412
  %1200 = vmatpush1.msra.mxu0 %v411
  %1201 = vmatprep.subr.mxu0 %v414
  %1202 = vmatpush1.msra.mxu0 %v413
  %1203 = vmatprep.subr.mxu0 %v416
  %1204 = vmatpush1.msra.mxu0 %v415
  %1205 = vmatprep.subr.mxu0 0.0
  %1206 = vmatpush1.msra.mxu0 0.0
  %1207 = vmatprep.subr.mxu0 0.0
  %1208 = vmatpush1.msra.mxu0 0.0
  %1209 = vmatprep.subr.mxu0 0.0
  %1210 = vmatpush1.msra.mxu0 0.0
  %1211 = vmatprep.subr.mxu0 0.0
  %1212 = vmatpush1.msra.mxu0 0.0
  %1213 = vmatprep.subr.mxu0 0.0
  %1214 = vmatpush1.msra.mxu0 0.0
  %1215 = vmatprep.subr.mxu0 0.0
  %1216 = vmatpush1.msra.mxu0 0.0
  %1217 = vmatprep.subr.mxu0 0.0
  %1218 = vmatpush1.msra.mxu0 0.0
  %1219 = vmatprep.subr.mxu0 0.0
  %1220 = vmatpush1.msra.mxu0 0.0
  %1221 = vmatprep.subr.mxu0 0.0
  %1222 = vmatpush1.msra.mxu0 0.0
  %1223 = vmatprep.subr.mxu0 0.0
  %1224 = vmatpush1.msra.mxu0 0.0
  %1225 = vmatprep.subr.mxu0 0.0
  %1226 = vmatpush1.msra.mxu0 0.0
  %1227 = vmatprep.subr.mxu0 0.0
  %1228 = vmatpush1.msra.mxu0 0.0
  %1229 = vmatprep.subr.mxu0 0.0
  %1230 = vmatpush1.msra.mxu0 0.0
  %1231 = vmatprep.subr.mxu0 0.0
  %1232 = vmatpush1.msra.mxu0 0.0
  %1233 = vmatprep.subr.mxu0 0.0
  %1234 = vmatpush1.msra.mxu0 0.0
  %1235 = vmatprep.subr.mxu0 0.0
  %1236 = vmatpush1.msra.mxu0 0.0
  %1237 = vmatprep.subr.mxu0 0.0
  %1238 = vmatpush1.msra.mxu0 0.0
  %1239 = vmatprep.subr.mxu0 0.0
  %1240 = vmatpush1.msra.mxu0 0.0
  %1241 = vmatprep.subr.mxu0 0.0
  %1242 = vmatpush1.msra.mxu0 0.0
  %1243 = vmatprep.subr.mxu0 0.0
  %1244 = vmatpush1.msra.mxu0 0.0
  %1245 = vmatprep.subr.mxu0 0.0
  %1246 = vmatpush1.msra.mxu0 0.0
  %1247 = vmatprep.subr.mxu0 0.0
  %1248 = vmatpush1.msra.mxu0 0.0
  %1249 = vmatprep.subr.mxu0 0.0
  %1250 = vmatpush1.msra.mxu0 0.0
  %1251 = vmatprep.subr.mxu0 0.0
  %1252 = vmatpush1.msra.mxu0 0.0
  %1253 = vmatprep.mubr.f32.mxu0 0.0
  %1254 = vmatmul.mubr.f32.gmra.mrb[0].mxu0 %v1187
  %v1255 = vpop.f32.mrb[0].mxu0
  %v1256 = vadd.f32 0.0, %v1255
  %v1257 = vpop.f32.mrb[0].mxu0
  %v1258 = vadd.f32 0.0, %v1257
  %1259 = vdwg.mxu0
  %v1260 = vadd.f32 %v1182, %v1256
  %v1261 = vadd.f32 %v1183, %v1258
  %v1262 = vxor.u32 %v1260, 2147483648
  %v1263 = vxor.u32 %v1261, 2147483648
  %v1264 = vmul.f32 %v1262, 1.442695
  %v1265 = vpow.pop %v1264
  %v1266 = vmul.f32 %v1263, 1.442695
  %v1267 = vpow.pop %v1266
  %v1268 = vadd.f32 %v1265, 1.0
  %v1269 = vadd.f32 %v1267, 1.0
  %v1270 = vrcp.pop %v1268
  %v1271 = vmul.f32 1.0, %v1270
  %v1272 = vrcp.pop %v1269
  %v1273 = vmul.f32 1.0, %v1272
  %v1274 = vtanh.pop %v1261
  %v1275 = vmul.f32 %v1271, %v1157
  %v1276 = vmul.f32 %v1271, %v1274
  %1278 = vrot.lane.b32.xlu0 %v1276, 64
  %v1279 = vpop.permute.xlu0 %1278
  %v1281 = vadd.f32 %v1275, %v1279
  %v1282 = vtanh.pop %v1281
  %v1283 = vmul.f32 %v1273, %v1282
  %v1284 = vpack.c.bf16 %v1283, %v1283
  %v1286 = vunpack.c.l.b16 %v1284
  %v1287 = vpack.c.b16 %v1286, %v1286
  %1288 = vrot.lane.b32.xlu0 %v1287, 64
  %v1289 = vpop.permute.xlu0 %1288
  %s1291 = scalar_lea.vmem %s5, 24
  %1292 = vst.msk [vmem:[%s1291] sm:$0xf] %vm541, %v1289
  %1293 = vrot.lane.b32.xlu0 %v1287, 32
  %v1294 = vpop.permute.xlu0 %1293
  %s1296 = scalar_lea.vmem %s57, 4
  %1297 = vst.msk [vmem:[%s1296] sm:$0xf] %vm541, %v1294
  %s1298 = smul.addr %s424, 8
  %s1299 = scalar_lea.vmem [#allocation2], %s1298
  %v1300 = vld [vmem:[%s1299] sm:$0xff]
  %v1301 = vld [vmem:[%s1299 + $0x8] sm:$0xff]
  %s1302 = smul.addr %s419, 8
  %s1303 = scalar_lea.vmem [#allocation3], %s1302
  %v1304 = vld [vmem:[%s1303] sm:$0xff]
  %v1305 = vld [vmem:[%s1303 + $0x8] sm:$0xff]
  %v1306 = vadd.f32 %v1300, %v1304
  %v1307 = vadd.f32 %v1301, %v1305
  %1309 = vrot.lane.b32.xlu0 %v1283, 64
  %v1310 = vpop.permute.xlu0 %1309
  %v1311 = vsel %vm431, %v1310, 0
  %1313 = vmatprep.subr.mxu0 %v402
  %1314 = vmatpush1.msra.mxu0 %v401
  %1315 = vmatprep.subr.mxu0 %v404
  %1316 = vmatpush1.msra.mxu0 %v403
  %1317 = vmatprep.subr.mxu0 %v406
  %1318 = vmatpush1.msra.mxu0 %v405
  %1319 = vmatprep.subr.mxu0 %v408
  %1320 = vmatpush1.msra.mxu0 %v407
  %1321 = vmatprep.subr.mxu0 %v410
  %1322 = vmatpush1.msra.mxu0 %v409
  %1323 = vmatprep.subr.mxu0 %v412
  %1324 = vmatpush1.msra.mxu0 %v411
  %1325 = vmatprep.subr.mxu0 %v414
  %1326 = vmatpush1.msra.mxu0 %v413
  %1327 = vmatprep.subr.mxu0 %v416
  %1328 = vmatpush1.msra.mxu0 %v415
  %1329 = vmatprep.subr.mxu0 0.0
  %1330 = vmatpush1.msra.mxu0 0.0
  %1331 = vmatprep.subr.mxu0 0.0
  %1332 = vmatpush1.msra.mxu0 0.0
  %1333 = vmatprep.subr.mxu0 0.0
  %1334 = vmatpush1.msra.mxu0 0.0
  %1335 = vmatprep.subr.mxu0 0.0
  %1336 = vmatpush1.msra.mxu0 0.0
  %1337 = vmatprep.subr.mxu0 0.0
  %1338 = vmatpush1.msra.mxu0 0.0
  %1339 = vmatprep.subr.mxu0 0.0
  %1340 = vmatpush1.msra.mxu0 0.0
  %1341 = vmatprep.subr.mxu0 0.0
  %1342 = vmatpush1.msra.mxu0 0.0
  %1343 = vmatprep.subr.mxu0 0.0
  %1344 = vmatpush1.msra.mxu0 0.0
  %1345 = vmatprep.subr.mxu0 0.0
  %1346 = vmatpush1.msra.mxu0 0.0
  %1347 = vmatprep.subr.mxu0 0.0
  %1348 = vmatpush1.msra.mxu0 0.0
  %1349 = vmatprep.subr.mxu0 0.0
  %1350 = vmatpush1.msra.mxu0 0.0
  %1351 = vmatprep.subr.mxu0 0.0
  %1352 = vmatpush1.msra.mxu0 0.0
  %1353 = vmatprep.subr.mxu0 0.0
  %1354 = vmatpush1.msra.mxu0 0.0
  %1355 = vmatprep.subr.mxu0 0.0
  %1356 = vmatpush1.msra.mxu0 0.0
  %1357 = vmatprep.subr.mxu0 0.0
  %1358 = vmatpush1.msra.mxu0 0.0
  %1359 = vmatprep.subr.mxu0 0.0
  %1360 = vmatpush1.msra.mxu0 0.0
  %1361 = vmatprep.subr.mxu0 0.0
  %1362 = vmatpush1.msra.mxu0 0.0
  %1363 = vmatprep.subr.mxu0 0.0
  %1364 = vmatpush1.msra.mxu0 0.0
  %1365 = vmatprep.subr.mxu0 0.0
  %1366 = vmatpush1.msra.mxu0 0.0
  %1367 = vmatprep.subr.mxu0 0.0
  %1368 = vmatpush1.msra.mxu0 0.0
  %1369 = vmatprep.subr.mxu0 0.0
  %1370 = vmatpush1.msra.mxu0 0.0
  %1371 = vmatprep.subr.mxu0 0.0
  %1372 = vmatpush1.msra.mxu0 0.0
  %1373 = vmatprep.subr.mxu0 0.0
  %1374 = vmatpush1.msra.mxu0 0.0
  %1375 = vmatprep.subr.mxu0 0.0
  %1376 = vmatpush1.msra.mxu0 0.0
  %1377 = vmatprep.mubr.f32.mxu0 0.0
  %1378 = vmatmul.mubr.f32.gmra.mrb[0].mxu0 %v1311
  %v1379 = vpop.f32.mrb[0].mxu0
  %v1380 = vadd.f32 0.0, %v1379
  %v1381 = vpop.f32.mrb[0].mxu0
  %v1382 = vadd.f32 0.0, %v1381
  %1383 = vdwg.mxu0
  %v1384 = vadd.f32 %v1306, %v1380
  %v1385 = vadd.f32 %v1307, %v1382
  %v1386 = vxor.u32 %v1384, 2147483648
  %v1387 = vxor.u32 %v1385, 2147483648
  %v1388 = vmul.f32 %v1386, 1.442695
  %v1389 = vpow.pop %v1388
  %v1390 = vmul.f32 %v1387, 1.442695
  %v1391 = vpow.pop %v1390
  %v1392 = vadd.f32 %v1389, 1.0
  %v1393 = vadd.f32 %v1391, 1.0
  %v1394 = vrcp.pop %v1392
  %v1395 = vmul.f32 1.0, %v1394
  %v1396 = vrcp.pop %v1393
  %v1397 = vmul.f32 1.0, %v1396
  %v1398 = vtanh.pop %v1385
  %v1399 = vmul.f32 %v1395, %v1281
  %v1400 = vmul.f32 %v1395, %v1398
  %1402 = vrot.lane.b32.xlu0 %v1400, 64
  %v1403 = vpop.permute.xlu0 %1402
  %v1405 = vadd.f32 %v1399, %v1403
  %v1406 = vtanh.pop %v1405
  %v1407 = vmul.f32 %v1397, %v1406
  %v1408 = vpack.c.bf16 %v1407, %v1407
  %v1410 = vunpack.c.l.b16 %v1408
  %v1411 = vpack.c.b16 %v1410, %v1410
  %1412 = vrot.lane.b32.xlu0 %v1411, 64
  %v1413 = vpop.permute.xlu0 %1412
  %s1415 = scalar_lea.vmem %s5, 28
  %1416 = vst.msk [vmem:[%s1415] sm:$0xf] %vm541, %v1413
  %1417 = vrot.lane.b32.xlu0 %v1411, 32
  %v1418 = vpop.permute.xlu0 %1417
  %1420 = vst.msk [vmem:[%s57] sm:$0xf] %vm541, %v1418
  %1422 = vrot.lane.b32.xlu0 %v1407, 64
  %v1423 = vpop.permute.xlu0 %1422
  %1425 = vst.msk [vmem:[#allocation4] sm:$0xff] %vm431, %v1423
  %1427 = vrot.lane.b32.xlu0 %v1405, 64
  %v1428 = vpop.permute.xlu0 %1427
  %1430 = vst.msk [vmem:[#allocation5] sm:$0xff] %vm431, %v1428
  // Predicated region
  $region26: #{lstm_sec_crf_forward.3} parent=0 // pred_check
    %p1431 = pneg %p61
  $region27: #{lstm_sec_crf_forward.3} parent=0 // pred_check_branch
    %1433 = sbr.rel (%p1431) target = $region29
  $region28: #{lstm_sec_crf_forward.3} parent=0 // pred_region
    %1434 = vst.msk [vmem:[%s7] sm:$0xff] %vm145, %v1423
    %1435 = vrot.lane.b32.xlu0 %v1407, 32
    %v1436 = vpop.permute.xlu0 %1435
    %s1438 = scalar_lea.vmem %s7, 8
    %1439 = vst.msk [vmem:[%s1438] sm:$0xff] %vm145, %v1436
    %1440 = vst.msk [vmem:[%s8] sm:$0xff] %vm145, %v1428
    %1441 = vrot.lane.b32.xlu0 %v1405, 32
    %v1442 = vpop.permute.xlu0 %1441
    %s1444 = scalar_lea.vmem %s8, 8
    %1445 = vst.msk [vmem:[%s1444] sm:$0xff] %vm145, %v1442
  $region29: #{lstm_sec_crf_forward.3} parent=0 // pred_fallthru
    _
  %s1446 = ssub.s32 0, 0
  %s1447 = smul.u32 8, %s1446
  %p1448 = scmp.lt.s32.totalorder %s1447, 7
  %s1449 = scalar_select %p1448, %s1447, 7
  %s1450 = smul.addr %s1449, 4
  %s1451 = scalar_lea.vmem %s6, %s1450
  // Predicated region
  $region30: #{lstm_sec_crf_forward.3} parent=0 // pred_check
    _
  $region31: #{lstm_sec_crf_forward.3} parent=0 // pred_check_branch
    %1453 = sbr.rel (0) target = $region33
  $region32: #{lstm_sec_crf_forward.3} parent=0 // pred_region
    _
  $region33: #{lstm_sec_crf_forward.3} parent=0 // pred_fallthru
    _
  // Predicated region
  $region34: #{lstm_sec_crf_forward.3} parent=0 // pred_check
    _
  $region35: #{lstm_sec_crf_forward.3} parent=0 // pred_check_branch
    %1455 = sbr.rel (0) target = $region37
  $region36: #{lstm_sec_crf_forward.3} parent=0 // pred_region
    %s1456 = ssub.s32 0, 0
    %s1457 = smul.u32 8, %s1456
  $region37: #{lstm_sec_crf_forward.3} parent=0 // pred_fallthru
    _
  // Predicated region
  $region38: #{lstm_sec_crf_forward.3} parent=0 // pred_check
    _
  $region39: #{lstm_sec_crf_forward.3} parent=0 // pred_check_branch
    %1459 = sbr.rel (0) target = $region41
  $region40: #{lstm_sec_crf_forward.3} parent=0 // pred_region
    _
  $region41: #{lstm_sec_crf_forward.3} parent=0 // pred_fallthru
    _
  // Predicated region
  $region42: #{lstm_sec_crf_forward.3} parent=0 // pred_check
    _
  $region43: #{lstm_sec_crf_forward.3} parent=0 // pred_check_branch
    %1461 = sbr.rel (0) target = $region45
  $region44: #{lstm_sec_crf_forward.3} parent=0 // pred_region
    _
  $region45: #{lstm_sec_crf_forward.3} parent=0 // pred_fallthru
    _
  // Predicated region
  $region46: #{lstm_sec_crf_forward.3} parent=0 // pred_check
    _
  $region47: #{lstm_sec_crf_forward.3} parent=0 // pred_check_branch
    %1463 = sbr.rel (0) target = $region49
  $region48: #{lstm_sec_crf_forward.3} parent=0 // pred_region
    _
  $region49: #{lstm_sec_crf_forward.3} parent=0 // pred_fallthru
    _
  // Predicated region
  $region50: #{lstm_sec_crf_forward.3} parent=0 // pred_check
    _
  $region51: #{lstm_sec_crf_forward.3} parent=0 // pred_check_branch
    %1465 = sbr.rel (0) target = $region53
  $region52: #{lstm_sec_crf_forward.3} parent=0 // pred_region
    %s1466 = ssub.s32 0, 0
    %s1467 = smul.u32 8, %s1466
    %p1468 = scmp.lt.s32.totalorder %s1467, 7
    %s1469 = scalar_select %p1468, %s1467, 7
    %s1470 = smul.addr %s1469, 4
    %s1471 = scalar_lea.vmem %s6, %s1470
  $region53: #{lstm_sec_crf_forward.3} parent=0 // pred_fallthru
    _
  // Predicated region
  $region54: #{lstm_sec_crf_forward.3} parent=0 // pred_check
    _
  $region55: #{lstm_sec_crf_forward.3} parent=0 // pred_check_branch
    %1473 = sbr.rel (0) target = $region57
  $region56: #{lstm_sec_crf_forward.3} parent=0 // pred_region
    _
  $region57: #{lstm_sec_crf_forward.3} parent=0 // pred_fallthru
    _
  // Predicated region
  $region58: #{lstm_sec_crf_forward.3} parent=0 // pred_check
    _
  $region59: #{lstm_sec_crf_forward.3} parent=0 // pred_check_branch
    %1475 = sbr.rel (0) target = $region61
  $region60: #{lstm_sec_crf_forward.3} parent=0 // pred_region
    _
  $region61: #{lstm_sec_crf_forward.3} parent=0 // pred_fallthru
    _

// kernel: lstm_sec_crf_forward.4
$region0: #{lstm_sec_crf_forward.4}
  #allocation0 [shape = 'u32[]', space=smem, size = 0x4, offset = 0x4, fixed_abs, tag = 'smem constant byte address 0x4 - core index']
  #allocation1 [shape = 'u32[144,128]{1,0:T(1,128)}', space=vmem, size = 0x12000, scoped, tag = 'internal scratch']
  #allocation2 [shape = 'f32[64,256]{1,0:T(8,128)}', space=vmem, size = 0x10000, scoped, tag = 'scratch operand']
  #allocation3 [shape = 'f32[64,256]{1,0:T(8,128)}', space=vmem, size = 0x10000, scoped, tag = 'scratch operand']
  #allocation4 [shape = 'f32[8,64]{1,0:T(8,128)}', space=vmem, size = 0x1000, scoped, tag = 'scratch operand']
  #allocation5 [shape = 'f32[8,64]{1,0:T(8,128)}', space=vmem, size = 0x1000, scoped, tag = 'scratch operand']
  %s0 = inlined_call_operand.vmem [shape: bf16[64,32], index: 0, kind: input, shape index: {}, may-alias: {0,1}]
  %s1 = inlined_call_operand.vmem [shape: bf16[64,32], index: 1, kind: input, shape index: {}, may-alias: {0,1}]
  %s2 = inlined_call_operand.vmem [shape: bf16[64,32], index: 2, kind: input, shape index: {}, may-alias: {2,3}]
  %s3 = inlined_call_operand.vmem [shape: bf16[64,32], index: 3, kind: input, shape index: {}, may-alias: {2,3}]
  %s4 = inlined_call_operand.vmem [shape: bf16[4,32,256], index: 4, kind: input, shape index: {}]
  %s5 = inlined_call_operand.vmem [shape: f32[64,256], index: 5, kind: input, shape index: {}]
  %s6 = inlined_call_operand.vmem [shape: f32[2,256], index: 6, kind: input, shape index: {}]
  %s7 = inlined_call_operand.vmem [shape: bf16[64,32], index: 7, kind: output, shape index: {0}]
  %s8 = inlined_call_operand.vmem [shape: bf16[64,32], index: 8, kind: output, shape index: {1}]
  %s9 = inlined_call_operand.vmem [shape: f32[2,8,32], index: 9, kind: output, shape index: {2}]
  %s10 = inlined_call_operand.vmem [shape: f32[2,8,32], index: 10, kind: output, shape index: {3}]
  %11 = xla_tuple %s7, %s8, %s9, %s10
  %s12 = sld [smem:[#allocation0]]
  $region70: #{lstm_sec_crf_forward.4} parent=0
    _
  %s14 = ssub.s32 1, %s12
  %s15 = scalar_select 0, %s14, %s12
  // Predicated region
  $region2: #{lstm_sec_crf_forward.4} parent=0 // pred_check
    _
  $region3: #{lstm_sec_crf_forward.4} parent=0 // pred_check_branch
    %17 = sbr.rel (0) target = $region5
  $region4: #{lstm_sec_crf_forward.4} parent=0 // pred_region
    _
  $region5: #{lstm_sec_crf_forward.4} parent=0 // pred_fallthru
    _
  // Predicated region
  $region6: #{lstm_sec_crf_forward.4} parent=0 // pred_check
    _
  $region7: #{lstm_sec_crf_forward.4} parent=0 // pred_check_branch
    %19 = sbr.rel (0) target = $region9
  $region8: #{lstm_sec_crf_forward.4} parent=0 // pred_region
    %s20 = ssub.s32 0, 0
    %s21 = smul.u32 8, %s20
    %p22 = scmp.lt.s32.totalorder %s21, 7
    %s23 = scalar_select %p22, %s21, 7
    %s24 = smul.addr %s23, 4
    %s25 = scalar_lea.vmem %s1, %s24
    %s26 = ssub.s32 0, 0
    %s27 = smul.u32 8, %s26
  $region9: #{lstm_sec_crf_forward.4} parent=0 // pred_fallthru
    _
  // Predicated region
  $region10: #{lstm_sec_crf_forward.4} parent=0 // pred_check
    _
  $region11: #{lstm_sec_crf_forward.4} parent=0 // pred_check_branch
    %29 = sbr.rel (0) target = $region13
  $region12: #{lstm_sec_crf_forward.4} parent=0 // pred_region
    _
  $region13: #{lstm_sec_crf_forward.4} parent=0 // pred_fallthru
    _
  // Predicated region
  $region14: #{lstm_sec_crf_forward.4} parent=0 // pred_check
    _
  $region15: #{lstm_sec_crf_forward.4} parent=0 // pred_check_branch
    %31 = sbr.rel (0) target = $region17
  $region16: #{lstm_sec_crf_forward.4} parent=0 // pred_region
    %s32 = ssub.s32 0, 0
    %s33 = smul.u32 8, %s32
    %p34 = scmp.lt.s32.totalorder %s33, 7
    %s35 = scalar_select %p34, %s33, 7
    %s36 = smul.addr %s35, 4
    %s37 = scalar_lea.vmem %s3, %s36
    %s38 = ssub.s32 0, 0
    %s39 = smul.u32 8, %s38
  $region17: #{lstm_sec_crf_forward.4} parent=0 // pred_fallthru
    _
  // Predicated region
  $region18: #{lstm_sec_crf_forward.4} parent=0 // pred_check
    _
  $region19: #{lstm_sec_crf_forward.4} parent=0 // pred_check_branch
    %41 = sbr.rel (0) target = $region21
  $region20: #{lstm_sec_crf_forward.4} parent=0 // pred_region
    _
  $region21: #{lstm_sec_crf_forward.4} parent=0 // pred_fallthru
    _
  // Predicated region
  $region22: #{lstm_sec_crf_forward.4} parent=0 // pred_check
    _
  $region23: #{lstm_sec_crf_forward.4} parent=0 // pred_check_branch
    %43 = sbr.rel (0) target = $region25
  $region24: #{lstm_sec_crf_forward.4} parent=0 // pred_region
    _
  $region25: #{lstm_sec_crf_forward.4} parent=0 // pred_fallthru
    _
  // Predicated region
  $region26: #{lstm_sec_crf_forward.4} parent=0 // pred_check
    _
  $region27: #{lstm_sec_crf_forward.4} parent=0 // pred_check_branch
    %45 = sbr.rel (0) target = $region29
  $region28: #{lstm_sec_crf_forward.4} parent=0 // pred_region
    _
  $region29: #{lstm_sec_crf_forward.4} parent=0 // pred_fallthru
    _
  %s46 = ssub.s32 0, 0
  %s47 = smul.u32 8, %s46
  %p48 = scmp.lt.s32.totalorder %s47, 7
  %s49 = scalar_select %p48, %s47, 7
  %s50 = smul.addr %s49, 4
  %s51 = scalar_lea.vmem %s1, %s50
  %s52 = ssub.s32 0, 0
  %s53 = smul.u32 8, %s52
  %p54 = scmp.lt.s32.totalorder %s53, 7
  %s55 = scalar_select %p54, %s53, 7
  %s56 = smul.addr %s55, 4
  %s57 = scalar_lea.vmem %s3, %s56
  %s58 = ssub.s32 0, 0
  %s59 = smul.u32 8, %s58
  %p60 = scmp.lt.s32.totalorder %s59, 7
  %s61 = scalar_select %p60, %s59, 7
  %s62 = smul.addr %s61, 4
  %s63 = scalar_lea.vmem %s8, %s62
  %s64 = ssub.s32 0, 0
  %s65 = smul.u32 8, %s64
  %p66 = scmp.lt.s32.totalorder %s65, 7
  %s67 = scalar_select %p66, %s65, 7
  %s68 = smul.addr %s67, 4
  %s69 = scalar_lea.vmem %s1, %s68
  %s70 = ssub.s32 0, 0
  %s71 = smul.u32 8, %s70
  %s72 = ssub.s32 0, 0
  %s73 = smul.u32 8, %s72
  %p74 = scmp.lt.s32.totalorder %s73, 7
  %s75 = scalar_select %p74, %s73, 7
  %s76 = smul.addr %s75, 4
  %s77 = scalar_lea.vmem %s3, %s76
  %s78 = ssub.s32 0, 0
  %s79 = smul.u32 8, %s78
  %s80 = ssub.s32 0, 0
  %s81 = smul.u32 8, %s80
  %p82 = scmp.lt.s32.totalorder %s81, 7
  %s83 = scalar_select %p82, %s81, 7
  %s84 = smul.addr %s83, 4
  %s85 = scalar_lea.vmem %s8, %s84
  %s86 = ssub.s32 0, 0
  %s87 = smul.u32 8, %s86
  %p89 = scmp.eq.s32.totalorder 0, 0
  // Predicated region
  $region30: #{lstm_sec_crf_forward.4} parent=0 // pred_check
    %p90 = pneg %p89
  $region31: #{lstm_sec_crf_forward.4} parent=0 // pred_check_branch
    %92 = sbr.rel (%p90) target = $region33
  $region32: #{lstm_sec_crf_forward.4} parent=0 // pred_region
    %vm93 = vcmask 523264
    %94 = vst.msk [vmem:[#allocation4] sm:$0xff] %vm93, 0.0
    %95 = vst.msk [vmem:[#allocation5] sm:$0xff] %vm93, 0.0
  $region33: #{lstm_sec_crf_forward.4} parent=0 // pred_fallthru
    _
  %v96 = vld [vmem:[%s0] sm:$0xf]
  %v97 = vld [vmem:[%s0 + $0x4] sm:$0xf]
  %v98 = vld [vmem:[%s0 + $0x8] sm:$0xf]
  %v99 = vld [vmem:[%s0 + $0xc] sm:$0xf]
  %v100 = vld [vmem:[%s0 + $0x10] sm:$0xf]
  %v101 = vld [vmem:[%s0 + $0x14] sm:$0xf]
  %v102 = vld [vmem:[%s0 + $0x18] sm:$0xf]
  %v103 = vld [vmem:[%s0 + $0x1c] sm:$0xf]
  %v104 = vld [vmem:[%s4] sm:$0xff]
  %v105 = vld [vmem:[%s4 + $0x8] sm:$0xff]
  %v106 = vld [vmem:[%s4 + $0x10] sm:$0xff]
  %v107 = vld [vmem:[%s4 + $0x18] sm:$0xff]
  %v108 = vld [vmem:[%s69] sm:$0xf]
  %v109 = vld [vmem:[%s69 + $0x4] sm:$0xf]
  %v110 = vld [vmem:[%s69 + $0x8] sm:$0xf]
  %v111 = vld [vmem:[%s69 + $0xc] sm:$0xf]
  %v112 = vld [vmem:[%s69 + $0x10] sm:$0xf]
  %v113 = vld [vmem:[%s69 + $0x14] sm:$0xf]
  %v114 = vld [vmem:[%s69 + $0x18] sm:$0xf]
  %v115 = vld [vmem:[%s69 + $0x1c] sm:$0xf]
  %s116 = scalar_lea.vmem %s4, 32
  %v117 = vld [vmem:[%s116] sm:$0xff]
  %v118 = vld [vmem:[%s116 + $0x8] sm:$0xff]
  %v119 = vld [vmem:[%s116 + $0x10] sm:$0xff]
  %v120 = vld [vmem:[%s116 + $0x18] sm:$0xff]
  %v121 = vld [vmem:[%s2] sm:$0xf]
  %v122 = vld [vmem:[%s2 + $0x4] sm:$0xf]
  %v123 = vld [vmem:[%s2 + $0x8] sm:$0xf]
  %v124 = vld [vmem:[%s2 + $0xc] sm:$0xf]
  %v125 = vld [vmem:[%s2 + $0x10] sm:$0xf]
  %v126 = vld [vmem:[%s2 + $0x14] sm:$0xf]
  %v127 = vld [vmem:[%s2 + $0x18] sm:$0xf]
  %v128 = vld [vmem:[%s2 + $0x1c] sm:$0xf]
  %s129 = scalar_lea.vmem %s4, 64
  %v130 = vld [vmem:[%s129] sm:$0xff]
  %v131 = vld [vmem:[%s129 + $0x8] sm:$0xff]
  %v132 = vld [vmem:[%s129 + $0x10] sm:$0xff]
  %v133 = vld [vmem:[%s129 + $0x18] sm:$0xff]
  %v142 = vunpack.c.l.b16 %v121
  %v143 = vunpack.c.l.b16 %v122
  %v144 = vunpack.c.l.b16 %v123
  %v145 = vunpack.c.l.b16 %v124
  %v146 = vunpack.c.l.b16 %v125
  %v147 = vunpack.c.l.b16 %v126
  %v148 = vunpack.c.l.b16 %v127
  %v149 = vunpack.c.l.b16 %v128
  %v150 = vpack.c.b16 %v143, %v142
  %v151 = vpack.c.b16 %v145, %v144
  %v152 = vpack.c.b16 %v147, %v146
  %v153 = vpack.c.b16 %v149, %v148
  %v158 = vunpack.c.l.b16 %v130
  %v159 = vunpack.c.h.b16 %v130
  %v160 = vunpack.c.l.b16 %v131
  %v161 = vunpack.c.h.b16 %v131
  %v162 = vunpack.c.l.b16 %v132
  %v163 = vunpack.c.h.b16 %v132
  %v164 = vunpack.c.l.b16 %v133
  %v165 = vunpack.c.h.b16 %v133
  %v166 = vpack.c.b16 %v160, %v158
  %v167 = vpack.c.b16 %v161, %v159
  %v168 = vpack.c.b16 %v164, %v162
  %v169 = vpack.c.b16 %v165, %v163
  %vm174 = vcmask 261120
  %v176 = vsel %vm174, %v150, 0
  %v179 = vsel %vm174, %v151, 0
  %v182 = vsel %vm174, %v152, 0
  %v185 = vsel %vm174, %v153, 0
  %187 = vmatprep.subr.bf16.mxu0 %v167
  %188 = vmatpush1.bf16.msra.mxu0 %v166
  %189 = vmatprep.subr.bf16.mxu0 %v169
  %190 = vmatpush1.bf16.msra.mxu0 %v168
  %191 = vmatprep.subr.bf16.mxu0 0
  %192 = vmatpush1.bf16.msra.mxu0 0
  %193 = vmatprep.subr.bf16.mxu0 0
  %194 = vmatpush1.bf16.msra.mxu0 0
  %195 = vmatprep.subr.bf16.mxu0 0
  %196 = vmatpush1.bf16.msra.mxu0 0
  %197 = vmatprep.subr.bf16.mxu0 0
  %198 = vmatpush1.bf16.msra.mxu0 0
  %199 = vmatprep.subr.bf16.mxu0 0
  %200 = vmatpush1.bf16.msra.mxu0 0
  %201 = vmatprep.subr.bf16.mxu0 0
  %202 = vmatpush1.bf16.msra.mxu0 0
  %203 = vmatprep.subr.bf16.mxu0 0
  %204 = vmatpush1.bf16.msra.mxu0 0
  %205 = vmatprep.subr.bf16.mxu0 0
  %206 = vmatpush1.bf16.msra.mxu0 0
  %207 = vmatprep.subr.bf16.mxu0 0
  %208 = vmatpush1.bf16.msra.mxu0 0
  %209 = vmatprep.subr.bf16.mxu0 0
  %210 = vmatpush1.bf16.msra.mxu0 0
  %211 = vmatprep.subr.bf16.mxu0 0
  %212 = vmatpush1.bf16.msra.mxu0 0
  %213 = vmatprep.subr.bf16.mxu0 0
  %214 = vmatpush1.bf16.msra.mxu0 0
  %215 = vmatprep.subr.bf16.mxu0 0
  %216 = vmatpush1.bf16.msra.mxu0 0
  %217 = vmatprep.subr.bf16.mxu0 0
  %218 = vmatpush1.bf16.msra.mxu0 0
  %219 = vmatprep.mubr.bf16.mxu0 0
  %220 = vmatmul.mubr.bf16.gmra.mrb[0].mxu0 %v176
  %v221 = vpop.f32.mrb[0].mxu0
  %v222 = vadd.f32 0.0, %v221
  %v223 = vpop.f32.mrb[0].mxu0
  %v224 = vadd.f32 0.0, %v223
  %v225 = vpop.f32.mrb[0].mxu0
  %v226 = vadd.f32 0.0, %v225
  %v227 = vpop.f32.mrb[0].mxu0
  %v228 = vadd.f32 0.0, %v227
  %229 = vmatprep.mubr.bf16.mxu0 0
  %230 = vmatmul.mubr.bf16.gmra.mrb[0].mxu0 %v179
  %v231 = vpop.f32.mrb[0].mxu0
  %v232 = vadd.f32 0.0, %v231
  %v233 = vpop.f32.mrb[0].mxu0
  %v234 = vadd.f32 0.0, %v233
  %v235 = vpop.f32.mrb[0].mxu0
  %v236 = vadd.f32 0.0, %v235
  %v237 = vpop.f32.mrb[0].mxu0
  %v238 = vadd.f32 0.0, %v237
  %239 = vmatprep.mubr.bf16.mxu0 0
  %240 = vmatmul.mubr.bf16.gmra.mrb[0].mxu0 %v182
  %v241 = vpop.f32.mrb[0].mxu0
  %v242 = vadd.f32 0.0, %v241
  %v243 = vpop.f32.mrb[0].mxu0
  %v244 = vadd.f32 0.0, %v243
  %v245 = vpop.f32.mrb[0].mxu0
  %v246 = vadd.f32 0.0, %v245
  %v247 = vpop.f32.mrb[0].mxu0
  %v248 = vadd.f32 0.0, %v247
  %249 = vmatprep.mubr.bf16.mxu0 0
  %250 = vmatmul.mubr.bf16.gmra.mrb[0].mxu0 %v185
  %v251 = vpop.f32.mrb[0].mxu0
  %v252 = vadd.f32 0.0, %v251
  %v253 = vpop.f32.mrb[0].mxu0
  %v254 = vadd.f32 0.0, %v253
  %v255 = vpop.f32.mrb[0].mxu0
  %v256 = vadd.f32 0.0, %v255
  %v257 = vpop.f32.mrb[0].mxu0
  %v258 = vadd.f32 0.0, %v257
  %259 = vdwg.mxu0
  %v268 = vunpack.c.l.b16 %v96
  %v269 = vunpack.c.l.b16 %v97
  %v270 = vunpack.c.l.b16 %v98
  %v271 = vunpack.c.l.b16 %v99
  %v272 = vunpack.c.l.b16 %v100
  %v273 = vunpack.c.l.b16 %v101
  %v274 = vunpack.c.l.b16 %v102
  %v275 = vunpack.c.l.b16 %v103
  %v276 = vpack.c.b16 %v269, %v268
  %v277 = vpack.c.b16 %v271, %v270
  %v278 = vpack.c.b16 %v273, %v272
  %v279 = vpack.c.b16 %v275, %v274
  %v284 = vunpack.c.l.b16 %v104
  %v285 = vunpack.c.h.b16 %v104
  %v286 = vunpack.c.l.b16 %v105
  %v287 = vunpack.c.h.b16 %v105
  %v288 = vunpack.c.l.b16 %v106
  %v289 = vunpack.c.h.b16 %v106
  %v290 = vunpack.c.l.b16 %v107
  %v291 = vunpack.c.h.b16 %v107
  %v292 = vpack.c.b16 %v286, %v284
  %v293 = vpack.c.b16 %v287, %v285
  %v294 = vpack.c.b16 %v290, %v288
  %v295 = vpack.c.b16 %v291, %v289
  %v301 = vsel %vm174, %v276, 0
  %v304 = vsel %vm174, %v277, 0
  %v307 = vsel %vm174, %v278, 0
  %v310 = vsel %vm174, %v279, 0
  %312 = vmatprep.subr.bf16.mxu0 %v293
  %313 = vmatpush1.bf16.msra.mxu0 %v292
  %314 = vmatprep.subr.bf16.mxu0 %v295
  %315 = vmatpush1.bf16.msra.mxu0 %v294
  %316 = vmatprep.subr.bf16.mxu0 0
  %317 = vmatpush1.bf16.msra.mxu0 0
  %318 = vmatprep.subr.bf16.mxu0 0
  %319 = vmatpush1.bf16.msra.mxu0 0
  %320 = vmatprep.subr.bf16.mxu0 0
  %321 = vmatpush1.bf16.msra.mxu0 0
  %322 = vmatprep.subr.bf16.mxu0 0
  %323 = vmatpush1.bf16.msra.mxu0 0
  %324 = vmatprep.subr.bf16.mxu0 0
  %325 = vmatpush1.bf16.msra.mxu0 0
  %326 = vmatprep.subr.bf16.mxu0 0
  %327 = vmatpush1.bf16.msra.mxu0 0
  %328 = vmatprep.subr.bf16.mxu0 0
  %329 = vmatpush1.bf16.msra.mxu0 0
  %330 = vmatprep.subr.bf16.mxu0 0
  %331 = vmatpush1.bf16.msra.mxu0 0
  %332 = vmatprep.subr.bf16.mxu0 0
  %333 = vmatpush1.bf16.msra.mxu0 0
  %334 = vmatprep.subr.bf16.mxu0 0
  %335 = vmatpush1.bf16.msra.mxu0 0
  %336 = vmatprep.subr.bf16.mxu0 0
  %337 = vmatpush1.bf16.msra.mxu0 0
  %338 = vmatprep.subr.bf16.mxu0 0
  %339 = vmatpush1.bf16.msra.mxu0 0
  %340 = vmatprep.subr.bf16.mxu0 0
  %341 = vmatpush1.bf16.msra.mxu0 0
  %342 = vmatprep.subr.bf16.mxu0 0
  %343 = vmatpush1.bf16.msra.mxu0 0
  %344 = vmatprep.mubr.bf16.mxu0 0
  %345 = vmatmul.mubr.bf16.gmra.mrb[0].mxu0 %v301
  %v346 = vpop.f32.mrb[0].mxu0
  %v347 = vadd.f32 %v222, %v346
  %v348 = vpop.f32.mrb[0].mxu0
  %v349 = vadd.f32 %v224, %v348
  %v350 = vpop.f32.mrb[0].mxu0
  %v351 = vadd.f32 %v226, %v350
  %v352 = vpop.f32.mrb[0].mxu0
  %v353 = vadd.f32 %v228, %v352
  %354 = vmatprep.mubr.bf16.mxu0 0
  %355 = vmatmul.mubr.bf16.gmra.mrb[0].mxu0 %v304
  %v356 = vpop.f32.mrb[0].mxu0
  %v357 = vadd.f32 %v232, %v356
  %v358 = vpop.f32.mrb[0].mxu0
  %v359 = vadd.f32 %v234, %v358
  %v360 = vpop.f32.mrb[0].mxu0
  %v361 = vadd.f32 %v236, %v360
  %v362 = vpop.f32.mrb[0].mxu0
  %v363 = vadd.f32 %v238, %v362
  %364 = vmatprep.mubr.bf16.mxu0 0
  %365 = vmatmul.mubr.bf16.gmra.mrb[0].mxu0 %v307
  %v366 = vpop.f32.mrb[0].mxu0
  %v367 = vadd.f32 %v242, %v366
  %v368 = vpop.f32.mrb[0].mxu0
  %v369 = vadd.f32 %v244, %v368
  %v370 = vpop.f32.mrb[0].mxu0
  %v371 = vadd.f32 %v246, %v370
  %v372 = vpop.f32.mrb[0].mxu0
  %v373 = vadd.f32 %v248, %v372
  %374 = vmatprep.mubr.bf16.mxu0 0
  %375 = vmatmul.mubr.bf16.gmra.mrb[0].mxu0 %v310
  %v376 = vpop.f32.mrb[0].mxu0
  %v377 = vadd.f32 %v252, %v376
  %v378 = vpop.f32.mrb[0].mxu0
  %v379 = vadd.f32 %v254, %v378
  %v380 = vpop.f32.mrb[0].mxu0
  %v381 = vadd.f32 %v256, %v380
  %v382 = vpop.f32.mrb[0].mxu0
  %v383 = vadd.f32 %v258, %v382
  %384 = vdwg.mxu0
  %v385 = vld [vmem:[%s77] sm:$0xf]
  %v386 = vld [vmem:[%s77 + $0x4] sm:$0xf]
  %v387 = vld [vmem:[%s77 + $0x8] sm:$0xf]
  %v388 = vld [vmem:[%s77 + $0xc] sm:$0xf]
  %v389 = vld [vmem:[%s77 + $0x10] sm:$0xf]
  %v390 = vld [vmem:[%s77 + $0x14] sm:$0xf]
  %v391 = vld [vmem:[%s77 + $0x18] sm:$0xf]
  %v392 = vld [vmem:[%s77 + $0x1c] sm:$0xf]
  %s393 = scalar_lea.vmem %s4, 96
  %v394 = vld [vmem:[%s393] sm:$0xff]
  %v395 = vld [vmem:[%s393 + $0x8] sm:$0xff]
  %v396 = vld [vmem:[%s393 + $0x10] sm:$0xff]
  %v397 = vld [vmem:[%s393 + $0x18] sm:$0xff]
  %v406 = vunpack.c.l.b16 %v385
  %v407 = vunpack.c.l.b16 %v386
  %v408 = vunpack.c.l.b16 %v387
  %v409 = vunpack.c.l.b16 %v388
  %v410 = vunpack.c.l.b16 %v389
  %v411 = vunpack.c.l.b16 %v390
  %v412 = vunpack.c.l.b16 %v391
  %v413 = vunpack.c.l.b16 %v392
  %v414 = vpack.c.b16 %v407, %v406
  %v415 = vpack.c.b16 %v409, %v408
  %v416 = vpack.c.b16 %v411, %v410
  %v417 = vpack.c.b16 %v413, %v412
  %v422 = vunpack.c.l.b16 %v394
  %v423 = vunpack.c.h.b16 %v394
  %v424 = vunpack.c.l.b16 %v395
  %v425 = vunpack.c.h.b16 %v395
  %v426 = vunpack.c.l.b16 %v396
  %v427 = vunpack.c.h.b16 %v396
  %v428 = vunpack.c.l.b16 %v397
  %v429 = vunpack.c.h.b16 %v397
  %v430 = vpack.c.b16 %v424, %v422
  %v431 = vpack.c.b16 %v425, %v423
  %v432 = vpack.c.b16 %v428, %v426
  %v433 = vpack.c.b16 %v429, %v427
  %v439 = vsel %vm174, %v414, 0
  %v442 = vsel %vm174, %v415, 0
  %v445 = vsel %vm174, %v416, 0
  %v448 = vsel %vm174, %v417, 0
  %450 = vmatprep.subr.bf16.mxu0 %v431
  %451 = vmatpush1.bf16.msra.mxu0 %v430
  %452 = vmatprep.subr.bf16.mxu0 %v433
  %453 = vmatpush1.bf16.msra.mxu0 %v432
  %454 = vmatprep.subr.bf16.mxu0 0
  %455 = vmatpush1.bf16.msra.mxu0 0
  %456 = vmatprep.subr.bf16.mxu0 0
  %457 = vmatpush1.bf16.msra.mxu0 0
  %458 = vmatprep.subr.bf16.mxu0 0
  %459 = vmatpush1.bf16.msra.mxu0 0
  %460 = vmatprep.subr.bf16.mxu0 0
  %461 = vmatpush1.bf16.msra.mxu0 0
  %462 = vmatprep.subr.bf16.mxu0 0
  %463 = vmatpush1.bf16.msra.mxu0 0
  %464 = vmatprep.subr.bf16.mxu0 0
  %465 = vmatpush1.bf16.msra.mxu0 0
  %466 = vmatprep.subr.bf16.mxu0 0
  %467 = vmatpush1.bf16.msra.mxu0 0
  %468 = vmatprep.subr.bf16.mxu0 0
  %469 = vmatpush1.bf16.msra.mxu0 0
  %470 = vmatprep.subr.bf16.mxu0 0
  %471 = vmatpush1.bf16.msra.mxu0 0
  %472 = vmatprep.subr.bf16.mxu0 0
  %473 = vmatpush1.bf16.msra.mxu0 0
  %474 = vmatprep.subr.bf16.mxu0 0
  %475 = vmatpush1.bf16.msra.mxu0 0
  %476 = vmatprep.subr.bf16.mxu0 0
  %477 = vmatpush1.bf16.msra.mxu0 0
  %478 = vmatprep.subr.bf16.mxu0 0
  %479 = vmatpush1.bf16.msra.mxu0 0
  %480 = vmatprep.subr.bf16.mxu0 0
  %481 = vmatpush1.bf16.msra.mxu0 0
  %482 = vmatprep.mubr.bf16.mxu0 0
  %483 = vmatmul.mubr.bf16.gmra.mrb[0].mxu0 %v439
  %v484 = vpop.f32.mrb[0].mxu0
  %v485 = vadd.f32 0.0, %v484
  %v486 = vpop.f32.mrb[0].mxu0
  %v487 = vadd.f32 0.0, %v486
  %v488 = vpop.f32.mrb[0].mxu0
  %v489 = vadd.f32 0.0, %v488
  %v490 = vpop.f32.mrb[0].mxu0
  %v491 = vadd.f32 0.0, %v490
  %492 = vmatprep.mubr.bf16.mxu0 0
  %493 = vmatmul.mubr.bf16.gmra.mrb[0].mxu0 %v442
  %v494 = vpop.f32.mrb[0].mxu0
  %v495 = vadd.f32 0.0, %v494
  %v496 = vpop.f32.mrb[0].mxu0
  %v497 = vadd.f32 0.0, %v496
  %v498 = vpop.f32.mrb[0].mxu0
  %v499 = vadd.f32 0.0, %v498
  %v500 = vpop.f32.mrb[0].mxu0
  %v501 = vadd.f32 0.0, %v500
  %502 = vmatprep.mubr.bf16.mxu0 0
  %503 = vmatmul.mubr.bf16.gmra.mrb[0].mxu0 %v445
  %v504 = vpop.f32.mrb[0].mxu0
  %v505 = vadd.f32 0.0, %v504
  %v506 = vpop.f32.mrb[0].mxu0
  %v507 = vadd.f32 0.0, %v506
  %v508 = vpop.f32.mrb[0].mxu0
  %v509 = vadd.f32 0.0, %v508
  %v510 = vpop.f32.mrb[0].mxu0
  %v511 = vadd.f32 0.0, %v510
  %512 = vmatprep.mubr.bf16.mxu0 0
  %513 = vmatmul.mubr.bf16.gmra.mrb[0].mxu0 %v448
  %v514 = vpop.f32.mrb[0].mxu0
  %v515 = vadd.f32 0.0, %v514
  %v516 = vpop.f32.mrb[0].mxu0
  %v517 = vadd.f32 0.0, %v516
  %v518 = vpop.f32.mrb[0].mxu0
  %v519 = vadd.f32 0.0, %v518
  %v520 = vpop.f32.mrb[0].mxu0
  %v521 = vadd.f32 0.0, %v520
  %522 = vdwg.mxu0
  %v531 = vunpack.c.l.b16 %v108
  %v532 = vunpack.c.l.b16 %v109
  %v533 = vunpack.c.l.b16 %v110
  %v534 = vunpack.c.l.b16 %v111
  %v535 = vunpack.c.l.b16 %v112
  %v536 = vunpack.c.l.b16 %v113
  %v537 = vunpack.c.l.b16 %v114
  %v538 = vunpack.c.l.b16 %v115
  %v539 = vpack.c.b16 %v532, %v531
  %v540 = vpack.c.b16 %v534, %v533
  %v541 = vpack.c.b16 %v536, %v535
  %v542 = vpack.c.b16 %v538, %v537
  %v547 = vunpack.c.l.b16 %v117
  %v548 = vunpack.c.h.b16 %v117
  %v549 = vunpack.c.l.b16 %v118
  %v550 = vunpack.c.h.b16 %v118
  %v551 = vunpack.c.l.b16 %v119
  %v552 = vunpack.c.h.b16 %v119
  %v553 = vunpack.c.l.b16 %v120
  %v554 = vunpack.c.h.b16 %v120
  %v555 = vpack.c.b16 %v549, %v547
  %v556 = vpack.c.b16 %v550, %v548
  %v557 = vpack.c.b16 %v553, %v551
  %v558 = vpack.c.b16 %v554, %v552
  %v564 = vsel %vm174, %v539, 0
  %v567 = vsel %vm174, %v540, 0
  %v570 = vsel %vm174, %v541, 0
  %v573 = vsel %vm174, %v542, 0
  %575 = vmatprep.subr.bf16.mxu0 %v556
  %576 = vmatpush1.bf16.msra.mxu0 %v555
  %577 = vmatprep.subr.bf16.mxu0 %v558
  %578 = vmatpush1.bf16.msra.mxu0 %v557
  %579 = vmatprep.subr.bf16.mxu0 0
  %580 = vmatpush1.bf16.msra.mxu0 0
  %581 = vmatprep.subr.bf16.mxu0 0
  %582 = vmatpush1.bf16.msra.mxu0 0
  %583 = vmatprep.subr.bf16.mxu0 0
  %584 = vmatpush1.bf16.msra.mxu0 0
  %585 = vmatprep.subr.bf16.mxu0 0
  %586 = vmatpush1.bf16.msra.mxu0 0
  %587 = vmatprep.subr.bf16.mxu0 0
  %588 = vmatpush1.bf16.msra.mxu0 0
  %589 = vmatprep.subr.bf16.mxu0 0
  %590 = vmatpush1.bf16.msra.mxu0 0
  %591 = vmatprep.subr.bf16.mxu0 0
  %592 = vmatpush1.bf16.msra.mxu0 0
  %593 = vmatprep.subr.bf16.mxu0 0
  %594 = vmatpush1.bf16.msra.mxu0 0
  %595 = vmatprep.subr.bf16.mxu0 0
  %596 = vmatpush1.bf16.msra.mxu0 0
  %597 = vmatprep.subr.bf16.mxu0 0
  %598 = vmatpush1.bf16.msra.mxu0 0
  %599 = vmatprep.subr.bf16.mxu0 0
  %600 = vmatpush1.bf16.msra.mxu0 0
  %601 = vmatprep.subr.bf16.mxu0 0
  %602 = vmatpush1.bf16.msra.mxu0 0
  %603 = vmatprep.subr.bf16.mxu0 0
  %604 = vmatpush1.bf16.msra.mxu0 0
  %605 = vmatprep.subr.bf16.mxu0 0
  %606 = vmatpush1.bf16.msra.mxu0 0
  %607 = vmatprep.mubr.bf16.mxu0 0
  %608 = vmatmul.mubr.bf16.gmra.mrb[0].mxu0 %v564
  %v609 = vpop.f32.mrb[0].mxu0
  %v610 = vadd.f32 %v485, %v609
  %v611 = vpop.f32.mrb[0].mxu0
  %v612 = vadd.f32 %v487, %v611
  %v613 = vpop.f32.mrb[0].mxu0
  %v614 = vadd.f32 %v489, %v613
  %v615 = vpop.f32.mrb[0].mxu0
  %v616 = vadd.f32 %v491, %v615
  %617 = vmatprep.mubr.bf16.mxu0 0
  %618 = vmatmul.mubr.bf16.gmra.mrb[0].mxu0 %v567
  %v619 = vpop.f32.mrb[0].mxu0
  %v620 = vadd.f32 %v495, %v619
  %v621 = vpop.f32.mrb[0].mxu0
  %v622 = vadd.f32 %v497, %v621
  %v623 = vpop.f32.mrb[0].mxu0
  %v624 = vadd.f32 %v499, %v623
  %v625 = vpop.f32.mrb[0].mxu0
  %v626 = vadd.f32 %v501, %v625
  %627 = vmatprep.mubr.bf16.mxu0 0
  %628 = vmatmul.mubr.bf16.gmra.mrb[0].mxu0 %v570
  %v629 = vpop.f32.mrb[0].mxu0
  %v630 = vadd.f32 %v505, %v629
  %v631 = vpop.f32.mrb[0].mxu0
  %v632 = vadd.f32 %v507, %v631
  %v633 = vpop.f32.mrb[0].mxu0
  %v634 = vadd.f32 %v509, %v633
  %v635 = vpop.f32.mrb[0].mxu0
  %v636 = vadd.f32 %v511, %v635
  %637 = vmatprep.mubr.bf16.mxu0 0
  %638 = vmatmul.mubr.bf16.gmra.mrb[0].mxu0 %v573
  %v639 = vpop.f32.mrb[0].mxu0
  %v640 = vadd.f32 %v515, %v639
  %v641 = vpop.f32.mrb[0].mxu0
  %v642 = vadd.f32 %v517, %v641
  %v643 = vpop.f32.mrb[0].mxu0
  %v644 = vadd.f32 %v519, %v643
  %v645 = vpop.f32.mrb[0].mxu0
  %v646 = vadd.f32 %v521, %v645
  %647 = vdwg.mxu0
  %v648 = vld [vmem:[%s6] ss:$2 sm:$0x3]
  %v650 = vlaneseq
  %v651 = vshrl.u32 %v650, 7
  %v652 = vsub.s32 0, %v651
  %v653 = vrot.slane %v648, %v652
  %v654 = vlaneseq
  %v655 = vshrl.u32 %v654, 7
  %v656 = vsub.s32 1, %v655
  %v657 = vrot.slane %v648, %v656
  %v660 = vadd.f32 %v347, %v653
  %v661 = vadd.f32 %v349, %v657
  %v662 = vadd.f32 %v351, %v653
  %v663 = vadd.f32 %v353, %v657
  %v664 = vadd.f32 %v357, %v653
  %v665 = vadd.f32 %v359, %v657
  %v666 = vadd.f32 %v361, %v653
  %v667 = vadd.f32 %v363, %v657
  %v668 = vadd.f32 %v367, %v653
  %v669 = vadd.f32 %v369, %v657
  %v670 = vadd.f32 %v371, %v653
  %v671 = vadd.f32 %v373, %v657
  %v672 = vadd.f32 %v377, %v653
  %v673 = vadd.f32 %v379, %v657
  %v674 = vadd.f32 %v381, %v653
  %v675 = vadd.f32 %v383, %v657
  %676 = vst [vmem:[#allocation2] sm:$0xff] %v660
  %677 = vst [vmem:[#allocation2 + $0x8] sm:$0xff] %v661
  %678 = vst [vmem:[#allocation2 + $0x10] sm:$0xff] %v662
  %679 = vst [vmem:[#allocation2 + $0x18] sm:$0xff] %v663
  %680 = vst [vmem:[#allocation2 + $0x20] sm:$0xff] %v664
  %681 = vst [vmem:[#allocation2 + $0x28] sm:$0xff] %v665
  %682 = vst [vmem:[#allocation2 + $0x30] sm:$0xff] %v666
  %683 = vst [vmem:[#allocation2 + $0x38] sm:$0xff] %v667
  %684 = vst [vmem:[#allocation2 + $0x40] sm:$0xff] %v668
  %685 = vst [vmem:[#allocation2 + $0x48] sm:$0xff] %v669
  %686 = vst [vmem:[#allocation2 + $0x50] sm:$0xff] %v670
  %687 = vst [vmem:[#allocation2 + $0x58] sm:$0xff] %v671
  %688 = vst [vmem:[#allocation2 + $0x60] sm:$0xff] %v672
  %689 = vst [vmem:[#allocation2 + $0x68] sm:$0xff] %v673
  %690 = vst [vmem:[#allocation2 + $0x70] sm:$0xff] %v674
  %691 = vst [vmem:[#allocation2 + $0x78] sm:$0xff] %v675
  %s692 = scalar_lea.vmem %s6, 1
  %v693 = vld [vmem:[%s692] ss:$2 sm:$0x3]
  %v695 = vlaneseq
  %v696 = vshrl.u32 %v695, 7
  %v697 = vsub.s32 0, %v696
  %v698 = vrot.slane %v693, %v697
  %v699 = vlaneseq
  %v700 = vshrl.u32 %v699, 7
  %v701 = vsub.s32 1, %v700
  %v702 = vrot.slane %v693, %v701
  %v705 = vadd.f32 %v610, %v698
  %v706 = vadd.f32 %v612, %v702
  %v707 = vadd.f32 %v614, %v698
  %v708 = vadd.f32 %v616, %v702
  %v709 = vadd.f32 %v620, %v698
  %v710 = vadd.f32 %v622, %v702
  %v711 = vadd.f32 %v624, %v698
  %v712 = vadd.f32 %v626, %v702
  %v713 = vadd.f32 %v630, %v698
  %v714 = vadd.f32 %v632, %v702
  %v715 = vadd.f32 %v634, %v698
  %v716 = vadd.f32 %v636, %v702
  %v717 = vadd.f32 %v640, %v698
  %v718 = vadd.f32 %v642, %v702
  %v719 = vadd.f32 %v644, %v698
  %v720 = vadd.f32 %v646, %v702
  %721 = vst [vmem:[#allocation3] sm:$0xff] %v705
  %722 = vst [vmem:[#allocation3 + $0x8] sm:$0xff] %v706
  %723 = vst [vmem:[#allocation3 + $0x10] sm:$0xff] %v707
  %724 = vst [vmem:[#allocation3 + $0x18] sm:$0xff] %v708
  %725 = vst [vmem:[#allocation3 + $0x20] sm:$0xff] %v709
  %726 = vst [vmem:[#allocation3 + $0x28] sm:$0xff] %v710
  %727 = vst [vmem:[#allocation3 + $0x30] sm:$0xff] %v711
  %728 = vst [vmem:[#allocation3 + $0x38] sm:$0xff] %v712
  %729 = vst [vmem:[#allocation3 + $0x40] sm:$0xff] %v713
  %730 = vst [vmem:[#allocation3 + $0x48] sm:$0xff] %v714
  %731 = vst [vmem:[#allocation3 + $0x50] sm:$0xff] %v715
  %732 = vst [vmem:[#allocation3 + $0x58] sm:$0xff] %v716
  %733 = vst [vmem:[#allocation3 + $0x60] sm:$0xff] %v717
  %734 = vst [vmem:[#allocation3 + $0x68] sm:$0xff] %v718
  %735 = vst [vmem:[#allocation3 + $0x70] sm:$0xff] %v719
  %736 = vst [vmem:[#allocation3 + $0x78] sm:$0xff] %v720
  %v737 = vld [vmem:[%s5] sm:$0xff]
  %v738 = vld [vmem:[%s5 + $0x8] sm:$0xff]
  %v739 = vld [vmem:[%s5 + $0x10] sm:$0xff]
  %v740 = vld [vmem:[%s5 + $0x18] sm:$0xff]
  %v741 = vld [vmem:[%s5 + $0x20] sm:$0xff]
  %v742 = vld [vmem:[%s5 + $0x28] sm:$0xff]
  %v743 = vld [vmem:[%s5 + $0x30] sm:$0xff]
  %v744 = vld [vmem:[%s5 + $0x38] sm:$0xff]
  %v745 = vld [vmem:[%s5 + $0x40] sm:$0xff]
  %v746 = vld [vmem:[%s5 + $0x48] sm:$0xff]
  %v747 = vld [vmem:[%s5 + $0x50] sm:$0xff]
  %v748 = vld [vmem:[%s5 + $0x58] sm:$0xff]
  %v749 = vld [vmem:[%s5 + $0x60] sm:$0xff]
  %v750 = vld [vmem:[%s5 + $0x68] sm:$0xff]
  %v751 = vld [vmem:[%s5 + $0x70] sm:$0xff]
  %v752 = vld [vmem:[%s5 + $0x78] sm:$0xff]
  %v753 = vld [vmem:[#allocation4] sm:$0xff]
  %v754 = vld [vmem:[#allocation5] sm:$0xff]
  %s755 = smul.u32 0, 2
  %s756 = smul.addr %s755, 8
  %s757 = scalar_lea.vmem [#allocation2], %s756
  %v758 = vld [vmem:[%s757] sm:$0xff]
  %v759 = vld [vmem:[%s757 + $0x8] sm:$0xff]
  %s760 = smul.u32 7, 2
  %s761 = smul.addr %s760, 8
  %s762 = scalar_lea.vmem [#allocation3], %s761
  %v763 = vld [vmem:[%s762] sm:$0xff]
  %v764 = vld [vmem:[%s762 + $0x8] sm:$0xff]
  %v765 = vadd.f32 %v758, %v763
  %v766 = vadd.f32 %v759, %v764
  %vm767 = vcmask 523264
  %v769 = vsel %vm767, %v753, 0
  %771 = vmatprep.subr.mxu0 %v738
  %772 = vmatpush1.msra.mxu0 %v737
  %773 = vmatprep.subr.mxu0 %v740
  %774 = vmatpush1.msra.mxu0 %v739
  %775 = vmatprep.subr.mxu0 %v742
  %776 = vmatpush1.msra.mxu0 %v741
  %777 = vmatprep.subr.mxu0 %v744
  %778 = vmatpush1.msra.mxu0 %v743
  %779 = vmatprep.subr.mxu0 %v746
  %780 = vmatpush1.msra.mxu0 %v745
  %781 = vmatprep.subr.mxu0 %v748
  %782 = vmatpush1.msra.mxu0 %v747
  %783 = vmatprep.subr.mxu0 %v750
  %784 = vmatpush1.msra.mxu0 %v749
  %785 = vmatprep.subr.mxu0 %v752
  %786 = vmatpush1.msra.mxu0 %v751
  %787 = vmatprep.subr.mxu0 0.0
  %788 = vmatpush1.msra.mxu0 0.0
  %789 = vmatprep.subr.mxu0 0.0
  %790 = vmatpush1.msra.mxu0 0.0
  %791 = vmatprep.subr.mxu0 0.0
  %792 = vmatpush1.msra.mxu0 0.0
  %793 = vmatprep.subr.mxu0 0.0
  %794 = vmatpush1.msra.mxu0 0.0
  %795 = vmatprep.subr.mxu0 0.0
  %796 = vmatpush1.msra.mxu0 0.0
  %797 = vmatprep.subr.mxu0 0.0
  %798 = vmatpush1.msra.mxu0 0.0
  %799 = vmatprep.subr.mxu0 0.0
  %800 = vmatpush1.msra.mxu0 0.0
  %801 = vmatprep.subr.mxu0 0.0
  %802 = vmatpush1.msra.mxu0 0.0
  %803 = vmatprep.subr.mxu0 0.0
  %804 = vmatpush1.msra.mxu0 0.0
  %805 = vmatprep.subr.mxu0 0.0
  %806 = vmatpush1.msra.mxu0 0.0
  %807 = vmatprep.subr.mxu0 0.0
  %808 = vmatpush1.msra.mxu0 0.0
  %809 = vmatprep.subr.mxu0 0.0
  %810 = vmatpush1.msra.mxu0 0.0
  %811 = vmatprep.subr.mxu0 0.0
  %812 = vmatpush1.msra.mxu0 0.0
  %813 = vmatprep.subr.mxu0 0.0
  %814 = vmatpush1.msra.mxu0 0.0
  %815 = vmatprep.subr.mxu0 0.0
  %816 = vmatpush1.msra.mxu0 0.0
  %817 = vmatprep.subr.mxu0 0.0
  %818 = vmatpush1.msra.mxu0 0.0
  %819 = vmatprep.subr.mxu0 0.0
  %820 = vmatpush1.msra.mxu0 0.0
  %821 = vmatprep.subr.mxu0 0.0
  %822 = vmatpush1.msra.mxu0 0.0
  %823 = vmatprep.subr.mxu0 0.0
  %824 = vmatpush1.msra.mxu0 0.0
  %825 = vmatprep.subr.mxu0 0.0
  %826 = vmatpush1.msra.mxu0 0.0
  %827 = vmatprep.subr.mxu0 0.0
  %828 = vmatpush1.msra.mxu0 0.0
  %829 = vmatprep.subr.mxu0 0.0
  %830 = vmatpush1.msra.mxu0 0.0
  %831 = vmatprep.subr.mxu0 0.0
  %832 = vmatpush1.msra.mxu0 0.0
  %833 = vmatprep.subr.mxu0 0.0
  %834 = vmatpush1.msra.mxu0 0.0
  %835 = vmatprep.mubr.f32.mxu0 0.0
  %836 = vmatmul.mubr.f32.gmra.mrb[0].mxu0 %v769
  %v837 = vpop.f32.mrb[0].mxu0
  %v838 = vadd.f32 0.0, %v837
  %v839 = vpop.f32.mrb[0].mxu0
  %v840 = vadd.f32 0.0, %v839
  %841 = vdwg.mxu0
  %v842 = vadd.f32 %v765, %v838
  %v843 = vadd.f32 %v766, %v840
  %v844 = vxor.u32 %v842, 2147483648
  %v845 = vxor.u32 %v843, 2147483648
  %v846 = vmul.f32 %v844, 1.442695
  %v847 = vpow.pop %v846
  %v848 = vmul.f32 %v845, 1.442695
  %v849 = vpow.pop %v848
  %v850 = vadd.f32 %v847, 1.0
  %v851 = vadd.f32 %v849, 1.0
  %v852 = vrcp.pop %v850
  %v853 = vmul.f32 1.0, %v852
  %v854 = vrcp.pop %v851
  %v855 = vmul.f32 1.0, %v854
  %v856 = vtanh.pop %v843
  %858 = vrot.lane.b32.xlu0 %v754, 64
  %v859 = vpop.permute.xlu0 %858
  %v861 = vmul.f32 %v853, %v859
  %v862 = vmul.f32 %v853, %v856
  %864 = vrot.lane.b32.xlu0 %v862, 64
  %v865 = vpop.permute.xlu0 %864
  %v867 = vadd.f32 %v861, %v865
  %v868 = vtanh.pop %v867
  %v869 = vmul.f32 %v855, %v868
  %v870 = vpack.c.bf16 %v869, %v869
  %v872 = vunpack.c.l.b16 %v870
  %v873 = vpack.c.b16 %v872, %v872
  %874 = vrot.lane.b32.xlu0 %v873, 64
  %v875 = vpop.permute.xlu0 %874
  %vm877 = vcmask 257024
  %878 = vst.msk [vmem:[%s7] sm:$0xf] %vm877, %v875
  %879 = vrot.lane.b32.xlu0 %v873, 32
  %v880 = vpop.permute.xlu0 %879
  %s882 = scalar_lea.vmem %s85, 28
  %883 = vst.msk [vmem:[%s882] sm:$0xf] %vm877, %v880
  %s884 = smul.u32 1, 2
  %s885 = smul.addr %s884, 8
  %s886 = scalar_lea.vmem [#allocation2], %s885
  %v887 = vld [vmem:[%s886] sm:$0xff]
  %v888 = vld [vmem:[%s886 + $0x8] sm:$0xff]
  %s889 = smul.u32 6, 2
  %s890 = smul.addr %s889, 8
  %s891 = scalar_lea.vmem [#allocation3], %s890
  %v892 = vld [vmem:[%s891] sm:$0xff]
  %v893 = vld [vmem:[%s891 + $0x8] sm:$0xff]
  %v894 = vadd.f32 %v887, %v892
  %v895 = vadd.f32 %v888, %v893
  %897 = vrot.lane.b32.xlu0 %v869, 64
  %v898 = vpop.permute.xlu0 %897
  %v899 = vsel %vm767, %v898, 0
  %901 = vmatprep.subr.mxu0 %v738
  %902 = vmatpush1.msra.mxu0 %v737
  %903 = vmatprep.subr.mxu0 %v740
  %904 = vmatpush1.msra.mxu0 %v739
  %905 = vmatprep.subr.mxu0 %v742
  %906 = vmatpush1.msra.mxu0 %v741
  %907 = vmatprep.subr.mxu0 %v744
  %908 = vmatpush1.msra.mxu0 %v743
  %909 = vmatprep.subr.mxu0 %v746
  %910 = vmatpush1.msra.mxu0 %v745
  %911 = vmatprep.subr.mxu0 %v748
  %912 = vmatpush1.msra.mxu0 %v747
  %913 = vmatprep.subr.mxu0 %v750
  %914 = vmatpush1.msra.mxu0 %v749
  %915 = vmatprep.subr.mxu0 %v752
  %916 = vmatpush1.msra.mxu0 %v751
  %917 = vmatprep.subr.mxu0 0.0
  %918 = vmatpush1.msra.mxu0 0.0
  %919 = vmatprep.subr.mxu0 0.0
  %920 = vmatpush1.msra.mxu0 0.0
  %921 = vmatprep.subr.mxu0 0.0
  %922 = vmatpush1.msra.mxu0 0.0
  %923 = vmatprep.subr.mxu0 0.0
  %924 = vmatpush1.msra.mxu0 0.0
  %925 = vmatprep.subr.mxu0 0.0
  %926 = vmatpush1.msra.mxu0 0.0
  %927 = vmatprep.subr.mxu0 0.0
  %928 = vmatpush1.msra.mxu0 0.0
  %929 = vmatprep.subr.mxu0 0.0
  %930 = vmatpush1.msra.mxu0 0.0
  %931 = vmatprep.subr.mxu0 0.0
  %932 = vmatpush1.msra.mxu0 0.0
  %933 = vmatprep.subr.mxu0 0.0
  %934 = vmatpush1.msra.mxu0 0.0
  %935 = vmatprep.subr.mxu0 0.0
  %936 = vmatpush1.msra.mxu0 0.0
  %937 = vmatprep.subr.mxu0 0.0
  %938 = vmatpush1.msra.mxu0 0.0
  %939 = vmatprep.subr.mxu0 0.0
  %940 = vmatpush1.msra.mxu0 0.0
  %941 = vmatprep.subr.mxu0 0.0
  %942 = vmatpush1.msra.mxu0 0.0
  %943 = vmatprep.subr.mxu0 0.0
  %944 = vmatpush1.msra.mxu0 0.0
  %945 = vmatprep.subr.mxu0 0.0
  %946 = vmatpush1.msra.mxu0 0.0
  %947 = vmatprep.subr.mxu0 0.0
  %948 = vmatpush1.msra.mxu0 0.0
  %949 = vmatprep.subr.mxu0 0.0
  %950 = vmatpush1.msra.mxu0 0.0
  %951 = vmatprep.subr.mxu0 0.0
  %952 = vmatpush1.msra.mxu0 0.0
  %953 = vmatprep.subr.mxu0 0.0
  %954 = vmatpush1.msra.mxu0 0.0
  %955 = vmatprep.subr.mxu0 0.0
  %956 = vmatpush1.msra.mxu0 0.0
  %957 = vmatprep.subr.mxu0 0.0
  %958 = vmatpush1.msra.mxu0 0.0
  %959 = vmatprep.subr.mxu0 0.0
  %960 = vmatpush1.msra.mxu0 0.0
  %961 = vmatprep.subr.mxu0 0.0
  %962 = vmatpush1.msra.mxu0 0.0
  %963 = vmatprep.subr.mxu0 0.0
  %964 = vmatpush1.msra.mxu0 0.0
  %965 = vmatprep.mubr.f32.mxu0 0.0
  %966 = vmatmul.mubr.f32.gmra.mrb[0].mxu0 %v899
  %v967 = vpop.f32.mrb[0].mxu0
  %v968 = vadd.f32 0.0, %v967
  %v969 = vpop.f32.mrb[0].mxu0
  %v970 = vadd.f32 0.0, %v969
  %971 = vdwg.mxu0
  %v972 = vadd.f32 %v894, %v968
  %v973 = vadd.f32 %v895, %v970
  %v974 = vxor.u32 %v972, 2147483648
  %v975 = vxor.u32 %v973, 2147483648
  %v976 = vmul.f32 %v974, 1.442695
  %v977 = vpow.pop %v976
  %v978 = vmul.f32 %v975, 1.442695
  %v979 = vpow.pop %v978
  %v980 = vadd.f32 %v977, 1.0
  %v981 = vadd.f32 %v979, 1.0
  %v982 = vrcp.pop %v980
  %v983 = vmul.f32 1.0, %v982
  %v984 = vrcp.pop %v981
  %v985 = vmul.f32 1.0, %v984
  %v986 = vtanh.pop %v973
  %v987 = vmul.f32 %v983, %v867
  %v988 = vmul.f32 %v983, %v986
  %990 = vrot.lane.b32.xlu0 %v988, 64
  %v991 = vpop.permute.xlu0 %990
  %v993 = vadd.f32 %v987, %v991
  %v994 = vtanh.pop %v993
  %v995 = vmul.f32 %v985, %v994
  %v996 = vpack.c.bf16 %v995, %v995
  %v998 = vunpack.c.l.b16 %v996
  %v999 = vpack.c.b16 %v998, %v998
  %1000 = vrot.lane.b32.xlu0 %v999, 64
  %v1001 = vpop.permute.xlu0 %1000
  %s1003 = scalar_lea.vmem %s7, 4
  %1004 = vst.msk [vmem:[%s1003] sm:$0xf] %vm877, %v1001
  %1005 = vrot.lane.b32.xlu0 %v999, 32
  %v1006 = vpop.permute.xlu0 %1005
  %s1008 = scalar_lea.vmem %s85, 24
  %1009 = vst.msk [vmem:[%s1008] sm:$0xf] %vm877, %v1006
  %s1010 = smul.u32 2, 2
  %s1011 = smul.addr %s1010, 8
  %s1012 = scalar_lea.vmem [#allocation2], %s1011
  %v1013 = vld [vmem:[%s1012] sm:$0xff]
  %v1014 = vld [vmem:[%s1012 + $0x8] sm:$0xff]
  %s1015 = smul.u32 5, 2
  %s1016 = smul.addr %s1015, 8
  %s1017 = scalar_lea.vmem [#allocation3], %s1016
  %v1018 = vld [vmem:[%s1017] sm:$0xff]
  %v1019 = vld [vmem:[%s1017 + $0x8] sm:$0xff]
  %v1020 = vadd.f32 %v1013, %v1018
  %v1021 = vadd.f32 %v1014, %v1019
  %1023 = vrot.lane.b32.xlu0 %v995, 64
  %v1024 = vpop.permute.xlu0 %1023
  %v1025 = vsel %vm767, %v1024, 0
  %1027 = vmatprep.subr.mxu0 %v738
  %1028 = vmatpush1.msra.mxu0 %v737
  %1029 = vmatprep.subr.mxu0 %v740
  %1030 = vmatpush1.msra.mxu0 %v739
  %1031 = vmatprep.subr.mxu0 %v742
  %1032 = vmatpush1.msra.mxu0 %v741
  %1033 = vmatprep.subr.mxu0 %v744
  %1034 = vmatpush1.msra.mxu0 %v743
  %1035 = vmatprep.subr.mxu0 %v746
  %1036 = vmatpush1.msra.mxu0 %v745
  %1037 = vmatprep.subr.mxu0 %v748
  %1038 = vmatpush1.msra.mxu0 %v747
  %1039 = vmatprep.subr.mxu0 %v750
  %1040 = vmatpush1.msra.mxu0 %v749
  %1041 = vmatprep.subr.mxu0 %v752
  %1042 = vmatpush1.msra.mxu0 %v751
  %1043 = vmatprep.subr.mxu0 0.0
  %1044 = vmatpush1.msra.mxu0 0.0
  %1045 = vmatprep.subr.mxu0 0.0
  %1046 = vmatpush1.msra.mxu0 0.0
  %1047 = vmatprep.subr.mxu0 0.0
  %1048 = vmatpush1.msra.mxu0 0.0
  %1049 = vmatprep.subr.mxu0 0.0
  %1050 = vmatpush1.msra.mxu0 0.0
  %1051 = vmatprep.subr.mxu0 0.0
  %1052 = vmatpush1.msra.mxu0 0.0
  %1053 = vmatprep.subr.mxu0 0.0
  %1054 = vmatpush1.msra.mxu0 0.0
  %1055 = vmatprep.subr.mxu0 0.0
  %1056 = vmatpush1.msra.mxu0 0.0
  %1057 = vmatprep.subr.mxu0 0.0
  %1058 = vmatpush1.msra.mxu0 0.0
  %1059 = vmatprep.subr.mxu0 0.0
  %1060 = vmatpush1.msra.mxu0 0.0
  %1061 = vmatprep.subr.mxu0 0.0
  %1062 = vmatpush1.msra.mxu0 0.0
  %1063 = vmatprep.subr.mxu0 0.0
  %1064 = vmatpush1.msra.mxu0 0.0
  %1065 = vmatprep.subr.mxu0 0.0
  %1066 = vmatpush1.msra.mxu0 0.0
  %1067 = vmatprep.subr.mxu0 0.0
  %1068 = vmatpush1.msra.mxu0 0.0
  %1069 = vmatprep.subr.mxu0 0.0
  %1070 = vmatpush1.msra.mxu0 0.0
  %1071 = vmatprep.subr.mxu0 0.0
  %1072 = vmatpush1.msra.mxu0 0.0
  %1073 = vmatprep.subr.mxu0 0.0
  %1074 = vmatpush1.msra.mxu0 0.0
  %1075 = vmatprep.subr.mxu0 0.0
  %1076 = vmatpush1.msra.mxu0 0.0
  %1077 = vmatprep.subr.mxu0 0.0
  %1078 = vmatpush1.msra.mxu0 0.0
  %1079 = vmatprep.subr.mxu0 0.0
  %1080 = vmatpush1.msra.mxu0 0.0
  %1081 = vmatprep.subr.mxu0 0.0
  %1082 = vmatpush1.msra.mxu0 0.0
  %1083 = vmatprep.subr.mxu0 0.0
  %1084 = vmatpush1.msra.mxu0 0.0
  %1085 = vmatprep.subr.mxu0 0.0
  %1086 = vmatpush1.msra.mxu0 0.0
  %1087 = vmatprep.subr.mxu0 0.0
  %1088 = vmatpush1.msra.mxu0 0.0
  %1089 = vmatprep.subr.mxu0 0.0
  %1090 = vmatpush1.msra.mxu0 0.0
  %1091 = vmatprep.mubr.f32.mxu0 0.0
  %1092 = vmatmul.mubr.f32.gmra.mrb[0].mxu0 %v1025
  %v1093 = vpop.f32.mrb[0].mxu0
  %v1094 = vadd.f32 0.0, %v1093
  %v1095 = vpop.f32.mrb[0].mxu0
  %v1096 = vadd.f32 0.0, %v1095
  %1097 = vdwg.mxu0
  %v1098 = vadd.f32 %v1020, %v1094
  %v1099 = vadd.f32 %v1021, %v1096
  %v1100 = vxor.u32 %v1098, 2147483648
  %v1101 = vxor.u32 %v1099, 2147483648
  %v1102 = vmul.f32 %v1100, 1.442695
  %v1103 = vpow.pop %v1102
  %v1104 = vmul.f32 %v1101, 1.442695
  %v1105 = vpow.pop %v1104
  %v1106 = vadd.f32 %v1103, 1.0
  %v1107 = vadd.f32 %v1105, 1.0
  %v1108 = vrcp.pop %v1106
  %v1109 = vmul.f32 1.0, %v1108
  %v1110 = vrcp.pop %v1107
  %v1111 = vmul.f32 1.0, %v1110
  %v1112 = vtanh.pop %v1099
  %v1113 = vmul.f32 %v1109, %v993
  %v1114 = vmul.f32 %v1109, %v1112
  %1116 = vrot.lane.b32.xlu0 %v1114, 64
  %v1117 = vpop.permute.xlu0 %1116
  %v1119 = vadd.f32 %v1113, %v1117
  %v1120 = vtanh.pop %v1119
  %v1121 = vmul.f32 %v1111, %v1120
  %v1122 = vpack.c.bf16 %v1121, %v1121
  %v1124 = vunpack.c.l.b16 %v1122
  %v1125 = vpack.c.b16 %v1124, %v1124
  %1126 = vrot.lane.b32.xlu0 %v1125, 64
  %v1127 = vpop.permute.xlu0 %1126
  %s1129 = scalar_lea.vmem %s7, 8
  %1130 = vst.msk [vmem:[%s1129] sm:$0xf] %vm877, %v1127
  %1131 = vrot.lane.b32.xlu0 %v1125, 32
  %v1132 = vpop.permute.xlu0 %1131
  %s1134 = scalar_lea.vmem %s85, 20
  %1135 = vst.msk [vmem:[%s1134] sm:$0xf] %vm877, %v1132
  %s1136 = smul.u32 3, 2
  %s1137 = smul.addr %s1136, 8
  %s1138 = scalar_lea.vmem [#allocation2], %s1137
  %v1139 = vld [vmem:[%s1138] sm:$0xff]
  %v1140 = vld [vmem:[%s1138 + $0x8] sm:$0xff]
  %s1141 = smul.u32 4, 2
  %s1142 = smul.addr %s1141, 8
  %s1143 = scalar_lea.vmem [#allocation3], %s1142
  %v1144 = vld [vmem:[%s1143] sm:$0xff]
  %v1145 = vld [vmem:[%s1143 + $0x8] sm:$0xff]
  %v1146 = vadd.f32 %v1139, %v1144
  %v1147 = vadd.f32 %v1140, %v1145
  %1149 = vrot.lane.b32.xlu0 %v1121, 64
  %v1150 = vpop.permute.xlu0 %1149
  %v1151 = vsel %vm767, %v1150, 0
  %1153 = vmatprep.subr.mxu0 %v738
  %1154 = vmatpush1.msra.mxu0 %v737
  %1155 = vmatprep.subr.mxu0 %v740
  %1156 = vmatpush1.msra.mxu0 %v739
  %1157 = vmatprep.subr.mxu0 %v742
  %1158 = vmatpush1.msra.mxu0 %v741
  %1159 = vmatprep.subr.mxu0 %v744
  %1160 = vmatpush1.msra.mxu0 %v743
  %1161 = vmatprep.subr.mxu0 %v746
  %1162 = vmatpush1.msra.mxu0 %v745
  %1163 = vmatprep.subr.mxu0 %v748
  %1164 = vmatpush1.msra.mxu0 %v747
  %1165 = vmatprep.subr.mxu0 %v750
  %1166 = vmatpush1.msra.mxu0 %v749
  %1167 = vmatprep.subr.mxu0 %v752
  %1168 = vmatpush1.msra.mxu0 %v751
  %1169 = vmatprep.subr.mxu0 0.0
  %1170 = vmatpush1.msra.mxu0 0.0
  %1171 = vmatprep.subr.mxu0 0.0
  %1172 = vmatpush1.msra.mxu0 0.0
  %1173 = vmatprep.subr.mxu0 0.0
  %1174 = vmatpush1.msra.mxu0 0.0
  %1175 = vmatprep.subr.mxu0 0.0
  %1176 = vmatpush1.msra.mxu0 0.0
  %1177 = vmatprep.subr.mxu0 0.0
  %1178 = vmatpush1.msra.mxu0 0.0
  %1179 = vmatprep.subr.mxu0 0.0
  %1180 = vmatpush1.msra.mxu0 0.0
  %1181 = vmatprep.subr.mxu0 0.0
  %1182 = vmatpush1.msra.mxu0 0.0
  %1183 = vmatprep.subr.mxu0 0.0
  %1184 = vmatpush1.msra.mxu0 0.0
  %1185 = vmatprep.subr.mxu0 0.0
  %1186 = vmatpush1.msra.mxu0 0.0
  %1187 = vmatprep.subr.mxu0 0.0
  %1188 = vmatpush1.msra.mxu0 0.0
  %1189 = vmatprep.subr.mxu0 0.0
  %1190 = vmatpush1.msra.mxu0 0.0
  %1191 = vmatprep.subr.mxu0 0.0
  %1192 = vmatpush1.msra.mxu0 0.0
  %1193 = vmatprep.subr.mxu0 0.0
  %1194 = vmatpush1.msra.mxu0 0.0
  %1195 = vmatprep.subr.mxu0 0.0
  %1196 = vmatpush1.msra.mxu0 0.0
  %1197 = vmatprep.subr.mxu0 0.0
  %1198 = vmatpush1.msra.mxu0 0.0
  %1199 = vmatprep.subr.mxu0 0.0
  %1200 = vmatpush1.msra.mxu0 0.0
  %1201 = vmatprep.subr.mxu0 0.0
  %1202 = vmatpush1.msra.mxu0 0.0
  %1203 = vmatprep.subr.mxu0 0.0
  %1204 = vmatpush1.msra.mxu0 0.0
  %1205 = vmatprep.subr.mxu0 0.0
  %1206 = vmatpush1.msra.mxu0 0.0
  %1207 = vmatprep.subr.mxu0 0.0
  %1208 = vmatpush1.msra.mxu0 0.0
  %1209 = vmatprep.subr.mxu0 0.0
  %1210 = vmatpush1.msra.mxu0 0.0
  %1211 = vmatprep.subr.mxu0 0.0
  %1212 = vmatpush1.msra.mxu0 0.0
  %1213 = vmatprep.subr.mxu0 0.0
  %1214 = vmatpush1.msra.mxu0 0.0
  %1215 = vmatprep.subr.mxu0 0.0
  %1216 = vmatpush1.msra.mxu0 0.0
  %1217 = vmatprep.mubr.f32.mxu0 0.0
  %1218 = vmatmul.mubr.f32.gmra.mrb[0].mxu0 %v1151
  %v1219 = vpop.f32.mrb[0].mxu0
  %v1220 = vadd.f32 0.0, %v1219
  %v1221 = vpop.f32.mrb[0].mxu0
  %v1222 = vadd.f32 0.0, %v1221
  %1223 = vdwg.mxu0
  %v1224 = vadd.f32 %v1146, %v1220
  %v1225 = vadd.f32 %v1147, %v1222
  %v1226 = vxor.u32 %v1224, 2147483648
  %v1227 = vxor.u32 %v1225, 2147483648
  %v1228 = vmul.f32 %v1226, 1.442695
  %v1229 = vpow.pop %v1228
  %v1230 = vmul.f32 %v1227, 1.442695
  %v1231 = vpow.pop %v1230
  %v1232 = vadd.f32 %v1229, 1.0
  %v1233 = vadd.f32 %v1231, 1.0
  %v1234 = vrcp.pop %v1232
  %v1235 = vmul.f32 1.0, %v1234
  %v1236 = vrcp.pop %v1233
  %v1237 = vmul.f32 1.0, %v1236
  %v1238 = vtanh.pop %v1225
  %v1239 = vmul.f32 %v1235, %v1119
  %v1240 = vmul.f32 %v1235, %v1238
  %1242 = vrot.lane.b32.xlu0 %v1240, 64
  %v1243 = vpop.permute.xlu0 %1242
  %v1245 = vadd.f32 %v1239, %v1243
  %v1246 = vtanh.pop %v1245
  %v1247 = vmul.f32 %v1237, %v1246
  %v1248 = vpack.c.bf16 %v1247, %v1247
  %v1250 = vunpack.c.l.b16 %v1248
  %v1251 = vpack.c.b16 %v1250, %v1250
  %1252 = vrot.lane.b32.xlu0 %v1251, 64
  %v1253 = vpop.permute.xlu0 %1252
  %s1255 = scalar_lea.vmem %s7, 12
  %1256 = vst.msk [vmem:[%s1255] sm:$0xf] %vm877, %v1253
  %1257 = vrot.lane.b32.xlu0 %v1251, 32
  %v1258 = vpop.permute.xlu0 %1257
  %s1260 = scalar_lea.vmem %s85, 16
  %1261 = vst.msk [vmem:[%s1260] sm:$0xf] %vm877, %v1258
  %s1262 = smul.addr %s1141, 8
  %s1263 = scalar_lea.vmem [#allocation2], %s1262
  %v1264 = vld [vmem:[%s1263] sm:$0xff]
  %v1265 = vld [vmem:[%s1263 + $0x8] sm:$0xff]
  %s1266 = smul.addr %s1136, 8
  %s1267 = scalar_lea.vmem [#allocation3], %s1266
  %v1268 = vld [vmem:[%s1267] sm:$0xff]
  %v1269 = vld [vmem:[%s1267 + $0x8] sm:$0xff]
  %v1270 = vadd.f32 %v1264, %v1268
  %v1271 = vadd.f32 %v1265, %v1269
  %1273 = vrot.lane.b32.xlu0 %v1247, 64
  %v1274 = vpop.permute.xlu0 %1273
  %v1275 = vsel %vm767, %v1274, 0
  %1277 = vmatprep.subr.mxu0 %v738
  %1278 = vmatpush1.msra.mxu0 %v737
  %1279 = vmatprep.subr.mxu0 %v740
  %1280 = vmatpush1.msra.mxu0 %v739
  %1281 = vmatprep.subr.mxu0 %v742
  %1282 = vmatpush1.msra.mxu0 %v741
  %1283 = vmatprep.subr.mxu0 %v744
  %1284 = vmatpush1.msra.mxu0 %v743
  %1285 = vmatprep.subr.mxu0 %v746
  %1286 = vmatpush1.msra.mxu0 %v745
  %1287 = vmatprep.subr.mxu0 %v748
  %1288 = vmatpush1.msra.mxu0 %v747
  %1289 = vmatprep.subr.mxu0 %v750
  %1290 = vmatpush1.msra.mxu0 %v749
  %1291 = vmatprep.subr.mxu0 %v752
  %1292 = vmatpush1.msra.mxu0 %v751
  %1293 = vmatprep.subr.mxu0 0.0
  %1294 = vmatpush1.msra.mxu0 0.0
  %1295 = vmatprep.subr.mxu0 0.0
  %1296 = vmatpush1.msra.mxu0 0.0
  %1297 = vmatprep.subr.mxu0 0.0
  %1298 = vmatpush1.msra.mxu0 0.0
  %1299 = vmatprep.subr.mxu0 0.0
  %1300 = vmatpush1.msra.mxu0 0.0
  %1301 = vmatprep.subr.mxu0 0.0
  %1302 = vmatpush1.msra.mxu0 0.0
  %1303 = vmatprep.subr.mxu0 0.0
  %1304 = vmatpush1.msra.mxu0 0.0
  %1305 = vmatprep.subr.mxu0 0.0
  %1306 = vmatpush1.msra.mxu0 0.0
  %1307 = vmatprep.subr.mxu0 0.0
  %1308 = vmatpush1.msra.mxu0 0.0
  %1309 = vmatprep.subr.mxu0 0.0
  %1310 = vmatpush1.msra.mxu0 0.0
  %1311 = vmatprep.subr.mxu0 0.0
  %1312 = vmatpush1.msra.mxu0 0.0
  %1313 = vmatprep.subr.mxu0 0.0
  %1314 = vmatpush1.msra.mxu0 0.0
  %1315 = vmatprep.subr.mxu0 0.0
  %1316 = vmatpush1.msra.mxu0 0.0
  %1317 = vmatprep.subr.mxu0 0.0
  %1318 = vmatpush1.msra.mxu0 0.0
  %1319 = vmatprep.subr.mxu0 0.0
  %1320 = vmatpush1.msra.mxu0 0.0
  %1321 = vmatprep.subr.mxu0 0.0
  %1322 = vmatpush1.msra.mxu0 0.0
  %1323 = vmatprep.subr.mxu0 0.0
  %1324 = vmatpush1.msra.mxu0 0.0
  %1325 = vmatprep.subr.mxu0 0.0
  %1326 = vmatpush1.msra.mxu0 0.0
  %1327 = vmatprep.subr.mxu0 0.0
  %1328 = vmatpush1.msra.mxu0 0.0
  %1329 = vmatprep.subr.mxu0 0.0
  %1330 = vmatpush1.msra.mxu0 0.0
  %1331 = vmatprep.subr.mxu0 0.0
  %1332 = vmatpush1.msra.mxu0 0.0
  %1333 = vmatprep.subr.mxu0 0.0
  %1334 = vmatpush1.msra.mxu0 0.0
  %1335 = vmatprep.subr.mxu0 0.0
  %1336 = vmatpush1.msra.mxu0 0.0
  %1337 = vmatprep.subr.mxu0 0.0
  %1338 = vmatpush1.msra.mxu0 0.0
  %1339 = vmatprep.subr.mxu0 0.0
  %1340 = vmatpush1.msra.mxu0 0.0
  %1341 = vmatprep.mubr.f32.mxu0 0.0
  %1342 = vmatmul.mubr.f32.gmra.mrb[0].mxu0 %v1275
  %v1343 = vpop.f32.mrb[0].mxu0
  %v1344 = vadd.f32 0.0, %v1343
  %v1345 = vpop.f32.mrb[0].mxu0
  %v1346 = vadd.f32 0.0, %v1345
  %1347 = vdwg.mxu0
  %v1348 = vadd.f32 %v1270, %v1344
  %v1349 = vadd.f32 %v1271, %v1346
  %v1350 = vxor.u32 %v1348, 2147483648
  %v1351 = vxor.u32 %v1349, 2147483648
  %v1352 = vmul.f32 %v1350, 1.442695
  %v1353 = vpow.pop %v1352
  %v1354 = vmul.f32 %v1351, 1.442695
  %v1355 = vpow.pop %v1354
  %v1356 = vadd.f32 %v1353, 1.0
  %v1357 = vadd.f32 %v1355, 1.0
  %v1358 = vrcp.pop %v1356
  %v1359 = vmul.f32 1.0, %v1358
  %v1360 = vrcp.pop %v1357
  %v1361 = vmul.f32 1.0, %v1360
  %v1362 = vtanh.pop %v1349
  %v1363 = vmul.f32 %v1359, %v1245
  %v1364 = vmul.f32 %v1359, %v1362
  %1366 = vrot.lane.b32.xlu0 %v1364, 64
  %v1367 = vpop.permute.xlu0 %1366
  %v1369 = vadd.f32 %v1363, %v1367
  %v1370 = vtanh.pop %v1369
  %v1371 = vmul.f32 %v1361, %v1370
  %v1372 = vpack.c.bf16 %v1371, %v1371
  %v1374 = vunpack.c.l.b16 %v1372
  %v1375 = vpack.c.b16 %v1374, %v1374
  %1376 = vrot.lane.b32.xlu0 %v1375, 64
  %v1377 = vpop.permute.xlu0 %1376
  %s1379 = scalar_lea.vmem %s7, 16
  %1380 = vst.msk [vmem:[%s1379] sm:$0xf] %vm877, %v1377
  %1381 = vrot.lane.b32.xlu0 %v1375, 32
  %v1382 = vpop.permute.xlu0 %1381
  %s1384 = scalar_lea.vmem %s85, 12
  %1385 = vst.msk [vmem:[%s1384] sm:$0xf] %vm877, %v1382
  %s1386 = smul.addr %s1015, 8
  %s1387 = scalar_lea.vmem [#allocation2], %s1386
  %v1388 = vld [vmem:[%s1387] sm:$0xff]
  %v1389 = vld [vmem:[%s1387 + $0x8] sm:$0xff]
  %s1390 = smul.addr %s1010, 8
  %s1391 = scalar_lea.vmem [#allocation3], %s1390
  %v1392 = vld [vmem:[%s1391] sm:$0xff]
  %v1393 = vld [vmem:[%s1391 + $0x8] sm:$0xff]
  %v1394 = vadd.f32 %v1388, %v1392
  %v1395 = vadd.f32 %v1389, %v1393
  %1397 = vrot.lane.b32.xlu0 %v1371, 64
  %v1398 = vpop.permute.xlu0 %1397
  %v1399 = vsel %vm767, %v1398, 0
  %1401 = vmatprep.subr.mxu0 %v738
  %1402 = vmatpush1.msra.mxu0 %v737
  %1403 = vmatprep.subr.mxu0 %v740
  %1404 = vmatpush1.msra.mxu0 %v739
  %1405 = vmatprep.subr.mxu0 %v742
  %1406 = vmatpush1.msra.mxu0 %v741
  %1407 = vmatprep.subr.mxu0 %v744
  %1408 = vmatpush1.msra.mxu0 %v743
  %1409 = vmatprep.subr.mxu0 %v746
  %1410 = vmatpush1.msra.mxu0 %v745
  %1411 = vmatprep.subr.mxu0 %v748
  %1412 = vmatpush1.msra.mxu0 %v747
  %1413 = vmatprep.subr.mxu0 %v750
  %1414 = vmatpush1.msra.mxu0 %v749
  %1415 = vmatprep.subr.mxu0 %v752
  %1416 = vmatpush1.msra.mxu0 %v751
  %1417 = vmatprep.subr.mxu0 0.0
  %1418 = vmatpush1.msra.mxu0 0.0
  %1419 = vmatprep.subr.mxu0 0.0
  %1420 = vmatpush1.msra.mxu0 0.0
  %1421 = vmatprep.subr.mxu0 0.0
  %1422 = vmatpush1.msra.mxu0 0.0
  %1423 = vmatprep.subr.mxu0 0.0
  %1424 = vmatpush1.msra.mxu0 0.0
  %1425 = vmatprep.subr.mxu0 0.0
  %1426 = vmatpush1.msra.mxu0 0.0
  %1427 = vmatprep.subr.mxu0 0.0
  %1428 = vmatpush1.msra.mxu0 0.0
  %1429 = vmatprep.subr.mxu0 0.0
  %1430 = vmatpush1.msra.mxu0 0.0
  %1431 = vmatprep.subr.mxu0 0.0
  %1432 = vmatpush1.msra.mxu0 0.0
  %1433 = vmatprep.subr.mxu0 0.0
  %1434 = vmatpush1.msra.mxu0 0.0
  %1435 = vmatprep.subr.mxu0 0.0
  %1436 = vmatpush1.msra.mxu0 0.0
  %1437 = vmatprep.subr.mxu0 0.0
  %1438 = vmatpush1.msra.mxu0 0.0
  %1439 = vmatprep.subr.mxu0 0.0
  %1440 = vmatpush1.msra.mxu0 0.0
  %1441 = vmatprep.subr.mxu0 0.0
  %1442 = vmatpush1.msra.mxu0 0.0
  %1443 = vmatprep.subr.mxu0 0.0
  %1444 = vmatpush1.msra.mxu0 0.0
  %1445 = vmatprep.subr.mxu0 0.0
  %1446 = vmatpush1.msra.mxu0 0.0
  %1447 = vmatprep.subr.mxu0 0.0
  %1448 = vmatpush1.msra.mxu0 0.0
  %1449 = vmatprep.subr.mxu0 0.0
  %1450 = vmatpush1.msra.mxu0 0.0
  %1451 = vmatprep.subr.mxu0 0.0
  %1452 = vmatpush1.msra.mxu0 0.0
  %1453 = vmatprep.subr.mxu0 0.0
  %1454 = vmatpush1.msra.mxu0 0.0
  %1455 = vmatprep.subr.mxu0 0.0
  %1456 = vmatpush1.msra.mxu0 0.0
  %1457 = vmatprep.subr.mxu0 0.0
  %1458 = vmatpush1.msra.mxu0 0.0
  %1459 = vmatprep.subr.mxu0 0.0
  %1460 = vmatpush1.msra.mxu0 0.0
  %1461 = vmatprep.subr.mxu0 0.0
  %1462 = vmatpush1.msra.mxu0 0.0
  %1463 = vmatprep.subr.mxu0 0.0
  %1464 = vmatpush1.msra.mxu0 0.0
  %1465 = vmatprep.mubr.f32.mxu0 0.0
  %1466 = vmatmul.mubr.f32.gmra.mrb[0].mxu0 %v1399
  %v1467 = vpop.f32.mrb[0].mxu0
  %v1468 = vadd.f32 0.0, %v1467
  %v1469 = vpop.f32.mrb[0].mxu0
  %v1470 = vadd.f32 0.0, %v1469
  %1471 = vdwg.mxu0
  %v1472 = vadd.f32 %v1394, %v1468
  %v1473 = vadd.f32 %v1395, %v1470
  %v1474 = vxor.u32 %v1472, 2147483648
  %v1475 = vxor.u32 %v1473, 2147483648
  %v1476 = vmul.f32 %v1474, 1.442695
  %v1477 = vpow.pop %v1476
  %v1478 = vmul.f32 %v1475, 1.442695
  %v1479 = vpow.pop %v1478
  %v1480 = vadd.f32 %v1477, 1.0
  %v1481 = vadd.f32 %v1479, 1.0
  %v1482 = vrcp.pop %v1480
  %v1483 = vmul.f32 1.0, %v1482
  %v1484 = vrcp.pop %v1481
  %v1485 = vmul.f32 1.0, %v1484
  %v1486 = vtanh.pop %v1473
  %v1487 = vmul.f32 %v1483, %v1369
  %v1488 = vmul.f32 %v1483, %v1486
  %1490 = vrot.lane.b32.xlu0 %v1488, 64
  %v1491 = vpop.permute.xlu0 %1490
  %v1493 = vadd.f32 %v1487, %v1491
  %v1494 = vtanh.pop %v1493
  %v1495 = vmul.f32 %v1485, %v1494
  %v1496 = vpack.c.bf16 %v1495, %v1495
  %v1498 = vunpack.c.l.b16 %v1496
  %v1499 = vpack.c.b16 %v1498, %v1498
  %1500 = vrot.lane.b32.xlu0 %v1499, 64
  %v1501 = vpop.permute.xlu0 %1500
  %s1503 = scalar_lea.vmem %s7, 20
  %1504 = vst.msk [vmem:[%s1503] sm:$0xf] %vm877, %v1501
  %1505 = vrot.lane.b32.xlu0 %v1499, 32
  %v1506 = vpop.permute.xlu0 %1505
  %s1508 = scalar_lea.vmem %s85, 8
  %1509 = vst.msk [vmem:[%s1508] sm:$0xf] %vm877, %v1506
  %s1510 = smul.addr %s889, 8
  %s1511 = scalar_lea.vmem [#allocation2], %s1510
  %v1512 = vld [vmem:[%s1511] sm:$0xff]
  %v1513 = vld [vmem:[%s1511 + $0x8] sm:$0xff]
  %s1514 = smul.addr %s884, 8
  %s1515 = scalar_lea.vmem [#allocation3], %s1514
  %v1516 = vld [vmem:[%s1515] sm:$0xff]
  %v1517 = vld [vmem:[%s1515 + $0x8] sm:$0xff]
  %v1518 = vadd.f32 %v1512, %v1516
  %v1519 = vadd.f32 %v1513, %v1517
  %1521 = vrot.lane.b32.xlu0 %v1495, 64
  %v1522 = vpop.permute.xlu0 %1521
  %v1523 = vsel %vm767, %v1522, 0
  %1525 = vmatprep.subr.mxu0 %v738
  %1526 = vmatpush1.msra.mxu0 %v737
  %1527 = vmatprep.subr.mxu0 %v740
  %1528 = vmatpush1.msra.mxu0 %v739
  %1529 = vmatprep.subr.mxu0 %v742
  %1530 = vmatpush1.msra.mxu0 %v741
  %1531 = vmatprep.subr.mxu0 %v744
  %1532 = vmatpush1.msra.mxu0 %v743
  %1533 = vmatprep.subr.mxu0 %v746
  %1534 = vmatpush1.msra.mxu0 %v745
  %1535 = vmatprep.subr.mxu0 %v748
  %1536 = vmatpush1.msra.mxu0 %v747
  %1537 = vmatprep.subr.mxu0 %v750
  %1538 = vmatpush1.msra.mxu0 %v749
  %1539 = vmatprep.subr.mxu0 %v752
  %1540 = vmatpush1.msra.mxu0 %v751
  %1541 = vmatprep.subr.mxu0 0.0
  %1542 = vmatpush1.msra.mxu0 0.0
  %1543 = vmatprep.subr.mxu0 0.0
  %1544 = vmatpush1.msra.mxu0 0.0
  %1545 = vmatprep.subr.mxu0 0.0
  %1546 = vmatpush1.msra.mxu0 0.0
  %1547 = vmatprep.subr.mxu0 0.0
  %1548 = vmatpush1.msra.mxu0 0.0
  %1549 = vmatprep.subr.mxu0 0.0
  %1550 = vmatpush1.msra.mxu0 0.0
  %1551 = vmatprep.subr.mxu0 0.0
  %1552 = vmatpush1.msra.mxu0 0.0
  %1553 = vmatprep.subr.mxu0 0.0
  %1554 = vmatpush1.msra.mxu0 0.0
  %1555 = vmatprep.subr.mxu0 0.0
  %1556 = vmatpush1.msra.mxu0 0.0
  %1557 = vmatprep.subr.mxu0 0.0
  %1558 = vmatpush1.msra.mxu0 0.0
  %1559 = vmatprep.subr.mxu0 0.0
  %1560 = vmatpush1.msra.mxu0 0.0
  %1561 = vmatprep.subr.mxu0 0.0
  %1562 = vmatpush1.msra.mxu0 0.0
  %1563 = vmatprep.subr.mxu0 0.0
  %1564 = vmatpush1.msra.mxu0 0.0
  %1565 = vmatprep.subr.mxu0 0.0
  %1566 = vmatpush1.msra.mxu0 0.0
  %1567 = vmatprep.subr.mxu0 0.0
  %1568 = vmatpush1.msra.mxu0 0.0
  %1569 = vmatprep.subr.mxu0 0.0
  %1570 = vmatpush1.msra.mxu0 0.0
  %1571 = vmatprep.subr.mxu0 0.0
  %1572 = vmatpush1.msra.mxu0 0.0
  %1573 = vmatprep.subr.mxu0 0.0
  %1574 = vmatpush1.msra.mxu0 0.0
  %1575 = vmatprep.subr.mxu0 0.0
  %1576 = vmatpush1.msra.mxu0 0.0
  %1577 = vmatprep.subr.mxu0 0.0
  %1578 = vmatpush1.msra.mxu0 0.0
  %1579 = vmatprep.subr.mxu0 0.0
  %1580 = vmatpush1.msra.mxu0 0.0
  %1581 = vmatprep.subr.mxu0 0.0
  %1582 = vmatpush1.msra.mxu0 0.0
  %1583 = vmatprep.subr.mxu0 0.0
  %1584 = vmatpush1.msra.mxu0 0.0
  %1585 = vmatprep.subr.mxu0 0.0
  %1586 = vmatpush1.msra.mxu0 0.0
  %1587 = vmatprep.subr.mxu0 0.0
  %1588 = vmatpush1.msra.mxu0 0.0
  %1589 = vmatprep.mubr.f32.mxu0 0.0
  %1590 = vmatmul.mubr.f32.gmra.mrb[0].mxu0 %v1523
  %v1591 = vpop.f32.mrb[0].mxu0
  %v1592 = vadd.f32 0.0, %v1591
  %v1593 = vpop.f32.mrb[0].mxu0
  %v1594 = vadd.f32 0.0, %v1593
  %1595 = vdwg.mxu0
  %v1596 = vadd.f32 %v1518, %v1592
  %v1597 = vadd.f32 %v1519, %v1594
  %v1598 = vxor.u32 %v1596, 2147483648
  %v1599 = vxor.u32 %v1597, 2147483648
  %v1600 = vmul.f32 %v1598, 1.442695
  %v1601 = vpow.pop %v1600
  %v1602 = vmul.f32 %v1599, 1.442695
  %v1603 = vpow.pop %v1602
  %v1604 = vadd.f32 %v1601, 1.0
  %v1605 = vadd.f32 %v1603, 1.0
  %v1606 = vrcp.pop %v1604
  %v1607 = vmul.f32 1.0, %v1606
  %v1608 = vrcp.pop %v1605
  %v1609 = vmul.f32 1.0, %v1608
  %v1610 = vtanh.pop %v1597
  %v1611 = vmul.f32 %v1607, %v1493
  %v1612 = vmul.f32 %v1607, %v1610
  %1614 = vrot.lane.b32.xlu0 %v1612, 64
  %v1615 = vpop.permute.xlu0 %1614
  %v1617 = vadd.f32 %v1611, %v1615
  %v1618 = vtanh.pop %v1617
  %v1619 = vmul.f32 %v1609, %v1618
  %v1620 = vpack.c.bf16 %v1619, %v1619
  %v1622 = vunpack.c.l.b16 %v1620
  %v1623 = vpack.c.b16 %v1622, %v1622
  %1624 = vrot.lane.b32.xlu0 %v1623, 64
  %v1625 = vpop.permute.xlu0 %1624
  %s1627 = scalar_lea.vmem %s7, 24
  %1628 = vst.msk [vmem:[%s1627] sm:$0xf] %vm877, %v1625
  %1629 = vrot.lane.b32.xlu0 %v1623, 32
  %v1630 = vpop.permute.xlu0 %1629
  %s1632 = scalar_lea.vmem %s85, 4
  %1633 = vst.msk [vmem:[%s1632] sm:$0xf] %vm877, %v1630
  %s1634 = smul.addr %s760, 8
  %s1635 = scalar_lea.vmem [#allocation2], %s1634
  %v1636 = vld [vmem:[%s1635] sm:$0xff]
  %v1637 = vld [vmem:[%s1635 + $0x8] sm:$0xff]
  %s1638 = smul.addr %s755, 8
  %s1639 = scalar_lea.vmem [#allocation3], %s1638
  %v1640 = vld [vmem:[%s1639] sm:$0xff]
  %v1641 = vld [vmem:[%s1639 + $0x8] sm:$0xff]
  %v1642 = vadd.f32 %v1636, %v1640
  %v1643 = vadd.f32 %v1637, %v1641
  %1645 = vrot.lane.b32.xlu0 %v1619, 64
  %v1646 = vpop.permute.xlu0 %1645
  %v1647 = vsel %vm767, %v1646, 0
  %1649 = vmatprep.subr.mxu0 %v738
  %1650 = vmatpush1.msra.mxu0 %v737
  %1651 = vmatprep.subr.mxu0 %v740
  %1652 = vmatpush1.msra.mxu0 %v739
  %1653 = vmatprep.subr.mxu0 %v742
  %1654 = vmatpush1.msra.mxu0 %v741
  %1655 = vmatprep.subr.mxu0 %v744
  %1656 = vmatpush1.msra.mxu0 %v743
  %1657 = vmatprep.subr.mxu0 %v746
  %1658 = vmatpush1.msra.mxu0 %v745
  %1659 = vmatprep.subr.mxu0 %v748
  %1660 = vmatpush1.msra.mxu0 %v747
  %1661 = vmatprep.subr.mxu0 %v750
  %1662 = vmatpush1.msra.mxu0 %v749
  %1663 = vmatprep.subr.mxu0 %v752
  %1664 = vmatpush1.msra.mxu0 %v751
  %1665 = vmatprep.subr.mxu0 0.0
  %1666 = vmatpush1.msra.mxu0 0.0
  %1667 = vmatprep.subr.mxu0 0.0
  %1668 = vmatpush1.msra.mxu0 0.0
  %1669 = vmatprep.subr.mxu0 0.0
  %1670 = vmatpush1.msra.mxu0 0.0
  %1671 = vmatprep.subr.mxu0 0.0
  %1672 = vmatpush1.msra.mxu0 0.0
  %1673 = vmatprep.subr.mxu0 0.0
  %1674 = vmatpush1.msra.mxu0 0.0
  %1675 = vmatprep.subr.mxu0 0.0
  %1676 = vmatpush1.msra.mxu0 0.0
  %1677 = vmatprep.subr.mxu0 0.0
  %1678 = vmatpush1.msra.mxu0 0.0
  %1679 = vmatprep.subr.mxu0 0.0
  %1680 = vmatpush1.msra.mxu0 0.0
  %1681 = vmatprep.subr.mxu0 0.0
  %1682 = vmatpush1.msra.mxu0 0.0
  %1683 = vmatprep.subr.mxu0 0.0
  %1684 = vmatpush1.msra.mxu0 0.0
  %1685 = vmatprep.subr.mxu0 0.0
  %1686 = vmatpush1.msra.mxu0 0.0
  %1687 = vmatprep.subr.mxu0 0.0
  %1688 = vmatpush1.msra.mxu0 0.0
  %1689 = vmatprep.subr.mxu0 0.0
  %1690 = vmatpush1.msra.mxu0 0.0
  %1691 = vmatprep.subr.mxu0 0.0
  %1692 = vmatpush1.msra.mxu0 0.0
  %1693 = vmatprep.subr.mxu0 0.0
  %1694 = vmatpush1.msra.mxu0 0.0
  %1695 = vmatprep.subr.mxu0 0.0
  %1696 = vmatpush1.msra.mxu0 0.0
  %1697 = vmatprep.subr.mxu0 0.0
  %1698 = vmatpush1.msra.mxu0 0.0
  %1699 = vmatprep.subr.mxu0 0.0
  %1700 = vmatpush1.msra.mxu0 0.0
  %1701 = vmatprep.subr.mxu0 0.0
  %1702 = vmatpush1.msra.mxu0 0.0
  %1703 = vmatprep.subr.mxu0 0.0
  %1704 = vmatpush1.msra.mxu0 0.0
  %1705 = vmatprep.subr.mxu0 0.0
  %1706 = vmatpush1.msra.mxu0 0.0
  %1707 = vmatprep.subr.mxu0 0.0
  %1708 = vmatpush1.msra.mxu0 0.0
  %1709 = vmatprep.subr.mxu0 0.0
  %1710 = vmatpush1.msra.mxu0 0.0
  %1711 = vmatprep.subr.mxu0 0.0
  %1712 = vmatpush1.msra.mxu0 0.0
  %1713 = vmatprep.mubr.f32.mxu0 0.0
  %1714 = vmatmul.mubr.f32.gmra.mrb[0].mxu0 %v1647
  %v1715 = vpop.f32.mrb[0].mxu0
  %v1716 = vadd.f32 0.0, %v1715
  %v1717 = vpop.f32.mrb[0].mxu0
  %v1718 = vadd.f32 0.0, %v1717
  %1719 = vdwg.mxu0
  %v1720 = vadd.f32 %v1642, %v1716
  %v1721 = vadd.f32 %v1643, %v1718
  %v1722 = vxor.u32 %v1720, 2147483648
  %v1723 = vxor.u32 %v1721, 2147483648
  %v1724 = vmul.f32 %v1722, 1.442695
  %v1725 = vpow.pop %v1724
  %v1726 = vmul.f32 %v1723, 1.442695
  %v1727 = vpow.pop %v1726
  %v1728 = vadd.f32 %v1725, 1.0
  %v1729 = vadd.f32 %v1727, 1.0
  %v1730 = vrcp.pop %v1728
  %v1731 = vmul.f32 1.0, %v1730
  %v1732 = vrcp.pop %v1729
  %v1733 = vmul.f32 1.0, %v1732
  %v1734 = vtanh.pop %v1721
  %v1735 = vmul.f32 %v1731, %v1617
  %v1736 = vmul.f32 %v1731, %v1734
  %1738 = vrot.lane.b32.xlu0 %v1736, 64
  %v1739 = vpop.permute.xlu0 %1738
  %v1741 = vadd.f32 %v1735, %v1739
  %v1742 = vtanh.pop %v1741
  %v1743 = vmul.f32 %v1733, %v1742
  %v1744 = vpack.c.bf16 %v1743, %v1743
  %v1746 = vunpack.c.l.b16 %v1744
  %v1747 = vpack.c.b16 %v1746, %v1746
  %1748 = vrot.lane.b32.xlu0 %v1747, 64
  %v1749 = vpop.permute.xlu0 %1748
  %s1751 = scalar_lea.vmem %s7, 28
  %1752 = vst.msk [vmem:[%s1751] sm:$0xf] %vm877, %v1749
  %1753 = vrot.lane.b32.xlu0 %v1747, 32
  %v1754 = vpop.permute.xlu0 %1753
  %1756 = vst.msk [vmem:[%s85] sm:$0xf] %vm877, %v1754
  %1758 = vrot.lane.b32.xlu0 %v1743, 64
  %v1759 = vpop.permute.xlu0 %1758
  %1761 = vst.msk [vmem:[#allocation4] sm:$0xff] %vm767, %v1759
  %1763 = vrot.lane.b32.xlu0 %v1741, 64
  %v1764 = vpop.permute.xlu0 %1763
  %1766 = vst.msk [vmem:[#allocation5] sm:$0xff] %vm767, %v1764
  // Predicated region
  $region34: #{lstm_sec_crf_forward.4} parent=0 // pred_check
    %p1767 = pneg %p89
  $region35: #{lstm_sec_crf_forward.4} parent=0 // pred_check_branch
    %1769 = sbr.rel (%p1767) target = $region37
  $region36: #{lstm_sec_crf_forward.4} parent=0 // pred_region
    %1770 = vst.msk [vmem:[%s9] sm:$0xff] %vm174, %v1759
    %1771 = vrot.lane.b32.xlu0 %v1743, 32
    %v1772 = vpop.permute.xlu0 %1771
    %s1774 = scalar_lea.vmem %s9, 8
    %1775 = vst.msk [vmem:[%s1774] sm:$0xff] %vm174, %v1772
    %1776 = vst.msk [vmem:[%s10] sm:$0xff] %vm174, %v1764
    %1777 = vrot.lane.b32.xlu0 %v1741, 32
    %v1778 = vpop.permute.xlu0 %1777
    %s1780 = scalar_lea.vmem %s10, 8
    %1781 = vst.msk [vmem:[%s1780] sm:$0xff] %vm174, %v1778
  $region37: #{lstm_sec_crf_forward.4} parent=0 // pred_fallthru
    _
  %s1782 = ssub.s32 0, 0
  %s1783 = smul.u32 8, %s1782
  %p1784 = scmp.lt.s32.totalorder %s1783, 7
  %s1785 = scalar_select %p1784, %s1783, 7
  %s1786 = smul.addr %s1785, 4
  %s1787 = scalar_lea.vmem %s8, %s1786
  // Predicated region
  $region38: #{lstm_sec_crf_forward.4} parent=0 // pred_check
    _
  $region39: #{lstm_sec_crf_forward.4} parent=0 // pred_check_branch
    %1789 = sbr.rel (0) target = $region41
  $region40: #{lstm_sec_crf_forward.4} parent=0 // pred_region
    _
  $region41: #{lstm_sec_crf_forward.4} parent=0 // pred_fallthru
    _
  // Predicated region
  $region42: #{lstm_sec_crf_forward.4} parent=0 // pred_check
    _
  $region43: #{lstm_sec_crf_forward.4} parent=0 // pred_check_branch
    %1791 = sbr.rel (0) target = $region45
  $region44: #{lstm_sec_crf_forward.4} parent=0 // pred_region
    %s1792 = ssub.s32 0, 0
    %s1793 = smul.u32 8, %s1792
  $region45: #{lstm_sec_crf_forward.4} parent=0 // pred_fallthru
    _
  // Predicated region
  $region46: #{lstm_sec_crf_forward.4} parent=0 // pred_check
    _
  $region47: #{lstm_sec_crf_forward.4} parent=0 // pred_check_branch
    %1795 = sbr.rel (0) target = $region49
  $region48: #{lstm_sec_crf_forward.4} parent=0 // pred_region
    _
  $region49: #{lstm_sec_crf_forward.4} parent=0 // pred_fallthru
    _
  // Predicated region
  $region50: #{lstm_sec_crf_forward.4} parent=0 // pred_check
    _
  $region51: #{lstm_sec_crf_forward.4} parent=0 // pred_check_branch
    %1797 = sbr.rel (0) target = $region53
  $region52: #{lstm_sec_crf_forward.4} parent=0 // pred_region
    _
  $region53: #{lstm_sec_crf_forward.4} parent=0 // pred_fallthru
    _
  // Predicated region
  $region54: #{lstm_sec_crf_forward.4} parent=0 // pred_check
    _
  $region55: #{lstm_sec_crf_forward.4} parent=0 // pred_check_branch
    %1799 = sbr.rel (0) target = $region57
  $region56: #{lstm_sec_crf_forward.4} parent=0 // pred_region
    _
  $region57: #{lstm_sec_crf_forward.4} parent=0 // pred_fallthru
    _
  // Predicated region
  $region58: #{lstm_sec_crf_forward.4} parent=0 // pred_check
    _
  $region59: #{lstm_sec_crf_forward.4} parent=0 // pred_check_branch
    %1801 = sbr.rel (0) target = $region61
  $region60: #{lstm_sec_crf_forward.4} parent=0 // pred_region
    %s1802 = ssub.s32 0, 0
    %s1803 = smul.u32 8, %s1802
    %p1804 = scmp.lt.s32.totalorder %s1803, 7
    %s1805 = scalar_select %p1804, %s1803, 7
    %s1806 = smul.addr %s1805, 4
    %s1807 = scalar_lea.vmem %s8, %s1806
  $region61: #{lstm_sec_crf_forward.4} parent=0 // pred_fallthru
    _
  // Predicated region
  $region62: #{lstm_sec_crf_forward.4} parent=0 // pred_check
    _
  $region63: #{lstm_sec_crf_forward.4} parent=0 // pred_check_branch
    %1809 = sbr.rel (0) target = $region65
  $region64: #{lstm_sec_crf_forward.4} parent=0 // pred_region
    _
  $region65: #{lstm_sec_crf_forward.4} parent=0 // pred_fallthru
    _
  // Predicated region
  $region66: #{lstm_sec_crf_forward.4} parent=0 // pred_check
    _
  $region67: #{lstm_sec_crf_forward.4} parent=0 // pred_check_branch
    %1811 = sbr.rel (0) target = $region69
  $region68: #{lstm_sec_crf_forward.4} parent=0 // pred_region
    _
  $region69: #{lstm_sec_crf_forward.4} parent=0 // pred_fallthru
    _

</llo_original>
